<compile_context>
chip_gen: v6e
topology: v6e:2x2x1
jax: 0.10.0
libtpu: 0.0.40
codegen_flags: <defaults>
</compile_context>

<pallas_src>
import functools

import jax
import jax.numpy as jnp
from jax.experimental import pallas as pl
from jax.experimental.pallas import tpu as pltpu  # noqa: F401  (kept for parity)


# ---------------------------------------------------------------------------
# Fused Pallas kernel: stacked LSTM (wavefront) + fc head, all VMEM-resident.
# ---------------------------------------------------------------------------
def fused_lstm_fc_kernel(num_layers, T, B, H, F, *refs):
    """Argument layout (all full-array VMEM blocks, no grid, no scratch):

      refs[0]              x       (B, T*F)   flat input; timestep t = lanes [t*F,(t+1)*F)
      refs[1 + 3*l + 0]    wx_l    (F_l, 4H)  W_ih^T of layer l
      refs[1 + 3*l + 1]    wh_l    (H, 4H)    W_hh^T of layer l
      refs[1 + 3*l + 2]    b_l     (1, 4H)    b_ih + b_hh of layer l
      refs[1 + 3*L]        fc_w    (H, C)
      refs[2 + 3*L]        fc_b    (1, C)
      refs[3 + 3*L]        out     (L*B, C)   output
    """
    x_ref = refs[0]
    layer_refs = refs[1:1 + 3 * num_layers]
    fcw_ref = refs[1 + 3 * num_layers]
    fcb_ref = refs[2 + 3 * num_layers]
    out_ref = refs[3 + 3 * num_layers]

    # Single-transcendental trick: scale the g-gate columns by 2 ONCE per
    # layer (off the recurrence chain).  Then tanh(z_g) == 2*sigmoid(2*z_g)-1,
    # so each cell needs only one full-vreg sigmoid instead of sigmoid + tanh.
    col = jax.lax.broadcasted_iota(jnp.int32, (1, 4 * H), 1)
    g_scale = jnp.where((col >= 2 * H) & (col < 3 * H),
                        jnp.float32(2.0), jnp.float32(1.0))

    wx, wh, b = [], [], []
    for l in range(num_layers):
        wx.append(layer_refs[3 * l + 0][...] * g_scale)   # (F_l, 4H)
        wh.append(layer_refs[3 * l + 1][...] * g_scale)   # (H, 4H)
        b.append(layer_refs[3 * l + 2][...] * g_scale)    # (1, 4H)

    x = x_ref[...]                                         # (B, T*F): one vreg

    h = [jnp.zeros((B, H), jnp.float32) for _ in range(num_layers)]
    c = [jnp.zeros((B, H), jnp.float32) for _ in range(num_layers)]

    def cell(l, inp, h_prev, c_prev):
        gates = (jnp.dot(inp, wx[l], preferred_element_type=jnp.float32)
                 + jnp.dot(h_prev, wh[l], preferred_element_type=jnp.float32)
                 + b[l])                                   # (B, 4H) one vreg
        sg = jax.nn.sigmoid(gates)                         # single full-vreg EUP op
        i = sg[:, 0 * H:1 * H]
        f = sg[:, 1 * H:2 * H]
        g = 2.0 * sg[:, 2 * H:3 * H] - 1.0                 # == tanh(unscaled z_g)
        o = sg[:, 3 * H:4 * H]
        c_new = f * c_prev + i * g
        h_new = o * jnp.tanh(c_new)                        # quarter-vreg tanh
        return h_new, c_new

    # Wavefront schedule: at wavefront step s, layer l runs its timestep s-l.
    # Layers are visited in decreasing l within a step so layer l reads
    # h[l-1] as produced at the PREVIOUS wavefront step (its timestep s-l).
    # Critical chain: T + L - 1 dependent cells instead of L*T.
    # TODO(synk): inter-layer dropout p=0.25 and output dropout p=0.2 are
    # no-ops in eval mode, so they are intentionally not emitted.
    for s in range(T + num_layers - 1):                    # fully unrolled
        for l in reversed(range(num_layers)):
            t = s - l
            if 0 <= t < T:
                inp = x[:, t * F:(t + 1) * F] if l == 0 else h[l - 1]
                h[l], c[l] = cell(l, inp, h[l], c[l])

    # Batched fc head: one (L*B, H) @ (H, C) matmul + one store in the
    # epilogue; row order matches h_out.view(-1, H).
    h_cat = jnp.concatenate(h, axis=0)                     # (L*B, H)
    out_ref[...] = (jnp.dot(h_cat, fcw_ref[...],
                            preferred_element_type=jnp.float32)
                    + fcb_ref[...]).astype(out_ref.dtype)


# ---------------------------------------------------------------------------
# Wrapper
# ---------------------------------------------------------------------------
@jax.jit
def lstm_forward(x, params):
    """x: (B, T, input_size) batch-first. Returns (num_layers*B, num_classes)."""
    B, T, F = x.shape
    H = params["lstm"][0]["wh"].shape[0]
    L = len(params["lstm"])
    C = params["fc_w"].shape[1]

    # Free (bitcast) reshape — no transpose, no extra fusion/HBM round trip;
    # the kernel extracts each timestep as a static lane slice.
    x2 = x.reshape(B, T * F)

    args = [x2]
    for layer in params["lstm"]:
        args += [layer["wx"], layer["wh"], layer["b"].reshape(1, 4 * H)]
    args += [params["fc_w"], params["fc_b"].reshape(1, C)]

    kernel = functools.partial(fused_lstm_fc_kernel, L, T, B, H, F)
    return pl.pallas_call(
        kernel,
        out_shape=jax.ShapeDtypeStruct((L * B, C), jnp.float32),
    )(*args)


# ---------------------------------------------------------------------------
# Pure-JAX reference (for verification only)
# ---------------------------------------------------------------------------
def lstm_reference(x, params):
    B, T, _ = x.shape
    seq = jnp.transpose(x, (1, 0, 2))                  # (T, B, F)
    finals = []
    for layer in params["lstm"]:
        H = layer["wh"].shape[0]
        h = jnp.zeros((B, H), jnp.float32)
        c = jnp.zeros((B, H), jnp.float32)
        hs = []
        for t in range(T):
            gates = seq[t] @ layer["wx"] + h @ layer["wh"] + layer["b"][None, :]
            i = jax.nn.sigmoid(gates[:, 0 * H:1 * H])
            f = jax.nn.sigmoid(gates[:, 1 * H:2 * H])
            g = jnp.tanh(gates[:, 2 * H:3 * H])
            o = jax.nn.sigmoid(gates[:, 3 * H:4 * H])
            c = f * c + i * g
            h = o * jnp.tanh(c)
            hs.append(h)
        seq = jnp.stack(hs, axis=0)
        finals.append(h)
    h_out = jnp.concatenate(finals, axis=0)            # (L*B, H) == h_out.view(-1, H)
    return h_out @ params["fc_w"] + params["fc_b"][None, :]


# ---------------------------------------------------------------------------
# Deterministic parameter construction (PyTorch-style uniform init)
# ---------------------------------------------------------------------------
def make_params(key, input_size, hidden_size, num_layers, num_classes):
    H = hidden_size
    k = 1.0 / jnp.sqrt(jnp.float32(H))
    keys = iter(jax.random.split(key, 4 * num_layers + 2))
    u = lambda shape, s=k: jax.random.uniform(next(keys), shape, jnp.float32, -s, s)

    lstm = []
    for layer in range(num_layers):
        F = input_size if layer == 0 else H
        w_ih = u((4 * H, F))         # PyTorch gate order: [i, f, g, o]
        w_hh = u((4 * H, H))
        b_ih = u((4 * H,))
        b_hh = u((4 * H,))
        lstm.append(dict(wx=w_ih.T, wh=w_hh.T, b=b_ih + b_hh))

    fc_w = u((H, num_classes))
    fc_b = u((num_classes,))
    return dict(lstm=lstm, fc_w=fc_w, fc_b=fc_b)


# ---------------------------------------------------------------------------
if __name__ == "__main__":
    num_classes = 4
    input_size = 16
    hidden_size = 32     # 4H = 128 -> gates exactly one lane-wide vreg
    num_layers = 2
    batch = 8
    seq = 8

    key = jax.random.PRNGKey(0)
    kx, kp = jax.random.split(key)
    x = jax.random.normal(kx, (batch, seq, input_size), jnp.float32)
    params = make_params(kp, input_size, hidden_size, num_layers, num_classes)

    out = jax.block_until_ready(lstm_forward(x, params))
    ref = lstm_reference(x, params)

    assert out.shape == (num_layers * batch, num_classes), out.shape
    assert jnp.allclose(out, ref, rtol=1e-4, atol=1e-4), (
        f"mismatch: max abs diff {jnp.max(jnp.abs(out - ref))}")

    print("KERNEL_OK")
</pallas_src>

<mosaic_0001>
module attributes {stable_mosaic.version = 11 : i64} {
  func.func @fused_lstm_fc_kernel(%arg0: memref<8x128xf32, #tpu.memory_space<vmem>>, %arg1: memref<16x128xf32, #tpu.memory_space<vmem>>, %arg2: memref<32x128xf32, #tpu.memory_space<vmem>>, %arg3: memref<1x128xf32, #tpu.memory_space<vmem>>, %arg4: memref<32x128xf32, #tpu.memory_space<vmem>>, %arg5: memref<32x128xf32, #tpu.memory_space<vmem>>, %arg6: memref<1x128xf32, #tpu.memory_space<vmem>>, %arg7: memref<32x4xf32, #tpu.memory_space<vmem>>, %arg8: memref<1x4xf32, #tpu.memory_space<vmem>>, %arg9: memref<16x4xf32, #tpu.memory_space<vmem>>) attributes {dimension_semantics = [], scalar_prefetch = 0 : i64, scratch_operands = 0 : i64, tpu.core_type = #tpu.core_type<tc>} {
    %0 = tpu.iota {dimensions = array<i32: 1>} : vector<1x128xi32>
    %c64_i32 = arith.constant 64 : i32
    %1 = vector.broadcast %c64_i32 : i32 to vector<1x128xi32>
    %2 = arith.cmpi sge, %0, %1 : vector<1x128xi32>
    %c96_i32 = arith.constant 96 : i32
    %3 = vector.broadcast %c96_i32 : i32 to vector<1x128xi32>
    %4 = arith.cmpi slt, %0, %3 : vector<1x128xi32>
    %5 = arith.andi %2, %4 : vector<1x128xi1>
    %cst = arith.constant 2.000000e+00 : f32
    %cst_0 = arith.constant 1.000000e+00 : f32
    %6 = vector.broadcast %cst : f32 to vector<1x128xf32>
    %7 = vector.broadcast %cst_0 : f32 to vector<1x128xf32>
    %8 = arith.select %5, %6, %7 : vector<1x128xi1>, vector<1x128xf32>
    %c0 = arith.constant 0 : index
    %c0_1 = arith.constant 0 : index
    %9 = vector.load %arg1[%c0, %c0_1] : memref<16x128xf32, #tpu.memory_space<vmem>>, vector<16x128xf32>
    %10 = vector.broadcast %8 : vector<1x128xf32> to vector<16x128xf32>
    %11 = arith.mulf %9, %10 : vector<16x128xf32>
    %c0_2 = arith.constant 0 : index
    %c0_3 = arith.constant 0 : index
    %12 = vector.load %arg2[%c0_2, %c0_3] : memref<32x128xf32, #tpu.memory_space<vmem>>, vector<32x128xf32>
    %13 = vector.broadcast %8 : vector<1x128xf32> to vector<32x128xf32>
    %14 = arith.mulf %12, %13 : vector<32x128xf32>
    %c0_4 = arith.constant 0 : index
    %c0_5 = arith.constant 0 : index
    %15 = vector.load %arg3[%c0_4, %c0_5] : memref<1x128xf32, #tpu.memory_space<vmem>>, vector<1x128xf32>
    %16 = arith.mulf %15, %8 : vector<1x128xf32>
    %c0_6 = arith.constant 0 : index
    %c0_7 = arith.constant 0 : index
    %17 = vector.load %arg4[%c0_6, %c0_7] : memref<32x128xf32, #tpu.memory_space<vmem>>, vector<32x128xf32>
    %18 = vector.broadcast %8 : vector<1x128xf32> to vector<32x128xf32>
    %19 = arith.mulf %17, %18 : vector<32x128xf32>
    %c0_8 = arith.constant 0 : index
    %c0_9 = arith.constant 0 : index
    %20 = vector.load %arg5[%c0_8, %c0_9] : memref<32x128xf32, #tpu.memory_space<vmem>>, vector<32x128xf32>
    %21 = vector.broadcast %8 : vector<1x128xf32> to vector<32x128xf32>
    %22 = arith.mulf %20, %21 : vector<32x128xf32>
    %c0_10 = arith.constant 0 : index
    %c0_11 = arith.constant 0 : index
    %23 = vector.load %arg6[%c0_10, %c0_11] : memref<1x128xf32, #tpu.memory_space<vmem>>, vector<1x128xf32>
    %24 = arith.mulf %23, %8 : vector<1x128xf32>
    %c0_12 = arith.constant 0 : index
    %c0_13 = arith.constant 0 : index
    %25 = vector.load %arg0[%c0_12, %c0_13] : memref<8x128xf32, #tpu.memory_space<vmem>>, vector<8x128xf32>
    %cst_14 = arith.constant 0.000000e+00 : f32
    %26 = vector.broadcast %cst_14 : f32 to vector<8x32xf32>
    %cst_15 = arith.constant 0.000000e+00 : f32
    %27 = vector.broadcast %cst_15 : f32 to vector<8x32xf32>
    %cst_16 = arith.constant 0.000000e+00 : f32
    %28 = vector.broadcast %cst_16 : f32 to vector<8x32xf32>
    %cst_17 = arith.constant 0.000000e+00 : f32
    %29 = vector.broadcast %cst_17 : f32 to vector<8x32xf32>
    %30 = vector.extract_strided_slice %25 {offsets = [0, 0], sizes = [8, 16], strides = [1, 1]} : vector<8x128xf32> to vector<8x16xf32>
    %cst_18 = arith.constant dense<0.000000e+00> : vector<8x128xf32>
    %31 = tpu.matmul %30, %11, %cst_18 {dimension_numbers = #tpu.dot_dimension_numbers<[1], [0], [0], [1], [0, 0, 1, 1], [], []>} : vector<8x16xf32>, vector<16x128xf32>, vector<8x128xf32> -> vector<8x128xf32>
    %cst_19 = arith.constant dense<0.000000e+00> : vector<8x128xf32>
    %32 = tpu.matmul %26, %14, %cst_19 {dimension_numbers = #tpu.dot_dimension_numbers<[1], [0], [0], [1], [0, 0, 1, 1], [], []>} : vector<8x32xf32>, vector<32x128xf32>, vector<8x128xf32> -> vector<8x128xf32>
    %33 = arith.addf %31, %32 : vector<8x128xf32>
    %34 = vector.broadcast %16 : vector<1x128xf32> to vector<8x128xf32>
    %35 = arith.addf %33, %34 : vector<8x128xf32>
    %36 = arith.negf %35 : vector<8x128xf32>
    %37 = math.exp %36 : vector<8x128xf32>
    %cst_20 = arith.constant 1.000000e+00 : f32
    %38 = vector.broadcast %cst_20 : f32 to vector<8x128xf32>
    %39 = arith.addf %38, %37 : vector<8x128xf32>
    %40 = arith.divf %38, %39 : vector<8x128xf32>
    %41 = vector.extract_strided_slice %40 {offsets = [0, 0], sizes = [8, 32], strides = [1, 1]} : vector<8x128xf32> to vector<8x32xf32>
    %42 = vector.extract_strided_slice %40 {offsets = [0, 32], sizes = [8, 32], strides = [1, 1]} : vector<8x128xf32> to vector<8x32xf32>
    %43 = vector.extract_strided_slice %40 {offsets = [0, 64], sizes = [8, 32], strides = [1, 1]} : vector<8x128xf32> to vector<8x32xf32>
    %cst_21 = arith.constant 2.000000e+00 : f32
    %44 = vector.broadcast %cst_21 : f32 to vector<8x32xf32>
    %45 = arith.mulf %44, %43 : vector<8x32xf32>
    %cst_22 = arith.constant 1.000000e+00 : f32
    %46 = vector.broadcast %cst_22 : f32 to vector<8x32xf32>
    %47 = arith.subf %45, %46 : vector<8x32xf32>
    %48 = vector.extract_strided_slice %40 {offsets = [0, 96], sizes = [8, 32], strides = [1, 1]} : vector<8x128xf32> to vector<8x32xf32>
    %49 = arith.mulf %42, %28 : vector<8x32xf32>
    %50 = arith.mulf %41, %47 : vector<8x32xf32>
    %51 = arith.addf %49, %50 : vector<8x32xf32>
    %52 = math.tanh %51 : vector<8x32xf32>
    %53 = arith.mulf %48, %52 : vector<8x32xf32>
    %cst_23 = arith.constant dense<0.000000e+00> : vector<8x128xf32>
    %54 = tpu.matmul %53, %19, %cst_23 {dimension_numbers = #tpu.dot_dimension_numbers<[1], [0], [0], [1], [0, 0, 1, 1], [], []>} : vector<8x32xf32>, vector<32x128xf32>, vector<8x128xf32> -> vector<8x128xf32>
    %cst_24 = arith.constant dense<0.000000e+00> : vector<8x128xf32>
    %55 = tpu.matmul %27, %22, %cst_24 {dimension_numbers = #tpu.dot_dimension_numbers<[1], [0], [0], [1], [0, 0, 1, 1], [], []>} : vector<8x32xf32>, vector<32x128xf32>, vector<8x128xf32> -> vector<8x128xf32>
    %56 = arith.addf %54, %55 : vector<8x128xf32>
    %57 = vector.broadcast %24 : vector<1x128xf32> to vector<8x128xf32>
    %58 = arith.addf %56, %57 : vector<8x128xf32>
    %59 = arith.negf %58 : vector<8x128xf32>
    %60 = math.exp %59 : vector<8x128xf32>
    %cst_25 = arith.constant 1.000000e+00 : f32
    %61 = vector.broadcast %cst_25 : f32 to vector<8x128xf32>
    %62 = arith.addf %61, %60 : vector<8x128xf32>
    %63 = arith.divf %61, %62 : vector<8x128xf32>
    %64 = vector.extract_strided_slice %63 {offsets = [0, 0], sizes = [8, 32], strides = [1, 1]} : vector<8x128xf32> to vector<8x32xf32>
    %65 = vector.extract_strided_slice %63 {offsets = [0, 32], sizes = [8, 32], strides = [1, 1]} : vector<8x128xf32> to vector<8x32xf32>
    %66 = vector.extract_strided_slice %63 {offsets = [0, 64], sizes = [8, 32], strides = [1, 1]} : vector<8x128xf32> to vector<8x32xf32>
    %cst_26 = arith.constant 2.000000e+00 : f32
    %67 = vector.broadcast %cst_26 : f32 to vector<8x32xf32>
    %68 = arith.mulf %67, %66 : vector<8x32xf32>
    %cst_27 = arith.constant 1.000000e+00 : f32
    %69 = vector.broadcast %cst_27 : f32 to vector<8x32xf32>
    %70 = arith.subf %68, %69 : vector<8x32xf32>
    %71 = vector.extract_strided_slice %63 {offsets = [0, 96], sizes = [8, 32], strides = [1, 1]} : vector<8x128xf32> to vector<8x32xf32>
    %72 = arith.mulf %65, %29 : vector<8x32xf32>
    %73 = arith.mulf %64, %70 : vector<8x32xf32>
    %74 = arith.addf %72, %73 : vector<8x32xf32>
    %75 = math.tanh %74 : vector<8x32xf32>
    %76 = arith.mulf %71, %75 : vector<8x32xf32>
    %77 = vector.extract_strided_slice %25 {offsets = [0, 16], sizes = [8, 16], strides = [1, 1]} : vector<8x128xf32> to vector<8x16xf32>
    %cst_28 = arith.constant dense<0.000000e+00> : vector<8x128xf32>
    %78 = tpu.matmul %77, %11, %cst_28 {dimension_numbers = #tpu.dot_dimension_numbers<[1], [0], [0], [1], [0, 0, 1, 1], [], []>} : vector<8x16xf32>, vector<16x128xf32>, vector<8x128xf32> -> vector<8x128xf32>
    %cst_29 = arith.constant dense<0.000000e+00> : vector<8x128xf32>
    %79 = tpu.matmul %53, %14, %cst_29 {dimension_numbers = #tpu.dot_dimension_numbers<[1], [0], [0], [1], [0, 0, 1, 1], [], []>} : vector<8x32xf32>, vector<32x128xf32>, vector<8x128xf32> -> vector<8x128xf32>
    %80 = arith.addf %78, %79 : vector<8x128xf32>
    %81 = vector.broadcast %16 : vector<1x128xf32> to vector<8x128xf32>
    %82 = arith.addf %80, %81 : vector<8x128xf32>
    %83 = arith.negf %82 : vector<8x128xf32>
    %84 = math.exp %83 : vector<8x128xf32>
    %cst_30 = arith.constant 1.000000e+00 : f32
    %85 = vector.broadcast %cst_30 : f32 to vector<8x128xf32>
    %86 = arith.addf %85, %84 : vector<8x128xf32>
    %87 = arith.divf %85, %86 : vector<8x128xf32>
    %88 = vector.extract_strided_slice %87 {offsets = [0, 0], sizes = [8, 32], strides = [1, 1]} : vector<8x128xf32> to vector<8x32xf32>
    %89 = vector.extract_strided_slice %87 {offsets = [0, 32], sizes = [8, 32], strides = [1, 1]} : vector<8x128xf32> to vector<8x32xf32>
    %90 = vector.extract_strided_slice %87 {offsets = [0, 64], sizes = [8, 32], strides = [1, 1]} : vector<8x128xf32> to vector<8x32xf32>
    %cst_31 = arith.constant 2.000000e+00 : f32
    %91 = vector.broadcast %cst_31 : f32 to vector<8x32xf32>
    %92 = arith.mulf %91, %90 : vector<8x32xf32>
    %cst_32 = arith.constant 1.000000e+00 : f32
    %93 = vector.broadcast %cst_32 : f32 to vector<8x32xf32>
    %94 = arith.subf %92, %93 : vector<8x32xf32>
    %95 = vector.extract_strided_slice %87 {offsets = [0, 96], sizes = [8, 32], strides = [1, 1]} : vector<8x128xf32> to vector<8x32xf32>
    %96 = arith.mulf %89, %51 : vector<8x32xf32>
    %97 = arith.mulf %88, %94 : vector<8x32xf32>
    %98 = arith.addf %96, %97 : vector<8x32xf32>
    %99 = math.tanh %98 : vector<8x32xf32>
    %100 = arith.mulf %95, %99 : vector<8x32xf32>
    %cst_33 = arith.constant dense<0.000000e+00> : vector<8x128xf32>
    %101 = tpu.matmul %100, %19, %cst_33 {dimension_numbers = #tpu.dot_dimension_numbers<[1], [0], [0], [1], [0, 0, 1, 1], [], []>} : vector<8x32xf32>, vector<32x128xf32>, vector<8x128xf32> -> vector<8x128xf32>
    %cst_34 = arith.constant dense<0.000000e+00> : vector<8x128xf32>
    %102 = tpu.matmul %76, %22, %cst_34 {dimension_numbers = #tpu.dot_dimension_numbers<[1], [0], [0], [1], [0, 0, 1, 1], [], []>} : vector<8x32xf32>, vector<32x128xf32>, vector<8x128xf32> -> vector<8x128xf32>
    %103 = arith.addf %101, %102 : vector<8x128xf32>
    %104 = vector.broadcast %24 : vector<1x128xf32> to vector<8x128xf32>
    %105 = arith.addf %103, %104 : vector<8x128xf32>
    %106 = arith.negf %105 : vector<8x128xf32>
    %107 = math.exp %106 : vector<8x128xf32>
    %cst_35 = arith.constant 1.000000e+00 : f32
    %108 = vector.broadcast %cst_35 : f32 to vector<8x128xf32>
    %109 = arith.addf %108, %107 : vector<8x128xf32>
    %110 = arith.divf %108, %109 : vector<8x128xf32>
    %111 = vector.extract_strided_slice %110 {offsets = [0, 0], sizes = [8, 32], strides = [1, 1]} : vector<8x128xf32> to vector<8x32xf32>
    %112 = vector.extract_strided_slice %110 {offsets = [0, 32], sizes = [8, 32], strides = [1, 1]} : vector<8x128xf32> to vector<8x32xf32>
    %113 = vector.extract_strided_slice %110 {offsets = [0, 64], sizes = [8, 32], strides = [1, 1]} : vector<8x128xf32> to vector<8x32xf32>
    %cst_36 = arith.constant 2.000000e+00 : f32
    %114 = vector.broadcast %cst_36 : f32 to vector<8x32xf32>
    %115 = arith.mulf %114, %113 : vector<8x32xf32>
    %cst_37 = arith.constant 1.000000e+00 : f32
    %116 = vector.broadcast %cst_37 : f32 to vector<8x32xf32>
    %117 = arith.subf %115, %116 : vector<8x32xf32>
    %118 = vector.extract_strided_slice %110 {offsets = [0, 96], sizes = [8, 32], strides = [1, 1]} : vector<8x128xf32> to vector<8x32xf32>
    %119 = arith.mulf %112, %74 : vector<8x32xf32>
    %120 = arith.mulf %111, %117 : vector<8x32xf32>
    %121 = arith.addf %119, %120 : vector<8x32xf32>
    %122 = math.tanh %121 : vector<8x32xf32>
    %123 = arith.mulf %118, %122 : vector<8x32xf32>
    %124 = vector.extract_strided_slice %25 {offsets = [0, 32], sizes = [8, 16], strides = [1, 1]} : vector<8x128xf32> to vector<8x16xf32>
    %cst_38 = arith.constant dense<0.000000e+00> : vector<8x128xf32>
    %125 = tpu.matmul %124, %11, %cst_38 {dimension_numbers = #tpu.dot_dimension_numbers<[1], [0], [0], [1], [0, 0, 1, 1], [], []>} : vector<8x16xf32>, vector<16x128xf32>, vector<8x128xf32> -> vector<8x128xf32>
    %cst_39 = arith.constant dense<0.000000e+00> : vector<8x128xf32>
    %126 = tpu.matmul %100, %14, %cst_39 {dimension_numbers = #tpu.dot_dimension_numbers<[1], [0], [0], [1], [0, 0, 1, 1], [], []>} : vector<8x32xf32>, vector<32x128xf32>, vector<8x128xf32> -> vector<8x128xf32>
    %127 = arith.addf %125, %126 : vector<8x128xf32>
    %128 = vector.broadcast %16 : vector<1x128xf32> to vector<8x128xf32>
    %129 = arith.addf %127, %128 : vector<8x128xf32>
    %130 = arith.negf %129 : vector<8x128xf32>
    %131 = math.exp %130 : vector<8x128xf32>
    %cst_40 = arith.constant 1.000000e+00 : f32
    %132 = vector.broadcast %cst_40 : f32 to vector<8x128xf32>
    %133 = arith.addf %132, %131 : vector<8x128xf32>
    %134 = arith.divf %132, %133 : vector<8x128xf32>
    %135 = vector.extract_strided_slice %134 {offsets = [0, 0], sizes = [8, 32], strides = [1, 1]} : vector<8x128xf32> to vector<8x32xf32>
    %136 = vector.extract_strided_slice %134 {offsets = [0, 32], sizes = [8, 32], strides = [1, 1]} : vector<8x128xf32> to vector<8x32xf32>
    %137 = vector.extract_strided_slice %134 {offsets = [0, 64], sizes = [8, 32], strides = [1, 1]} : vector<8x128xf32> to vector<8x32xf32>
    %cst_41 = arith.constant 2.000000e+00 : f32
    %138 = vector.broadcast %cst_41 : f32 to vector<8x32xf32>
    %139 = arith.mulf %138, %137 : vector<8x32xf32>
    %cst_42 = arith.constant 1.000000e+00 : f32
    %140 = vector.broadcast %cst_42 : f32 to vector<8x32xf32>
    %141 = arith.subf %139, %140 : vector<8x32xf32>
    %142 = vector.extract_strided_slice %134 {offsets = [0, 96], sizes = [8, 32], strides = [1, 1]} : vector<8x128xf32> to vector<8x32xf32>
    %143 = arith.mulf %136, %98 : vector<8x32xf32>
    %144 = arith.mulf %135, %141 : vector<8x32xf32>
    %145 = arith.addf %143, %144 : vector<8x32xf32>
    %146 = math.tanh %145 : vector<8x32xf32>
    %147 = arith.mulf %142, %146 : vector<8x32xf32>
    %cst_43 = arith.constant dense<0.000000e+00> : vector<8x128xf32>
    %148 = tpu.matmul %147, %19, %cst_43 {dimension_numbers = #tpu.dot_dimension_numbers<[1], [0], [0], [1], [0, 0, 1, 1], [], []>} : vector<8x32xf32>, vector<32x128xf32>, vector<8x128xf32> -> vector<8x128xf32>
    %cst_44 = arith.constant dense<0.000000e+00> : vector<8x128xf32>
    %149 = tpu.matmul %123, %22, %cst_44 {dimension_numbers = #tpu.dot_dimension_numbers<[1], [0], [0], [1], [0, 0, 1, 1], [], []>} : vector<8x32xf32>, vector<32x128xf32>, vector<8x128xf32> -> vector<8x128xf32>
    %150 = arith.addf %148, %149 : vector<8x128xf32>
    %151 = vector.broadcast %24 : vector<1x128xf32> to vector<8x128xf32>
    %152 = arith.addf %150, %151 : vector<8x128xf32>
    %153 = arith.negf %152 : vector<8x128xf32>
    %154 = math.exp %153 : vector<8x128xf32>
    %cst_45 = arith.constant 1.000000e+00 : f32
    %155 = vector.broadcast %cst_45 : f32 to vector<8x128xf32>
    %156 = arith.addf %155, %154 : vector<8x128xf32>
    %157 = arith.divf %155, %156 : vector<8x128xf32>
    %158 = vector.extract_strided_slice %157 {offsets = [0, 0], sizes = [8, 32], strides = [1, 1]} : vector<8x128xf32> to vector<8x32xf32>
    %159 = vector.extract_strided_slice %157 {offsets = [0, 32], sizes = [8, 32], strides = [1, 1]} : vector<8x128xf32> to vector<8x32xf32>
    %160 = vector.extract_strided_slice %157 {offsets = [0, 64], sizes = [8, 32], strides = [1, 1]} : vector<8x128xf32> to vector<8x32xf32>
    %cst_46 = arith.constant 2.000000e+00 : f32
    %161 = vector.broadcast %cst_46 : f32 to vector<8x32xf32>
    %162 = arith.mulf %161, %160 : vector<8x32xf32>
    %cst_47 = arith.constant 1.000000e+00 : f32
    %163 = vector.broadcast %cst_47 : f32 to vector<8x32xf32>
    %164 = arith.subf %162, %163 : vector<8x32xf32>
    %165 = vector.extract_strided_slice %157 {offsets = [0, 96], sizes = [8, 32], strides = [1, 1]} : vector<8x128xf32> to vector<8x32xf32>
    %166 = arith.mulf %159, %121 : vector<8x32xf32>
    %167 = arith.mulf %158, %164 : vector<8x32xf32>
    %168 = arith.addf %166, %167 : vector<8x32xf32>
    %169 = math.tanh %168 : vector<8x32xf32>
    %170 = arith.mulf %165, %169 : vector<8x32xf32>
    %171 = vector.extract_strided_slice %25 {offsets = [0, 48], sizes = [8, 16], strides = [1, 1]} : vector<8x128xf32> to vector<8x16xf32>
    %cst_48 = arith.constant dense<0.000000e+00> : vector<8x128xf32>
    %172 = tpu.matmul %171, %11, %cst_48 {dimension_numbers = #tpu.dot_dimension_numbers<[1], [0], [0], [1], [0, 0, 1, 1], [], []>} : vector<8x16xf32>, vector<16x128xf32>, vector<8x128xf32> -> vector<8x128xf32>
    %cst_49 = arith.constant dense<0.000000e+00> : vector<8x128xf32>
    %173 = tpu.matmul %147, %14, %cst_49 {dimension_numbers = #tpu.dot_dimension_numbers<[1], [0], [0], [1], [0, 0, 1, 1], [], []>} : vector<8x32xf32>, vector<32x128xf32>, vector<8x128xf32> -> vector<8x128xf32>
    %174 = arith.addf %172, %173 : vector<8x128xf32>
    %175 = vector.broadcast %16 : vector<1x128xf32> to vector<8x128xf32>
    %176 = arith.addf %174, %175 : vector<8x128xf32>
    %177 = arith.negf %176 : vector<8x128xf32>
    %178 = math.exp %177 : vector<8x128xf32>
    %cst_50 = arith.constant 1.000000e+00 : f32
    %179 = vector.broadcast %cst_50 : f32 to vector<8x128xf32>
    %180 = arith.addf %179, %178 : vector<8x128xf32>
    %181 = arith.divf %179, %180 : vector<8x128xf32>
    %182 = vector.extract_strided_slice %181 {offsets = [0, 0], sizes = [8, 32], strides = [1, 1]} : vector<8x128xf32> to vector<8x32xf32>
    %183 = vector.extract_strided_slice %181 {offsets = [0, 32], sizes = [8, 32], strides = [1, 1]} : vector<8x128xf32> to vector<8x32xf32>
    %184 = vector.extract_strided_slice %181 {offsets = [0, 64], sizes = [8, 32], strides = [1, 1]} : vector<8x128xf32> to vector<8x32xf32>
    %cst_51 = arith.constant 2.000000e+00 : f32
    %185 = vector.broadcast %cst_51 : f32 to vector<8x32xf32>
    %186 = arith.mulf %185, %184 : vector<8x32xf32>
    %cst_52 = arith.constant 1.000000e+00 : f32
    %187 = vector.broadcast %cst_52 : f32 to vector<8x32xf32>
    %188 = arith.subf %186, %187 : vector<8x32xf32>
    %189 = vector.extract_strided_slice %181 {offsets = [0, 96], sizes = [8, 32], strides = [1, 1]} : vector<8x128xf32> to vector<8x32xf32>
    %190 = arith.mulf %183, %145 : vector<8x32xf32>
    %191 = arith.mulf %182, %188 : vector<8x32xf32>
    %192 = arith.addf %190, %191 : vector<8x32xf32>
    %193 = math.tanh %192 : vector<8x32xf32>
    %194 = arith.mulf %189, %193 : vector<8x32xf32>
    %cst_53 = arith.constant dense<0.000000e+00> : vector<8x128xf32>
    %195 = tpu.matmul %194, %19, %cst_53 {dimension_numbers = #tpu.dot_dimension_numbers<[1], [0], [0], [1], [0, 0, 1, 1], [], []>} : vector<8x32xf32>, vector<32x128xf32>, vector<8x128xf32> -> vector<8x128xf32>
    %cst_54 = arith.constant dense<0.000000e+00> : vector<8x128xf32>
    %196 = tpu.matmul %170, %22, %cst_54 {dimension_numbers = #tpu.dot_dimension_numbers<[1], [0], [0], [1], [0, 0, 1, 1], [], []>} : vector<8x32xf32>, vector<32x128xf32>, vector<8x128xf32> -> vector<8x128xf32>
    %197 = arith.addf %195, %196 : vector<8x128xf32>
    %198 = vector.broadcast %24 : vector<1x128xf32> to vector<8x128xf32>
    %199 = arith.addf %197, %198 : vector<8x128xf32>
    %200 = arith.negf %199 : vector<8x128xf32>
    %201 = math.exp %200 : vector<8x128xf32>
    %cst_55 = arith.constant 1.000000e+00 : f32
    %202 = vector.broadcast %cst_55 : f32 to vector<8x128xf32>
    %203 = arith.addf %202, %201 : vector<8x128xf32>
    %204 = arith.divf %202, %203 : vector<8x128xf32>
    %205 = vector.extract_strided_slice %204 {offsets = [0, 0], sizes = [8, 32], strides = [1, 1]} : vector<8x128xf32> to vector<8x32xf32>
    %206 = vector.extract_strided_slice %204 {offsets = [0, 32], sizes = [8, 32], strides = [1, 1]} : vector<8x128xf32> to vector<8x32xf32>
    %207 = vector.extract_strided_slice %204 {offsets = [0, 64], sizes = [8, 32], strides = [1, 1]} : vector<8x128xf32> to vector<8x32xf32>
    %cst_56 = arith.constant 2.000000e+00 : f32
    %208 = vector.broadcast %cst_56 : f32 to vector<8x32xf32>
    %209 = arith.mulf %208, %207 : vector<8x32xf32>
    %cst_57 = arith.constant 1.000000e+00 : f32
    %210 = vector.broadcast %cst_57 : f32 to vector<8x32xf32>
    %211 = arith.subf %209, %210 : vector<8x32xf32>
    %212 = vector.extract_strided_slice %204 {offsets = [0, 96], sizes = [8, 32], strides = [1, 1]} : vector<8x128xf32> to vector<8x32xf32>
    %213 = arith.mulf %206, %168 : vector<8x32xf32>
    %214 = arith.mulf %205, %211 : vector<8x32xf32>
    %215 = arith.addf %213, %214 : vector<8x32xf32>
    %216 = math.tanh %215 : vector<8x32xf32>
    %217 = arith.mulf %212, %216 : vector<8x32xf32>
    %218 = vector.extract_strided_slice %25 {offsets = [0, 64], sizes = [8, 16], strides = [1, 1]} : vector<8x128xf32> to vector<8x16xf32>
    %cst_58 = arith.constant dense<0.000000e+00> : vector<8x128xf32>
    %219 = tpu.matmul %218, %11, %cst_58 {dimension_numbers = #tpu.dot_dimension_numbers<[1], [0], [0], [1], [0, 0, 1, 1], [], []>} : vector<8x16xf32>, vector<16x128xf32>, vector<8x128xf32> -> vector<8x128xf32>
    %cst_59 = arith.constant dense<0.000000e+00> : vector<8x128xf32>
    %220 = tpu.matmul %194, %14, %cst_59 {dimension_numbers = #tpu.dot_dimension_numbers<[1], [0], [0], [1], [0, 0, 1, 1], [], []>} : vector<8x32xf32>, vector<32x128xf32>, vector<8x128xf32> -> vector<8x128xf32>
    %221 = arith.addf %219, %220 : vector<8x128xf32>
    %222 = vector.broadcast %16 : vector<1x128xf32> to vector<8x128xf32>
    %223 = arith.addf %221, %222 : vector<8x128xf32>
    %224 = arith.negf %223 : vector<8x128xf32>
    %225 = math.exp %224 : vector<8x128xf32>
    %cst_60 = arith.constant 1.000000e+00 : f32
    %226 = vector.broadcast %cst_60 : f32 to vector<8x128xf32>
    %227 = arith.addf %226, %225 : vector<8x128xf32>
    %228 = arith.divf %226, %227 : vector<8x128xf32>
    %229 = vector.extract_strided_slice %228 {offsets = [0, 0], sizes = [8, 32], strides = [1, 1]} : vector<8x128xf32> to vector<8x32xf32>
    %230 = vector.extract_strided_slice %228 {offsets = [0, 32], sizes = [8, 32], strides = [1, 1]} : vector<8x128xf32> to vector<8x32xf32>
    %231 = vector.extract_strided_slice %228 {offsets = [0, 64], sizes = [8, 32], strides = [1, 1]} : vector<8x128xf32> to vector<8x32xf32>
    %cst_61 = arith.constant 2.000000e+00 : f32
    %232 = vector.broadcast %cst_61 : f32 to vector<8x32xf32>
    %233 = arith.mulf %232, %231 : vector<8x32xf32>
    %cst_62 = arith.constant 1.000000e+00 : f32
    %234 = vector.broadcast %cst_62 : f32 to vector<8x32xf32>
    %235 = arith.subf %233, %234 : vector<8x32xf32>
    %236 = vector.extract_strided_slice %228 {offsets = [0, 96], sizes = [8, 32], strides = [1, 1]} : vector<8x128xf32> to vector<8x32xf32>
    %237 = arith.mulf %230, %192 : vector<8x32xf32>
    %238 = arith.mulf %229, %235 : vector<8x32xf32>
    %239 = arith.addf %237, %238 : vector<8x32xf32>
    %240 = math.tanh %239 : vector<8x32xf32>
    %241 = arith.mulf %236, %240 : vector<8x32xf32>
    %cst_63 = arith.constant dense<0.000000e+00> : vector<8x128xf32>
    %242 = tpu.matmul %241, %19, %cst_63 {dimension_numbers = #tpu.dot_dimension_numbers<[1], [0], [0], [1], [0, 0, 1, 1], [], []>} : vector<8x32xf32>, vector<32x128xf32>, vector<8x128xf32> -> vector<8x128xf32>
    %cst_64 = arith.constant dense<0.000000e+00> : vector<8x128xf32>
    %243 = tpu.matmul %217, %22, %cst_64 {dimension_numbers = #tpu.dot_dimension_numbers<[1], [0], [0], [1], [0, 0, 1, 1], [], []>} : vector<8x32xf32>, vector<32x128xf32>, vector<8x128xf32> -> vector<8x128xf32>
    %244 = arith.addf %242, %243 : vector<8x128xf32>
    %245 = vector.broadcast %24 : vector<1x128xf32> to vector<8x128xf32>
    %246 = arith.addf %244, %245 : vector<8x128xf32>
    %247 = arith.negf %246 : vector<8x128xf32>
    %248 = math.exp %247 : vector<8x128xf32>
    %cst_65 = arith.constant 1.000000e+00 : f32
    %249 = vector.broadcast %cst_65 : f32 to vector<8x128xf32>
    %250 = arith.addf %249, %248 : vector<8x128xf32>
    %251 = arith.divf %249, %250 : vector<8x128xf32>
    %252 = vector.extract_strided_slice %251 {offsets = [0, 0], sizes = [8, 32], strides = [1, 1]} : vector<8x128xf32> to vector<8x32xf32>
    %253 = vector.extract_strided_slice %251 {offsets = [0, 32], sizes = [8, 32], strides = [1, 1]} : vector<8x128xf32> to vector<8x32xf32>
    %254 = vector.extract_strided_slice %251 {offsets = [0, 64], sizes = [8, 32], strides = [1, 1]} : vector<8x128xf32> to vector<8x32xf32>
    %cst_66 = arith.constant 2.000000e+00 : f32
    %255 = vector.broadcast %cst_66 : f32 to vector<8x32xf32>
    %256 = arith.mulf %255, %254 : vector<8x32xf32>
    %cst_67 = arith.constant 1.000000e+00 : f32
    %257 = vector.broadcast %cst_67 : f32 to vector<8x32xf32>
    %258 = arith.subf %256, %257 : vector<8x32xf32>
    %259 = vector.extract_strided_slice %251 {offsets = [0, 96], sizes = [8, 32], strides = [1, 1]} : vector<8x128xf32> to vector<8x32xf32>
    %260 = arith.mulf %253, %215 : vector<8x32xf32>
    %261 = arith.mulf %252, %258 : vector<8x32xf32>
    %262 = arith.addf %260, %261 : vector<8x32xf32>
    %263 = math.tanh %262 : vector<8x32xf32>
    %264 = arith.mulf %259, %263 : vector<8x32xf32>
    %265 = vector.extract_strided_slice %25 {offsets = [0, 80], sizes = [8, 16], strides = [1, 1]} : vector<8x128xf32> to vector<8x16xf32>
    %cst_68 = arith.constant dense<0.000000e+00> : vector<8x128xf32>
    %266 = tpu.matmul %265, %11, %cst_68 {dimension_numbers = #tpu.dot_dimension_numbers<[1], [0], [0], [1], [0, 0, 1, 1], [], []>} : vector<8x16xf32>, vector<16x128xf32>, vector<8x128xf32> -> vector<8x128xf32>
    %cst_69 = arith.constant dense<0.000000e+00> : vector<8x128xf32>
    %267 = tpu.matmul %241, %14, %cst_69 {dimension_numbers = #tpu.dot_dimension_numbers<[1], [0], [0], [1], [0, 0, 1, 1], [], []>} : vector<8x32xf32>, vector<32x128xf32>, vector<8x128xf32> -> vector<8x128xf32>
    %268 = arith.addf %266, %267 : vector<8x128xf32>
    %269 = vector.broadcast %16 : vector<1x128xf32> to vector<8x128xf32>
    %270 = arith.addf %268, %269 : vector<8x128xf32>
    %271 = arith.negf %270 : vector<8x128xf32>
    %272 = math.exp %271 : vector<8x128xf32>
    %cst_70 = arith.constant 1.000000e+00 : f32
    %273 = vector.broadcast %cst_70 : f32 to vector<8x128xf32>
    %274 = arith.addf %273, %272 : vector<8x128xf32>
    %275 = arith.divf %273, %274 : vector<8x128xf32>
    %276 = vector.extract_strided_slice %275 {offsets = [0, 0], sizes = [8, 32], strides = [1, 1]} : vector<8x128xf32> to vector<8x32xf32>
    %277 = vector.extract_strided_slice %275 {offsets = [0, 32], sizes = [8, 32], strides = [1, 1]} : vector<8x128xf32> to vector<8x32xf32>
    %278 = vector.extract_strided_slice %275 {offsets = [0, 64], sizes = [8, 32], strides = [1, 1]} : vector<8x128xf32> to vector<8x32xf32>
    %cst_71 = arith.constant 2.000000e+00 : f32
    %279 = vector.broadcast %cst_71 : f32 to vector<8x32xf32>
    %280 = arith.mulf %279, %278 : vector<8x32xf32>
    %cst_72 = arith.constant 1.000000e+00 : f32
    %281 = vector.broadcast %cst_72 : f32 to vector<8x32xf32>
    %282 = arith.subf %280, %281 : vector<8x32xf32>
    %283 = vector.extract_strided_slice %275 {offsets = [0, 96], sizes = [8, 32], strides = [1, 1]} : vector<8x128xf32> to vector<8x32xf32>
    %284 = arith.mulf %277, %239 : vector<8x32xf32>
    %285 = arith.mulf %276, %282 : vector<8x32xf32>
    %286 = arith.addf %284, %285 : vector<8x32xf32>
    %287 = math.tanh %286 : vector<8x32xf32>
    %288 = arith.mulf %283, %287 : vector<8x32xf32>
    %cst_73 = arith.constant dense<0.000000e+00> : vector<8x128xf32>
    %289 = tpu.matmul %288, %19, %cst_73 {dimension_numbers = #tpu.dot_dimension_numbers<[1], [0], [0], [1], [0, 0, 1, 1], [], []>} : vector<8x32xf32>, vector<32x128xf32>, vector<8x128xf32> -> vector<8x128xf32>
    %cst_74 = arith.constant dense<0.000000e+00> : vector<8x128xf32>
    %290 = tpu.matmul %264, %22, %cst_74 {dimension_numbers = #tpu.dot_dimension_numbers<[1], [0], [0], [1], [0, 0, 1, 1], [], []>} : vector<8x32xf32>, vector<32x128xf32>, vector<8x128xf32> -> vector<8x128xf32>
    %291 = arith.addf %289, %290 : vector<8x128xf32>
    %292 = vector.broadcast %24 : vector<1x128xf32> to vector<8x128xf32>
    %293 = arith.addf %291, %292 : vector<8x128xf32>
    %294 = arith.negf %293 : vector<8x128xf32>
    %295 = math.exp %294 : vector<8x128xf32>
    %cst_75 = arith.constant 1.000000e+00 : f32
    %296 = vector.broadcast %cst_75 : f32 to vector<8x128xf32>
    %297 = arith.addf %296, %295 : vector<8x128xf32>
    %298 = arith.divf %296, %297 : vector<8x128xf32>
    %299 = vector.extract_strided_slice %298 {offsets = [0, 0], sizes = [8, 32], strides = [1, 1]} : vector<8x128xf32> to vector<8x32xf32>
    %300 = vector.extract_strided_slice %298 {offsets = [0, 32], sizes = [8, 32], strides = [1, 1]} : vector<8x128xf32> to vector<8x32xf32>
    %301 = vector.extract_strided_slice %298 {offsets = [0, 64], sizes = [8, 32], strides = [1, 1]} : vector<8x128xf32> to vector<8x32xf32>
    %cst_76 = arith.constant 2.000000e+00 : f32
    %302 = vector.broadcast %cst_76 : f32 to vector<8x32xf32>
    %303 = arith.mulf %302, %301 : vector<8x32xf32>
    %cst_77 = arith.constant 1.000000e+00 : f32
    %304 = vector.broadcast %cst_77 : f32 to vector<8x32xf32>
    %305 = arith.subf %303, %304 : vector<8x32xf32>
    %306 = vector.extract_strided_slice %298 {offsets = [0, 96], sizes = [8, 32], strides = [1, 1]} : vector<8x128xf32> to vector<8x32xf32>
    %307 = arith.mulf %300, %262 : vector<8x32xf32>
    %308 = arith.mulf %299, %305 : vector<8x32xf32>
    %309 = arith.addf %307, %308 : vector<8x32xf32>
    %310 = math.tanh %309 : vector<8x32xf32>
    %311 = arith.mulf %306, %310 : vector<8x32xf32>
    %312 = vector.extract_strided_slice %25 {offsets = [0, 96], sizes = [8, 16], strides = [1, 1]} : vector<8x128xf32> to vector<8x16xf32>
    %cst_78 = arith.constant dense<0.000000e+00> : vector<8x128xf32>
    %313 = tpu.matmul %312, %11, %cst_78 {dimension_numbers = #tpu.dot_dimension_numbers<[1], [0], [0], [1], [0, 0, 1, 1], [], []>} : vector<8x16xf32>, vector<16x128xf32>, vector<8x128xf32> -> vector<8x128xf32>
    %cst_79 = arith.constant dense<0.000000e+00> : vector<8x128xf32>
    %314 = tpu.matmul %288, %14, %cst_79 {dimension_numbers = #tpu.dot_dimension_numbers<[1], [0], [0], [1], [0, 0, 1, 1], [], []>} : vector<8x32xf32>, vector<32x128xf32>, vector<8x128xf32> -> vector<8x128xf32>
    %315 = arith.addf %313, %314 : vector<8x128xf32>
    %316 = vector.broadcast %16 : vector<1x128xf32> to vector<8x128xf32>
    %317 = arith.addf %315, %316 : vector<8x128xf32>
    %318 = arith.negf %317 : vector<8x128xf32>
    %319 = math.exp %318 : vector<8x128xf32>
    %cst_80 = arith.constant 1.000000e+00 : f32
    %320 = vector.broadcast %cst_80 : f32 to vector<8x128xf32>
    %321 = arith.addf %320, %319 : vector<8x128xf32>
    %322 = arith.divf %320, %321 : vector<8x128xf32>
    %323 = vector.extract_strided_slice %322 {offsets = [0, 0], sizes = [8, 32], strides = [1, 1]} : vector<8x128xf32> to vector<8x32xf32>
    %324 = vector.extract_strided_slice %322 {offsets = [0, 32], sizes = [8, 32], strides = [1, 1]} : vector<8x128xf32> to vector<8x32xf32>
    %325 = vector.extract_strided_slice %322 {offsets = [0, 64], sizes = [8, 32], strides = [1, 1]} : vector<8x128xf32> to vector<8x32xf32>
    %cst_81 = arith.constant 2.000000e+00 : f32
    %326 = vector.broadcast %cst_81 : f32 to vector<8x32xf32>
    %327 = arith.mulf %326, %325 : vector<8x32xf32>
    %cst_82 = arith.constant 1.000000e+00 : f32
    %328 = vector.broadcast %cst_82 : f32 to vector<8x32xf32>
    %329 = arith.subf %327, %328 : vector<8x32xf32>
    %330 = vector.extract_strided_slice %322 {offsets = [0, 96], sizes = [8, 32], strides = [1, 1]} : vector<8x128xf32> to vector<8x32xf32>
    %331 = arith.mulf %324, %286 : vector<8x32xf32>
    %332 = arith.mulf %323, %329 : vector<8x32xf32>
    %333 = arith.addf %331, %332 : vector<8x32xf32>
    %334 = math.tanh %333 : vector<8x32xf32>
    %335 = arith.mulf %330, %334 : vector<8x32xf32>
    %cst_83 = arith.constant dense<0.000000e+00> : vector<8x128xf32>
    %336 = tpu.matmul %335, %19, %cst_83 {dimension_numbers = #tpu.dot_dimension_numbers<[1], [0], [0], [1], [0, 0, 1, 1], [], []>} : vector<8x32xf32>, vector<32x128xf32>, vector<8x128xf32> -> vector<8x128xf32>
    %cst_84 = arith.constant dense<0.000000e+00> : vector<8x128xf32>
    %337 = tpu.matmul %311, %22, %cst_84 {dimension_numbers = #tpu.dot_dimension_numbers<[1], [0], [0], [1], [0, 0, 1, 1], [], []>} : vector<8x32xf32>, vector<32x128xf32>, vector<8x128xf32> -> vector<8x128xf32>
    %338 = arith.addf %336, %337 : vector<8x128xf32>
    %339 = vector.broadcast %24 : vector<1x128xf32> to vector<8x128xf32>
    %340 = arith.addf %338, %339 : vector<8x128xf32>
    %341 = arith.negf %340 : vector<8x128xf32>
    %342 = math.exp %341 : vector<8x128xf32>
    %cst_85 = arith.constant 1.000000e+00 : f32
    %343 = vector.broadcast %cst_85 : f32 to vector<8x128xf32>
    %344 = arith.addf %343, %342 : vector<8x128xf32>
    %345 = arith.divf %343, %344 : vector<8x128xf32>
    %346 = vector.extract_strided_slice %345 {offsets = [0, 0], sizes = [8, 32], strides = [1, 1]} : vector<8x128xf32> to vector<8x32xf32>
    %347 = vector.extract_strided_slice %345 {offsets = [0, 32], sizes = [8, 32], strides = [1, 1]} : vector<8x128xf32> to vector<8x32xf32>
    %348 = vector.extract_strided_slice %345 {offsets = [0, 64], sizes = [8, 32], strides = [1, 1]} : vector<8x128xf32> to vector<8x32xf32>
    %cst_86 = arith.constant 2.000000e+00 : f32
    %349 = vector.broadcast %cst_86 : f32 to vector<8x32xf32>
    %350 = arith.mulf %349, %348 : vector<8x32xf32>
    %cst_87 = arith.constant 1.000000e+00 : f32
    %351 = vector.broadcast %cst_87 : f32 to vector<8x32xf32>
    %352 = arith.subf %350, %351 : vector<8x32xf32>
    %353 = vector.extract_strided_slice %345 {offsets = [0, 96], sizes = [8, 32], strides = [1, 1]} : vector<8x128xf32> to vector<8x32xf32>
    %354 = arith.mulf %347, %309 : vector<8x32xf32>
    %355 = arith.mulf %346, %352 : vector<8x32xf32>
    %356 = arith.addf %354, %355 : vector<8x32xf32>
    %357 = math.tanh %356 : vector<8x32xf32>
    %358 = arith.mulf %353, %357 : vector<8x32xf32>
    %359 = vector.extract_strided_slice %25 {offsets = [0, 112], sizes = [8, 16], strides = [1, 1]} : vector<8x128xf32> to vector<8x16xf32>
    %cst_88 = arith.constant dense<0.000000e+00> : vector<8x128xf32>
    %360 = tpu.matmul %359, %11, %cst_88 {dimension_numbers = #tpu.dot_dimension_numbers<[1], [0], [0], [1], [0, 0, 1, 1], [], []>} : vector<8x16xf32>, vector<16x128xf32>, vector<8x128xf32> -> vector<8x128xf32>
    %cst_89 = arith.constant dense<0.000000e+00> : vector<8x128xf32>
    %361 = tpu.matmul %335, %14, %cst_89 {dimension_numbers = #tpu.dot_dimension_numbers<[1], [0], [0], [1], [0, 0, 1, 1], [], []>} : vector<8x32xf32>, vector<32x128xf32>, vector<8x128xf32> -> vector<8x128xf32>
    %362 = arith.addf %360, %361 : vector<8x128xf32>
    %363 = vector.broadcast %16 : vector<1x128xf32> to vector<8x128xf32>
    %364 = arith.addf %362, %363 : vector<8x128xf32>
    %365 = arith.negf %364 : vector<8x128xf32>
    %366 = math.exp %365 : vector<8x128xf32>
    %cst_90 = arith.constant 1.000000e+00 : f32
    %367 = vector.broadcast %cst_90 : f32 to vector<8x128xf32>
    %368 = arith.addf %367, %366 : vector<8x128xf32>
    %369 = arith.divf %367, %368 : vector<8x128xf32>
    %370 = vector.extract_strided_slice %369 {offsets = [0, 0], sizes = [8, 32], strides = [1, 1]} : vector<8x128xf32> to vector<8x32xf32>
    %371 = vector.extract_strided_slice %369 {offsets = [0, 32], sizes = [8, 32], strides = [1, 1]} : vector<8x128xf32> to vector<8x32xf32>
    %372 = vector.extract_strided_slice %369 {offsets = [0, 64], sizes = [8, 32], strides = [1, 1]} : vector<8x128xf32> to vector<8x32xf32>
    %cst_91 = arith.constant 2.000000e+00 : f32
    %373 = vector.broadcast %cst_91 : f32 to vector<8x32xf32>
    %374 = arith.mulf %373, %372 : vector<8x32xf32>
    %cst_92 = arith.constant 1.000000e+00 : f32
    %375 = vector.broadcast %cst_92 : f32 to vector<8x32xf32>
    %376 = arith.subf %374, %375 : vector<8x32xf32>
    %377 = vector.extract_strided_slice %369 {offsets = [0, 96], sizes = [8, 32], strides = [1, 1]} : vector<8x128xf32> to vector<8x32xf32>
    %378 = arith.mulf %371, %333 : vector<8x32xf32>
    %379 = arith.mulf %370, %376 : vector<8x32xf32>
    %380 = arith.addf %378, %379 : vector<8x32xf32>
    %381 = math.tanh %380 : vector<8x32xf32>
    %382 = arith.mulf %377, %381 : vector<8x32xf32>
    %cst_93 = arith.constant dense<0.000000e+00> : vector<8x128xf32>
    %383 = tpu.matmul %382, %19, %cst_93 {dimension_numbers = #tpu.dot_dimension_numbers<[1], [0], [0], [1], [0, 0, 1, 1], [], []>} : vector<8x32xf32>, vector<32x128xf32>, vector<8x128xf32> -> vector<8x128xf32>
    %cst_94 = arith.constant dense<0.000000e+00> : vector<8x128xf32>
    %384 = tpu.matmul %358, %22, %cst_94 {dimension_numbers = #tpu.dot_dimension_numbers<[1], [0], [0], [1], [0, 0, 1, 1], [], []>} : vector<8x32xf32>, vector<32x128xf32>, vector<8x128xf32> -> vector<8x128xf32>
    %385 = arith.addf %383, %384 : vector<8x128xf32>
    %386 = vector.broadcast %24 : vector<1x128xf32> to vector<8x128xf32>
    %387 = arith.addf %385, %386 : vector<8x128xf32>
    %388 = arith.negf %387 : vector<8x128xf32>
    %389 = math.exp %388 : vector<8x128xf32>
    %cst_95 = arith.constant 1.000000e+00 : f32
    %390 = vector.broadcast %cst_95 : f32 to vector<8x128xf32>
    %391 = arith.addf %390, %389 : vector<8x128xf32>
    %392 = arith.divf %390, %391 : vector<8x128xf32>
    %393 = vector.extract_strided_slice %392 {offsets = [0, 0], sizes = [8, 32], strides = [1, 1]} : vector<8x128xf32> to vector<8x32xf32>
    %394 = vector.extract_strided_slice %392 {offsets = [0, 32], sizes = [8, 32], strides = [1, 1]} : vector<8x128xf32> to vector<8x32xf32>
    %395 = vector.extract_strided_slice %392 {offsets = [0, 64], sizes = [8, 32], strides = [1, 1]} : vector<8x128xf32> to vector<8x32xf32>
    %cst_96 = arith.constant 2.000000e+00 : f32
    %396 = vector.broadcast %cst_96 : f32 to vector<8x32xf32>
    %397 = arith.mulf %396, %395 : vector<8x32xf32>
    %cst_97 = arith.constant 1.000000e+00 : f32
    %398 = vector.broadcast %cst_97 : f32 to vector<8x32xf32>
    %399 = arith.subf %397, %398 : vector<8x32xf32>
    %400 = vector.extract_strided_slice %392 {offsets = [0, 96], sizes = [8, 32], strides = [1, 1]} : vector<8x128xf32> to vector<8x32xf32>
    %401 = arith.mulf %394, %356 : vector<8x32xf32>
    %402 = arith.mulf %393, %399 : vector<8x32xf32>
    %403 = arith.addf %401, %402 : vector<8x32xf32>
    %404 = math.tanh %403 : vector<8x32xf32>
    %405 = arith.mulf %400, %404 : vector<8x32xf32>
    %406 = tpu.concatenate %382, %405 in 0 : vector<8x32xf32>, vector<8x32xf32> -> vector<16x32xf32>
    %c0_98 = arith.constant 0 : index
    %c0_99 = arith.constant 0 : index
    %407 = vector.load %arg7[%c0_98, %c0_99] : memref<32x4xf32, #tpu.memory_space<vmem>>, vector<32x4xf32>
    %cst_100 = arith.constant dense<0.000000e+00> : vector<16x4xf32>
    %408 = tpu.matmul %406, %407, %cst_100 {dimension_numbers = #tpu.dot_dimension_numbers<[1], [0], [0], [1], [0, 0, 1, 1], [], []>} : vector<16x32xf32>, vector<32x4xf32>, vector<16x4xf32> -> vector<16x4xf32>
    %c0_101 = arith.constant 0 : index
    %c0_102 = arith.constant 0 : index
    %409 = vector.load %arg8[%c0_101, %c0_102] : memref<1x4xf32, #tpu.memory_space<vmem>>, vector<1x4xf32>
    %410 = vector.broadcast %409 : vector<1x4xf32> to vector<16x4xf32>
    %411 = arith.addf %408, %410 : vector<16x4xf32>
    %c0_103 = arith.constant 0 : index
    %c0_104 = arith.constant 0 : index
    %412 = vector.load %arg9[%c0_103, %c0_104] : memref<16x4xf32, #tpu.memory_space<vmem>>, vector<16x4xf32>
    tpu.vector_store %arg9[%c0_103, %c0_104], %411 {strides = array<i32>} : memref<16x4xf32, #tpu.memory_space<vmem>>, vector<16x4xf32>,
    return
  }
}

</mosaic_0001>

<llo_original>
// kernel: lstm_forward.1
$region0: #{lstm_forward.1}
  #allocation0 [shape = 'u32[]', space=smem, size = 0x4, offset = 0x4, fixed_abs, tag = 'smem constant byte address 0x4 - core index']
  #allocation1 [shape = 'u32[144,128]{1,0:T(1,128)}', space=vmem, size = 0x12000, scoped, tag = 'internal scratch']
  %s0 = inlined_call_operand.vmem [shape: f32[8,128], index: 0, kind: input, shape index: {}]
  %s1 = inlined_call_operand.vmem [shape: f32[16,128], index: 1, kind: input, shape index: {}]
  %s2 = inlined_call_operand.vmem [shape: f32[32,128], index: 2, kind: input, shape index: {}]
  %s3 = inlined_call_operand.vmem [shape: f32[1,128], index: 3, kind: input, shape index: {}]
  %s4 = inlined_call_operand.vmem [shape: f32[32,128], index: 4, kind: input, shape index: {}]
  %s5 = inlined_call_operand.vmem [shape: f32[32,128], index: 5, kind: input, shape index: {}]
  %s6 = inlined_call_operand.vmem [shape: f32[1,128], index: 6, kind: input, shape index: {}]
  %s7 = inlined_call_operand.vmem [shape: f32[32,4], index: 7, kind: input, shape index: {}]
  %s8 = inlined_call_operand.hbm [shape: f32[1,4], index: 8, kind: input, shape index: {}]
  %s9 = inlined_call_operand.vmem [shape: f32[16,4], index: 9, kind: output, shape index: {}]
  %s10 = sld [smem:[#allocation0]]
  $region50: #{lstm_forward.1} parent=0
    _
  %s12 = ssub.s32 1, %s10
  %s13 = scalar_select 0, %s12, %s10
  $region1: #{lstm_forward.1} parent=0
    #allocation2 [shape = 'u8[512]{0}', space=vmem, size = 0x400, scoped, tag = 'input window, operand 8, single buffered']
    #allocation3 [shape = 's32[1]{0}', space=sflag, size = 0x4, scoped, tag = 'scoped memory for lstm_forward.1']
    %14 = vsyncpa [#allocation3], 0
    // Predicated region
    $region2: #{lstm_forward.1} parent=1 // pred_check
      _
    $region3: #{lstm_forward.1} parent=1 // pred_check_branch
      %16 = sbr.rel (0) target = $region5
    $region4: #{lstm_forward.1} parent=1 // pred_region
      _
    $region5: #{lstm_forward.1} parent=1 // pred_fallthru
      _
    // Predicated region
    $region6: #{lstm_forward.1} parent=1 // pred_check
      _
    $region7: #{lstm_forward.1} parent=1 // pred_check_branch
      %18 = sbr.rel (0) target = $region9
    $region8: #{lstm_forward.1} parent=1 // pred_region
      _
    $region9: #{lstm_forward.1} parent=1 // pred_fallthru
      _
    // Predicated region
    $region10: #{lstm_forward.1} parent=1 // pred_check
      _
    $region11: #{lstm_forward.1} parent=1 // pred_check_branch
      %20 = sbr.rel (0) target = $region13
    $region12: #{lstm_forward.1} parent=1 // pred_region
      _
    $region13: #{lstm_forward.1} parent=1 // pred_fallthru
      _
    // Predicated region
    $region14: #{lstm_forward.1} parent=1 // pred_check
      _
    $region15: #{lstm_forward.1} parent=1 // pred_check_branch
      %22 = sbr.rel (0) target = $region17
    $region16: #{lstm_forward.1} parent=1 // pred_region
      _
    $region17: #{lstm_forward.1} parent=1 // pred_fallthru
      _
    // Predicated region
    $region18: #{lstm_forward.1} parent=1 // pred_check
      _
    $region19: #{lstm_forward.1} parent=1 // pred_check_branch
      %24 = sbr.rel (0) target = $region21
    $region20: #{lstm_forward.1} parent=1 // pred_region
      _
    $region21: #{lstm_forward.1} parent=1 // pred_fallthru
      _
    // Predicated region
    $region22: #{lstm_forward.1} parent=1 // pred_check
      _
    $region23: #{lstm_forward.1} parent=1 // pred_check_branch
      %26 = sbr.rel (0) target = $region25
    $region24: #{lstm_forward.1} parent=1 // pred_region
      _
    $region25: #{lstm_forward.1} parent=1 // pred_fallthru
      _
    // Predicated region
    $region26: #{lstm_forward.1} parent=1 // pred_check
      _
    $region27: #{lstm_forward.1} parent=1 // pred_check_branch
      %28 = sbr.rel (0) target = $region29
    $region28: #{lstm_forward.1} parent=1 // pred_region
      _
    $region29: #{lstm_forward.1} parent=1 // pred_fallthru
      _
    // Predicated region
    $region30: #{lstm_forward.1} parent=1 // pred_check
      _
    $region31: #{lstm_forward.1} parent=1 // pred_check_branch
      %30 = sbr.rel (0) target = $region33
    $region32: #{lstm_forward.1} parent=1 // pred_region
      _
    $region33: #{lstm_forward.1} parent=1 // pred_fallthru
      _
    // Predicated region
    $region34: #{lstm_forward.1} parent=1 // pred_check
      _
    $region35: #{lstm_forward.1} parent=1 // pred_check_branch
      %32 = sbr.rel (0) target = $region37
    $region36: #{lstm_forward.1} parent=1 // pred_region
      %s34 = ssub.s32 16, 16
      %35 = vsyncadd [#allocation3], %s34
      %s37 = sshll.u32 [#allocation2], 4
      %s38 = int_to_ptr.vmem [resolvable:$true] %s37
      %40 = dma.hbm_to_vmem [thread:$0]  %s8, 16, %s38, [#allocation3]
    $region37: #{lstm_forward.1} parent=1 // pred_fallthru
      _
    // Predicated region
    $region38: #{lstm_forward.1} parent=1 // pred_check
      _
    $region39: #{lstm_forward.1} parent=1 // pred_check_branch
      %42 = sbr.rel (0) target = $region41
    $region40: #{lstm_forward.1} parent=1 // pred_region
      %43 = dma.done [#allocation3], 16
    $region41: #{lstm_forward.1} parent=1 // pred_fallthru
      _
    %v44 = vlaneseq
    %v45 = vand.u32 %v44, 127
    %vm46 = vcmp.ge.s32.totalorder %v45, 64
    %vm47 = vcmp.lt.s32.totalorder %v45, 96
    %vm48 = vmand %vm46, %vm47
    %v49 = vsel %vm48, 2.0, 1.0
    %v50 = vld [vmem:[%s1] sm:$0xff]
    %v51 = vld [vmem:[%s1 + $0x8] sm:$0xff]
    %v52 = vmul.f32 %v50, %v49
    %v53 = vmul.f32 %v51, %v49
    %v54 = vld [vmem:[%s2] sm:$0xff]
    %v55 = vld [vmem:[%s2 + $0x8] sm:$0xff]
    %v56 = vld [vmem:[%s2 + $0x10] sm:$0xff]
    %v57 = vld [vmem:[%s2 + $0x18] sm:$0xff]
    %v58 = vmul.f32 %v54, %v49
    %v59 = vmul.f32 %v55, %v49
    %v60 = vmul.f32 %v56, %v49
    %v61 = vmul.f32 %v57, %v49
    %v62 = vld [vmem:[%s3] sm:$0x1]
    %v63 = vmul.f32 %v62, %v49
    %v64 = vld [vmem:[%s4] sm:$0xff]
    %v65 = vld [vmem:[%s4 + $0x8] sm:$0xff]
    %v66 = vld [vmem:[%s4 + $0x10] sm:$0xff]
    %v67 = vld [vmem:[%s4 + $0x18] sm:$0xff]
    %v68 = vmul.f32 %v64, %v49
    %v69 = vmul.f32 %v65, %v49
    %v70 = vmul.f32 %v66, %v49
    %v71 = vmul.f32 %v67, %v49
    %v72 = vld [vmem:[%s5] sm:$0xff]
    %v73 = vld [vmem:[%s5 + $0x8] sm:$0xff]
    %v74 = vld [vmem:[%s5 + $0x10] sm:$0xff]
    %v75 = vld [vmem:[%s5 + $0x18] sm:$0xff]
    %v76 = vmul.f32 %v72, %v49
    %v77 = vmul.f32 %v73, %v49
    %v78 = vmul.f32 %v74, %v49
    %v79 = vmul.f32 %v75, %v49
    %v80 = vld [vmem:[%s6] sm:$0x1]
    %v81 = vmul.f32 %v80, %v49
    %v82 = vld [vmem:[%s0] sm:$0xff]
    %vm83 = vcmask 261120
    %v85 = vsel %vm83, 0.0, 0
    %87 = vmatprep.subr.mxu0 0.0
    %88 = vmatpush1.msra.mxu0 0.0
    %89 = vmatprep.subr.mxu0 0.0
    %90 = vmatpush1.msra.mxu0 0.0
    %91 = vmatprep.subr.mxu0 0.0
    %92 = vmatpush1.msra.mxu0 0.0
    %93 = vmatprep.subr.mxu0 0.0
    %94 = vmatpush1.msra.mxu0 0.0
    %95 = vmatprep.subr.mxu0 0.0
    %96 = vmatpush1.msra.mxu0 0.0
    %97 = vmatprep.subr.mxu0 0.0
    %98 = vmatpush1.msra.mxu0 0.0
    %99 = vmatprep.subr.mxu0 0.0
    %100 = vmatpush1.msra.mxu0 0.0
    %101 = vmatprep.subr.mxu0 0.0
    %102 = vmatpush1.msra.mxu0 0.0
    %103 = vmatprep.subr.mxu0 0.0
    %104 = vmatpush1.msra.mxu0 0.0
    %105 = vmatprep.subr.mxu0 0.0
    %106 = vmatpush1.msra.mxu0 0.0
    %107 = vmatprep.subr.mxu0 0.0
    %108 = vmatpush1.msra.mxu0 0.0
    %109 = vmatprep.subr.mxu0 0.0
    %110 = vmatpush1.msra.mxu0 0.0
    %111 = vmatprep.subr.mxu0 0.0
    %112 = vmatpush1.msra.mxu0 %v61
    %113 = vmatprep.subr.mxu0 0.0
    %114 = vmatpush1.msra.mxu0 %v60
    %115 = vmatprep.subr.mxu0 0.0
    %116 = vmatpush1.msra.mxu0 %v59
    %117 = vmatprep.subr.mxu0 0.0
    %118 = vmatpush1.msra.mxu0 %v58
    %119 = vmatprep.subr.mxu0 0.0
    %120 = vmatpush2.msra.mxu0 0.0
    %121 = vmatprep.subr.mxu0 0.0
    %122 = vmatpush2.msra.mxu0 0.0
    %123 = vmatprep.subr.mxu0 0.0
    %124 = vmatpush2.msra.mxu0 0.0
    %125 = vmatprep.subr.mxu0 0.0
    %126 = vmatpush2.msra.mxu0 0.0
    %127 = vmatprep.subr.mxu0 0.0
    %128 = vmatpush2.msra.mxu0 0.0
    %129 = vmatprep.subr.mxu0 0.0
    %130 = vmatpush2.msra.mxu0 0.0
    %131 = vmatprep.subr.mxu0 0.0
    %132 = vmatpush2.msra.mxu0 0.0
    %133 = vmatprep.subr.mxu0 0.0
    %134 = vmatpush2.msra.mxu0 0.0
    %135 = vmatprep.subr.mxu0 0.0
    %136 = vmatpush2.msra.mxu0 0.0
    %137 = vmatprep.subr.mxu0 0.0
    %138 = vmatpush2.msra.mxu0 0.0
    %139 = vmatprep.subr.mxu0 0.0
    %140 = vmatpush2.msra.mxu0 0.0
    %141 = vmatprep.subr.mxu0 0.0
    %142 = vmatpush2.msra.mxu0 0.0
    %143 = vmatprep.subr.mxu0 0.0
    %144 = vmatpush2.msra.mxu0 0.0
    %145 = vmatprep.subr.mxu0 0.0
    %146 = vmatpush2.msra.mxu0 0.0
    %147 = vmatprep.subr.mxu0 0.0
    %148 = vmatpush2.msra.mxu0 0.0
    %149 = vmatprep.subr.mxu0 0.0
    %150 = vmatpush2.msra.mxu0 0.0
    %151 = vmatprep.mubr.f32.mxu0 0.0
    %152 = vmatmul.mubr.f32.gmra.mxu0 %v85
    %v153 = vpop.f32.mrf.mxu0
    %v154 = vadd.f32 0.0, %v153
    %v155 = vpop.f32.mrf.mxu0
    %156 = vdwg.mxu0
    %vm157 = vcmask 130048
    %v159 = vsel %vm157, %v82, 0
    %161 = vmatprep.subr.mxu0 0.0
    %162 = vmatpush1.msra.mxu0 0.0
    %163 = vmatprep.subr.mxu0 0.0
    %164 = vmatpush1.msra.mxu0 0.0
    %165 = vmatprep.subr.mxu0 0.0
    %166 = vmatpush1.msra.mxu0 0.0
    %167 = vmatprep.subr.mxu0 0.0
    %168 = vmatpush1.msra.mxu0 0.0
    %169 = vmatprep.subr.mxu0 0.0
    %170 = vmatpush1.msra.mxu0 0.0
    %171 = vmatprep.subr.mxu0 0.0
    %172 = vmatpush1.msra.mxu0 0.0
    %173 = vmatprep.subr.mxu0 0.0
    %174 = vmatpush1.msra.mxu0 0.0
    %175 = vmatprep.subr.mxu0 0.0
    %176 = vmatpush1.msra.mxu0 0.0
    %177 = vmatprep.subr.mxu0 0.0
    %178 = vmatpush1.msra.mxu0 0.0
    %179 = vmatprep.subr.mxu0 0.0
    %180 = vmatpush1.msra.mxu0 0.0
    %181 = vmatprep.subr.mxu0 0.0
    %182 = vmatpush1.msra.mxu0 0.0
    %183 = vmatprep.subr.mxu0 0.0
    %184 = vmatpush1.msra.mxu0 0.0
    %185 = vmatprep.subr.mxu0 0.0
    %186 = vmatpush1.msra.mxu0 0.0
    %187 = vmatprep.subr.mxu0 0.0
    %188 = vmatpush1.msra.mxu0 0.0
    %189 = vmatprep.subr.mxu0 0.0
    %190 = vmatpush1.msra.mxu0 %v53
    %191 = vmatprep.subr.mxu0 0.0
    %192 = vmatpush1.msra.mxu0 %v52
    %193 = vmatprep.subr.mxu0 0.0
    %194 = vmatpush2.msra.mxu0 0.0
    %195 = vmatprep.subr.mxu0 0.0
    %196 = vmatpush2.msra.mxu0 0.0
    %197 = vmatprep.subr.mxu0 0.0
    %198 = vmatpush2.msra.mxu0 0.0
    %199 = vmatprep.subr.mxu0 0.0
    %200 = vmatpush2.msra.mxu0 0.0
    %201 = vmatprep.subr.mxu0 0.0
    %202 = vmatpush2.msra.mxu0 0.0
    %203 = vmatprep.subr.mxu0 0.0
    %204 = vmatpush2.msra.mxu0 0.0
    %205 = vmatprep.subr.mxu0 0.0
    %206 = vmatpush2.msra.mxu0 0.0
    %207 = vmatprep.subr.mxu0 0.0
    %208 = vmatpush2.msra.mxu0 0.0
    %209 = vmatprep.subr.mxu0 0.0
    %210 = vmatpush2.msra.mxu0 0.0
    %211 = vmatprep.subr.mxu0 0.0
    %212 = vmatpush2.msra.mxu0 0.0
    %213 = vmatprep.subr.mxu0 0.0
    %214 = vmatpush2.msra.mxu0 0.0
    %215 = vmatprep.subr.mxu0 0.0
    %216 = vmatpush2.msra.mxu0 0.0
    %217 = vmatprep.subr.mxu0 0.0
    %218 = vmatpush2.msra.mxu0 0.0
    %219 = vmatprep.subr.mxu0 0.0
    %220 = vmatpush2.msra.mxu0 0.0
    %221 = vmatprep.subr.mxu0 0.0
    %222 = vmatpush2.msra.mxu0 0.0
    %223 = vmatprep.subr.mxu0 0.0
    %224 = vmatpush2.msra.mxu0 0.0
    %225 = vmatprep.mubr.f32.mxu0 0.0
    %226 = vmatmul.mubr.f32.gmra.mxu0 %v159
    %v227 = vpop.f32.mrf.mxu0
    %v228 = vadd.f32 %v154, %v227
    %v229 = vpop.f32.mrf.mxu0
    %230 = vdwg.mxu0
    %v232 = vlaneseq
    %v233 = vshrl.u32 %v232, 7
    %v234 = vsub.s32 0, %v233
    %v235 = vrot.slane %v63, %v234
    %v237 = vadd.f32 %v228, %v235
    %v238 = vxor.u32 %v237, 2147483648
    %v239 = vmul.f32 %v238, 1.442695
    %v240 = vpow.pop %v239
    %v241 = vadd.f32 %v240, 1.0
    %v242 = vrcp.pop %v241
    %v243 = vmul.f32 1.0, %v242
    %v244 = vmul.f32 %v243, 2.0
    %v245 = vsub.f32 %v244, 1.0
    %v246 = vmul.f32 %v243, 0.0
    %248 = vrot.lane.b32.xlu0 %v245, 64
    %v249 = vpop.permute.xlu0 %248
    %v251 = vmul.f32 %v243, %v249
    %253 = vrot.lane.b32.xlu0 %v251, 32
    %v254 = vpop.permute.xlu0 %253
    %v256 = vadd.f32 %v246, %v254
    %v257 = vtanh.pop %v256
    %259 = vrot.lane.b32.xlu0 %v257, 64
    %v260 = vpop.permute.xlu0 %259
    %v262 = vmul.f32 %v243, %v260
    %263 = vmatprep.subr.mxu0 0.0
    %264 = vmatpush1.msra.mxu0 0.0
    %265 = vmatprep.subr.mxu0 0.0
    %266 = vmatpush1.msra.mxu0 0.0
    %267 = vmatprep.subr.mxu0 0.0
    %268 = vmatpush1.msra.mxu0 0.0
    %269 = vmatprep.subr.mxu0 0.0
    %270 = vmatpush1.msra.mxu0 0.0
    %271 = vmatprep.subr.mxu0 0.0
    %272 = vmatpush1.msra.mxu0 0.0
    %273 = vmatprep.subr.mxu0 0.0
    %274 = vmatpush1.msra.mxu0 0.0
    %275 = vmatprep.subr.mxu0 0.0
    %276 = vmatpush1.msra.mxu0 0.0
    %277 = vmatprep.subr.mxu0 0.0
    %278 = vmatpush1.msra.mxu0 0.0
    %279 = vmatprep.subr.mxu0 0.0
    %280 = vmatpush1.msra.mxu0 0.0
    %281 = vmatprep.subr.mxu0 0.0
    %282 = vmatpush1.msra.mxu0 0.0
    %283 = vmatprep.subr.mxu0 0.0
    %284 = vmatpush1.msra.mxu0 0.0
    %285 = vmatprep.subr.mxu0 0.0
    %286 = vmatpush1.msra.mxu0 0.0
    %287 = vmatprep.subr.mxu0 0.0
    %288 = vmatpush1.msra.mxu0 %v79
    %289 = vmatprep.subr.mxu0 0.0
    %290 = vmatpush1.msra.mxu0 %v78
    %291 = vmatprep.subr.mxu0 0.0
    %292 = vmatpush1.msra.mxu0 %v77
    %293 = vmatprep.subr.mxu0 0.0
    %294 = vmatpush1.msra.mxu0 %v76
    %295 = vmatprep.subr.mxu0 0.0
    %296 = vmatpush2.msra.mxu0 0.0
    %297 = vmatprep.subr.mxu0 0.0
    %298 = vmatpush2.msra.mxu0 0.0
    %299 = vmatprep.subr.mxu0 0.0
    %300 = vmatpush2.msra.mxu0 0.0
    %301 = vmatprep.subr.mxu0 0.0
    %302 = vmatpush2.msra.mxu0 0.0
    %303 = vmatprep.subr.mxu0 0.0
    %304 = vmatpush2.msra.mxu0 0.0
    %305 = vmatprep.subr.mxu0 0.0
    %306 = vmatpush2.msra.mxu0 0.0
    %307 = vmatprep.subr.mxu0 0.0
    %308 = vmatpush2.msra.mxu0 0.0
    %309 = vmatprep.subr.mxu0 0.0
    %310 = vmatpush2.msra.mxu0 0.0
    %311 = vmatprep.subr.mxu0 0.0
    %312 = vmatpush2.msra.mxu0 0.0
    %313 = vmatprep.subr.mxu0 0.0
    %314 = vmatpush2.msra.mxu0 0.0
    %315 = vmatprep.subr.mxu0 0.0
    %316 = vmatpush2.msra.mxu0 0.0
    %317 = vmatprep.subr.mxu0 0.0
    %318 = vmatpush2.msra.mxu0 0.0
    %319 = vmatprep.subr.mxu0 0.0
    %320 = vmatpush2.msra.mxu0 0.0
    %321 = vmatprep.subr.mxu0 0.0
    %322 = vmatpush2.msra.mxu0 0.0
    %323 = vmatprep.subr.mxu0 0.0
    %324 = vmatpush2.msra.mxu0 0.0
    %325 = vmatprep.subr.mxu0 0.0
    %326 = vmatpush2.msra.mxu0 0.0
    %327 = vmatprep.mubr.f32.mxu0 0.0
    %328 = vmatmul.mubr.f32.gmra.mxu0 %v85
    %v329 = vpop.f32.mrf.mxu0
    %v330 = vadd.f32 0.0, %v329
    %v331 = vpop.f32.mrf.mxu0
    %332 = vdwg.mxu0
    %334 = vrot.lane.b32.xlu0 %v262, 32
    %v335 = vpop.permute.xlu0 %334
    %v336 = vsel %vm83, %v335, 0
    %338 = vmatprep.subr.mxu0 0.0
    %339 = vmatpush1.msra.mxu0 0.0
    %340 = vmatprep.subr.mxu0 0.0
    %341 = vmatpush1.msra.mxu0 0.0
    %342 = vmatprep.subr.mxu0 0.0
    %343 = vmatpush1.msra.mxu0 0.0
    %344 = vmatprep.subr.mxu0 0.0
    %345 = vmatpush1.msra.mxu0 0.0
    %346 = vmatprep.subr.mxu0 0.0
    %347 = vmatpush1.msra.mxu0 0.0
    %348 = vmatprep.subr.mxu0 0.0
    %349 = vmatpush1.msra.mxu0 0.0
    %350 = vmatprep.subr.mxu0 0.0
    %351 = vmatpush1.msra.mxu0 0.0
    %352 = vmatprep.subr.mxu0 0.0
    %353 = vmatpush1.msra.mxu0 0.0
    %354 = vmatprep.subr.mxu0 0.0
    %355 = vmatpush1.msra.mxu0 0.0
    %356 = vmatprep.subr.mxu0 0.0
    %357 = vmatpush1.msra.mxu0 0.0
    %358 = vmatprep.subr.mxu0 0.0
    %359 = vmatpush1.msra.mxu0 0.0
    %360 = vmatprep.subr.mxu0 0.0
    %361 = vmatpush1.msra.mxu0 0.0
    %362 = vmatprep.subr.mxu0 0.0
    %363 = vmatpush1.msra.mxu0 %v71
    %364 = vmatprep.subr.mxu0 0.0
    %365 = vmatpush1.msra.mxu0 %v70
    %366 = vmatprep.subr.mxu0 0.0
    %367 = vmatpush1.msra.mxu0 %v69
    %368 = vmatprep.subr.mxu0 0.0
    %369 = vmatpush1.msra.mxu0 %v68
    %370 = vmatprep.subr.mxu0 0.0
    %371 = vmatpush2.msra.mxu0 0.0
    %372 = vmatprep.subr.mxu0 0.0
    %373 = vmatpush2.msra.mxu0 0.0
    %374 = vmatprep.subr.mxu0 0.0
    %375 = vmatpush2.msra.mxu0 0.0
    %376 = vmatprep.subr.mxu0 0.0
    %377 = vmatpush2.msra.mxu0 0.0
    %378 = vmatprep.subr.mxu0 0.0
    %379 = vmatpush2.msra.mxu0 0.0
    %380 = vmatprep.subr.mxu0 0.0
    %381 = vmatpush2.msra.mxu0 0.0
    %382 = vmatprep.subr.mxu0 0.0
    %383 = vmatpush2.msra.mxu0 0.0
    %384 = vmatprep.subr.mxu0 0.0
    %385 = vmatpush2.msra.mxu0 0.0
    %386 = vmatprep.subr.mxu0 0.0
    %387 = vmatpush2.msra.mxu0 0.0
    %388 = vmatprep.subr.mxu0 0.0
    %389 = vmatpush2.msra.mxu0 0.0
    %390 = vmatprep.subr.mxu0 0.0
    %391 = vmatpush2.msra.mxu0 0.0
    %392 = vmatprep.subr.mxu0 0.0
    %393 = vmatpush2.msra.mxu0 0.0
    %394 = vmatprep.subr.mxu0 0.0
    %395 = vmatpush2.msra.mxu0 0.0
    %396 = vmatprep.subr.mxu0 0.0
    %397 = vmatpush2.msra.mxu0 0.0
    %398 = vmatprep.subr.mxu0 0.0
    %399 = vmatpush2.msra.mxu0 0.0
    %400 = vmatprep.subr.mxu0 0.0
    %401 = vmatpush2.msra.mxu0 0.0
    %402 = vmatprep.mubr.f32.mxu0 0.0
    %403 = vmatmul.mubr.f32.gmra.mxu0 %v336
    %v404 = vpop.f32.mrf.mxu0
    %v405 = vadd.f32 %v330, %v404
    %v406 = vpop.f32.mrf.mxu0
    %407 = vdwg.mxu0
    %v409 = vlaneseq
    %v410 = vshrl.u32 %v409, 7
    %v411 = vsub.s32 0, %v410
    %v412 = vrot.slane %v81, %v411
    %v414 = vadd.f32 %v405, %v412
    %v415 = vxor.u32 %v414, 2147483648
    %v416 = vmul.f32 %v415, 1.442695
    %v417 = vpow.pop %v416
    %v418 = vadd.f32 %v417, 1.0
    %v419 = vrcp.pop %v418
    %v420 = vmul.f32 1.0, %v419
    %v421 = vmul.f32 %v420, 2.0
    %v422 = vsub.f32 %v421, 1.0
    %v423 = vmul.f32 %v420, 0.0
    %425 = vrot.lane.b32.xlu0 %v422, 64
    %v426 = vpop.permute.xlu0 %425
    %v428 = vmul.f32 %v420, %v426
    %430 = vrot.lane.b32.xlu0 %v428, 32
    %v431 = vpop.permute.xlu0 %430
    %v433 = vadd.f32 %v423, %v431
    %v434 = vtanh.pop %v433
    %436 = vrot.lane.b32.xlu0 %v434, 64
    %v437 = vpop.permute.xlu0 %436
    %v439 = vmul.f32 %v420, %v437
    %440 = vmatprep.subr.mxu0 0.0
    %441 = vmatpush1.msra.mxu0 0.0
    %442 = vmatprep.subr.mxu0 0.0
    %443 = vmatpush1.msra.mxu0 0.0
    %444 = vmatprep.subr.mxu0 0.0
    %445 = vmatpush1.msra.mxu0 0.0
    %446 = vmatprep.subr.mxu0 0.0
    %447 = vmatpush1.msra.mxu0 0.0
    %448 = vmatprep.subr.mxu0 0.0
    %449 = vmatpush1.msra.mxu0 0.0
    %450 = vmatprep.subr.mxu0 0.0
    %451 = vmatpush1.msra.mxu0 0.0
    %452 = vmatprep.subr.mxu0 0.0
    %453 = vmatpush1.msra.mxu0 0.0
    %454 = vmatprep.subr.mxu0 0.0
    %455 = vmatpush1.msra.mxu0 0.0
    %456 = vmatprep.subr.mxu0 0.0
    %457 = vmatpush1.msra.mxu0 0.0
    %458 = vmatprep.subr.mxu0 0.0
    %459 = vmatpush1.msra.mxu0 0.0
    %460 = vmatprep.subr.mxu0 0.0
    %461 = vmatpush1.msra.mxu0 0.0
    %462 = vmatprep.subr.mxu0 0.0
    %463 = vmatpush1.msra.mxu0 0.0
    %464 = vmatprep.subr.mxu0 0.0
    %465 = vmatpush1.msra.mxu0 %v61
    %466 = vmatprep.subr.mxu0 0.0
    %467 = vmatpush1.msra.mxu0 %v60
    %468 = vmatprep.subr.mxu0 0.0
    %469 = vmatpush1.msra.mxu0 %v59
    %470 = vmatprep.subr.mxu0 0.0
    %471 = vmatpush1.msra.mxu0 %v58
    %472 = vmatprep.subr.mxu0 0.0
    %473 = vmatpush2.msra.mxu0 0.0
    %474 = vmatprep.subr.mxu0 0.0
    %475 = vmatpush2.msra.mxu0 0.0
    %476 = vmatprep.subr.mxu0 0.0
    %477 = vmatpush2.msra.mxu0 0.0
    %478 = vmatprep.subr.mxu0 0.0
    %479 = vmatpush2.msra.mxu0 0.0
    %480 = vmatprep.subr.mxu0 0.0
    %481 = vmatpush2.msra.mxu0 0.0
    %482 = vmatprep.subr.mxu0 0.0
    %483 = vmatpush2.msra.mxu0 0.0
    %484 = vmatprep.subr.mxu0 0.0
    %485 = vmatpush2.msra.mxu0 0.0
    %486 = vmatprep.subr.mxu0 0.0
    %487 = vmatpush2.msra.mxu0 0.0
    %488 = vmatprep.subr.mxu0 0.0
    %489 = vmatpush2.msra.mxu0 0.0
    %490 = vmatprep.subr.mxu0 0.0
    %491 = vmatpush2.msra.mxu0 0.0
    %492 = vmatprep.subr.mxu0 0.0
    %493 = vmatpush2.msra.mxu0 0.0
    %494 = vmatprep.subr.mxu0 0.0
    %495 = vmatpush2.msra.mxu0 0.0
    %496 = vmatprep.subr.mxu0 0.0
    %497 = vmatpush2.msra.mxu0 0.0
    %498 = vmatprep.subr.mxu0 0.0
    %499 = vmatpush2.msra.mxu0 0.0
    %500 = vmatprep.subr.mxu0 0.0
    %501 = vmatpush2.msra.mxu0 0.0
    %502 = vmatprep.subr.mxu0 0.0
    %503 = vmatpush2.msra.mxu0 0.0
    %504 = vmatprep.mubr.f32.mxu0 0.0
    %505 = vmatmul.mubr.f32.gmra.mxu0 %v336
    %v506 = vpop.f32.mrf.mxu0
    %v507 = vadd.f32 0.0, %v506
    %v508 = vpop.f32.mrf.mxu0
    %509 = vdwg.mxu0
    %510 = vrot.lane.b32.xlu0 %v82, 112
    %v511 = vpop.permute.xlu0 %510
    %v512 = vsel %vm157, %v511, 0
    %514 = vmatprep.subr.mxu0 0.0
    %515 = vmatpush1.msra.mxu0 0.0
    %516 = vmatprep.subr.mxu0 0.0
    %517 = vmatpush1.msra.mxu0 0.0
    %518 = vmatprep.subr.mxu0 0.0
    %519 = vmatpush1.msra.mxu0 0.0
    %520 = vmatprep.subr.mxu0 0.0
    %521 = vmatpush1.msra.mxu0 0.0
    %522 = vmatprep.subr.mxu0 0.0
    %523 = vmatpush1.msra.mxu0 0.0
    %524 = vmatprep.subr.mxu0 0.0
    %525 = vmatpush1.msra.mxu0 0.0
    %526 = vmatprep.subr.mxu0 0.0
    %527 = vmatpush1.msra.mxu0 0.0
    %528 = vmatprep.subr.mxu0 0.0
    %529 = vmatpush1.msra.mxu0 0.0
    %530 = vmatprep.subr.mxu0 0.0
    %531 = vmatpush1.msra.mxu0 0.0
    %532 = vmatprep.subr.mxu0 0.0
    %533 = vmatpush1.msra.mxu0 0.0
    %534 = vmatprep.subr.mxu0 0.0
    %535 = vmatpush1.msra.mxu0 0.0
    %536 = vmatprep.subr.mxu0 0.0
    %537 = vmatpush1.msra.mxu0 0.0
    %538 = vmatprep.subr.mxu0 0.0
    %539 = vmatpush1.msra.mxu0 0.0
    %540 = vmatprep.subr.mxu0 0.0
    %541 = vmatpush1.msra.mxu0 0.0
    %542 = vmatprep.subr.mxu0 0.0
    %543 = vmatpush1.msra.mxu0 %v53
    %544 = vmatprep.subr.mxu0 0.0
    %545 = vmatpush1.msra.mxu0 %v52
    %546 = vmatprep.subr.mxu0 0.0
    %547 = vmatpush2.msra.mxu0 0.0
    %548 = vmatprep.subr.mxu0 0.0
    %549 = vmatpush2.msra.mxu0 0.0
    %550 = vmatprep.subr.mxu0 0.0
    %551 = vmatpush2.msra.mxu0 0.0
    %552 = vmatprep.subr.mxu0 0.0
    %553 = vmatpush2.msra.mxu0 0.0
    %554 = vmatprep.subr.mxu0 0.0
    %555 = vmatpush2.msra.mxu0 0.0
    %556 = vmatprep.subr.mxu0 0.0
    %557 = vmatpush2.msra.mxu0 0.0
    %558 = vmatprep.subr.mxu0 0.0
    %559 = vmatpush2.msra.mxu0 0.0
    %560 = vmatprep.subr.mxu0 0.0
    %561 = vmatpush2.msra.mxu0 0.0
    %562 = vmatprep.subr.mxu0 0.0
    %563 = vmatpush2.msra.mxu0 0.0
    %564 = vmatprep.subr.mxu0 0.0
    %565 = vmatpush2.msra.mxu0 0.0
    %566 = vmatprep.subr.mxu0 0.0
    %567 = vmatpush2.msra.mxu0 0.0
    %568 = vmatprep.subr.mxu0 0.0
    %569 = vmatpush2.msra.mxu0 0.0
    %570 = vmatprep.subr.mxu0 0.0
    %571 = vmatpush2.msra.mxu0 0.0
    %572 = vmatprep.subr.mxu0 0.0
    %573 = vmatpush2.msra.mxu0 0.0
    %574 = vmatprep.subr.mxu0 0.0
    %575 = vmatpush2.msra.mxu0 0.0
    %576 = vmatprep.subr.mxu0 0.0
    %577 = vmatpush2.msra.mxu0 0.0
    %578 = vmatprep.mubr.f32.mxu0 0.0
    %579 = vmatmul.mubr.f32.gmra.mxu0 %v512
    %v580 = vpop.f32.mrf.mxu0
    %v581 = vadd.f32 %v507, %v580
    %v582 = vpop.f32.mrf.mxu0
    %583 = vdwg.mxu0
    %v584 = vadd.f32 %v581, %v235
    %v585 = vxor.u32 %v584, 2147483648
    %v586 = vmul.f32 %v585, 1.442695
    %v587 = vpow.pop %v586
    %v588 = vadd.f32 %v587, 1.0
    %v589 = vrcp.pop %v588
    %v590 = vmul.f32 1.0, %v589
    %v591 = vmul.f32 %v590, 2.0
    %v592 = vsub.f32 %v591, 1.0
    %v593 = vmul.f32 %v590, %v256
    %595 = vrot.lane.b32.xlu0 %v592, 64
    %v596 = vpop.permute.xlu0 %595
    %v598 = vmul.f32 %v590, %v596
    %600 = vrot.lane.b32.xlu0 %v598, 32
    %v601 = vpop.permute.xlu0 %600
    %v603 = vadd.f32 %v593, %v601
    %v604 = vtanh.pop %v603
    %606 = vrot.lane.b32.xlu0 %v604, 64
    %v607 = vpop.permute.xlu0 %606
    %v609 = vmul.f32 %v590, %v607
    %611 = vrot.lane.b32.xlu0 %v439, 32
    %v612 = vpop.permute.xlu0 %611
    %v613 = vsel %vm83, %v612, 0
    %615 = vmatprep.subr.mxu0 0.0
    %616 = vmatpush1.msra.mxu0 0.0
    %617 = vmatprep.subr.mxu0 0.0
    %618 = vmatpush1.msra.mxu0 0.0
    %619 = vmatprep.subr.mxu0 0.0
    %620 = vmatpush1.msra.mxu0 0.0
    %621 = vmatprep.subr.mxu0 0.0
    %622 = vmatpush1.msra.mxu0 0.0
    %623 = vmatprep.subr.mxu0 0.0
    %624 = vmatpush1.msra.mxu0 0.0
    %625 = vmatprep.subr.mxu0 0.0
    %626 = vmatpush1.msra.mxu0 0.0
    %627 = vmatprep.subr.mxu0 0.0
    %628 = vmatpush1.msra.mxu0 0.0
    %629 = vmatprep.subr.mxu0 0.0
    %630 = vmatpush1.msra.mxu0 0.0
    %631 = vmatprep.subr.mxu0 0.0
    %632 = vmatpush1.msra.mxu0 0.0
    %633 = vmatprep.subr.mxu0 0.0
    %634 = vmatpush1.msra.mxu0 0.0
    %635 = vmatprep.subr.mxu0 0.0
    %636 = vmatpush1.msra.mxu0 0.0
    %637 = vmatprep.subr.mxu0 0.0
    %638 = vmatpush1.msra.mxu0 0.0
    %639 = vmatprep.subr.mxu0 0.0
    %640 = vmatpush1.msra.mxu0 %v79
    %641 = vmatprep.subr.mxu0 0.0
    %642 = vmatpush1.msra.mxu0 %v78
    %643 = vmatprep.subr.mxu0 0.0
    %644 = vmatpush1.msra.mxu0 %v77
    %645 = vmatprep.subr.mxu0 0.0
    %646 = vmatpush1.msra.mxu0 %v76
    %647 = vmatprep.subr.mxu0 0.0
    %648 = vmatpush2.msra.mxu0 0.0
    %649 = vmatprep.subr.mxu0 0.0
    %650 = vmatpush2.msra.mxu0 0.0
    %651 = vmatprep.subr.mxu0 0.0
    %652 = vmatpush2.msra.mxu0 0.0
    %653 = vmatprep.subr.mxu0 0.0
    %654 = vmatpush2.msra.mxu0 0.0
    %655 = vmatprep.subr.mxu0 0.0
    %656 = vmatpush2.msra.mxu0 0.0
    %657 = vmatprep.subr.mxu0 0.0
    %658 = vmatpush2.msra.mxu0 0.0
    %659 = vmatprep.subr.mxu0 0.0
    %660 = vmatpush2.msra.mxu0 0.0
    %661 = vmatprep.subr.mxu0 0.0
    %662 = vmatpush2.msra.mxu0 0.0
    %663 = vmatprep.subr.mxu0 0.0
    %664 = vmatpush2.msra.mxu0 0.0
    %665 = vmatprep.subr.mxu0 0.0
    %666 = vmatpush2.msra.mxu0 0.0
    %667 = vmatprep.subr.mxu0 0.0
    %668 = vmatpush2.msra.mxu0 0.0
    %669 = vmatprep.subr.mxu0 0.0
    %670 = vmatpush2.msra.mxu0 0.0
    %671 = vmatprep.subr.mxu0 0.0
    %672 = vmatpush2.msra.mxu0 0.0
    %673 = vmatprep.subr.mxu0 0.0
    %674 = vmatpush2.msra.mxu0 0.0
    %675 = vmatprep.subr.mxu0 0.0
    %676 = vmatpush2.msra.mxu0 0.0
    %677 = vmatprep.subr.mxu0 0.0
    %678 = vmatpush2.msra.mxu0 0.0
    %679 = vmatprep.mubr.f32.mxu0 0.0
    %680 = vmatmul.mubr.f32.gmra.mxu0 %v613
    %v681 = vpop.f32.mrf.mxu0
    %v682 = vadd.f32 0.0, %v681
    %v683 = vpop.f32.mrf.mxu0
    %684 = vdwg.mxu0
    %686 = vrot.lane.b32.xlu0 %v609, 32
    %v687 = vpop.permute.xlu0 %686
    %v688 = vsel %vm83, %v687, 0
    %690 = vmatprep.subr.mxu0 0.0
    %691 = vmatpush1.msra.mxu0 0.0
    %692 = vmatprep.subr.mxu0 0.0
    %693 = vmatpush1.msra.mxu0 0.0
    %694 = vmatprep.subr.mxu0 0.0
    %695 = vmatpush1.msra.mxu0 0.0
    %696 = vmatprep.subr.mxu0 0.0
    %697 = vmatpush1.msra.mxu0 0.0
    %698 = vmatprep.subr.mxu0 0.0
    %699 = vmatpush1.msra.mxu0 0.0
    %700 = vmatprep.subr.mxu0 0.0
    %701 = vmatpush1.msra.mxu0 0.0
    %702 = vmatprep.subr.mxu0 0.0
    %703 = vmatpush1.msra.mxu0 0.0
    %704 = vmatprep.subr.mxu0 0.0
    %705 = vmatpush1.msra.mxu0 0.0
    %706 = vmatprep.subr.mxu0 0.0
    %707 = vmatpush1.msra.mxu0 0.0
    %708 = vmatprep.subr.mxu0 0.0
    %709 = vmatpush1.msra.mxu0 0.0
    %710 = vmatprep.subr.mxu0 0.0
    %711 = vmatpush1.msra.mxu0 0.0
    %712 = vmatprep.subr.mxu0 0.0
    %713 = vmatpush1.msra.mxu0 0.0
    %714 = vmatprep.subr.mxu0 0.0
    %715 = vmatpush1.msra.mxu0 %v71
    %716 = vmatprep.subr.mxu0 0.0
    %717 = vmatpush1.msra.mxu0 %v70
    %718 = vmatprep.subr.mxu0 0.0
    %719 = vmatpush1.msra.mxu0 %v69
    %720 = vmatprep.subr.mxu0 0.0
    %721 = vmatpush1.msra.mxu0 %v68
    %722 = vmatprep.subr.mxu0 0.0
    %723 = vmatpush2.msra.mxu0 0.0
    %724 = vmatprep.subr.mxu0 0.0
    %725 = vmatpush2.msra.mxu0 0.0
    %726 = vmatprep.subr.mxu0 0.0
    %727 = vmatpush2.msra.mxu0 0.0
    %728 = vmatprep.subr.mxu0 0.0
    %729 = vmatpush2.msra.mxu0 0.0
    %730 = vmatprep.subr.mxu0 0.0
    %731 = vmatpush2.msra.mxu0 0.0
    %732 = vmatprep.subr.mxu0 0.0
    %733 = vmatpush2.msra.mxu0 0.0
    %734 = vmatprep.subr.mxu0 0.0
    %735 = vmatpush2.msra.mxu0 0.0
    %736 = vmatprep.subr.mxu0 0.0
    %737 = vmatpush2.msra.mxu0 0.0
    %738 = vmatprep.subr.mxu0 0.0
    %739 = vmatpush2.msra.mxu0 0.0
    %740 = vmatprep.subr.mxu0 0.0
    %741 = vmatpush2.msra.mxu0 0.0
    %742 = vmatprep.subr.mxu0 0.0
    %743 = vmatpush2.msra.mxu0 0.0
    %744 = vmatprep.subr.mxu0 0.0
    %745 = vmatpush2.msra.mxu0 0.0
    %746 = vmatprep.subr.mxu0 0.0
    %747 = vmatpush2.msra.mxu0 0.0
    %748 = vmatprep.subr.mxu0 0.0
    %749 = vmatpush2.msra.mxu0 0.0
    %750 = vmatprep.subr.mxu0 0.0
    %751 = vmatpush2.msra.mxu0 0.0
    %752 = vmatprep.subr.mxu0 0.0
    %753 = vmatpush2.msra.mxu0 0.0
    %754 = vmatprep.mubr.f32.mxu0 0.0
    %755 = vmatmul.mubr.f32.gmra.mxu0 %v688
    %v756 = vpop.f32.mrf.mxu0
    %v757 = vadd.f32 %v682, %v756
    %v758 = vpop.f32.mrf.mxu0
    %759 = vdwg.mxu0
    %v760 = vadd.f32 %v757, %v412
    %v761 = vxor.u32 %v760, 2147483648
    %v762 = vmul.f32 %v761, 1.442695
    %v763 = vpow.pop %v762
    %v764 = vadd.f32 %v763, 1.0
    %v765 = vrcp.pop %v764
    %v766 = vmul.f32 1.0, %v765
    %v767 = vmul.f32 %v766, 2.0
    %v768 = vsub.f32 %v767, 1.0
    %v769 = vmul.f32 %v766, %v433
    %771 = vrot.lane.b32.xlu0 %v768, 64
    %v772 = vpop.permute.xlu0 %771
    %v774 = vmul.f32 %v766, %v772
    %776 = vrot.lane.b32.xlu0 %v774, 32
    %v777 = vpop.permute.xlu0 %776
    %v779 = vadd.f32 %v769, %v777
    %v780 = vtanh.pop %v779
    %782 = vrot.lane.b32.xlu0 %v780, 64
    %v783 = vpop.permute.xlu0 %782
    %v785 = vmul.f32 %v766, %v783
    %786 = vmatprep.subr.mxu0 0.0
    %787 = vmatpush1.msra.mxu0 0.0
    %788 = vmatprep.subr.mxu0 0.0
    %789 = vmatpush1.msra.mxu0 0.0
    %790 = vmatprep.subr.mxu0 0.0
    %791 = vmatpush1.msra.mxu0 0.0
    %792 = vmatprep.subr.mxu0 0.0
    %793 = vmatpush1.msra.mxu0 0.0
    %794 = vmatprep.subr.mxu0 0.0
    %795 = vmatpush1.msra.mxu0 0.0
    %796 = vmatprep.subr.mxu0 0.0
    %797 = vmatpush1.msra.mxu0 0.0
    %798 = vmatprep.subr.mxu0 0.0
    %799 = vmatpush1.msra.mxu0 0.0
    %800 = vmatprep.subr.mxu0 0.0
    %801 = vmatpush1.msra.mxu0 0.0
    %802 = vmatprep.subr.mxu0 0.0
    %803 = vmatpush1.msra.mxu0 0.0
    %804 = vmatprep.subr.mxu0 0.0
    %805 = vmatpush1.msra.mxu0 0.0
    %806 = vmatprep.subr.mxu0 0.0
    %807 = vmatpush1.msra.mxu0 0.0
    %808 = vmatprep.subr.mxu0 0.0
    %809 = vmatpush1.msra.mxu0 0.0
    %810 = vmatprep.subr.mxu0 0.0
    %811 = vmatpush1.msra.mxu0 %v61
    %812 = vmatprep.subr.mxu0 0.0
    %813 = vmatpush1.msra.mxu0 %v60
    %814 = vmatprep.subr.mxu0 0.0
    %815 = vmatpush1.msra.mxu0 %v59
    %816 = vmatprep.subr.mxu0 0.0
    %817 = vmatpush1.msra.mxu0 %v58
    %818 = vmatprep.subr.mxu0 0.0
    %819 = vmatpush2.msra.mxu0 0.0
    %820 = vmatprep.subr.mxu0 0.0
    %821 = vmatpush2.msra.mxu0 0.0
    %822 = vmatprep.subr.mxu0 0.0
    %823 = vmatpush2.msra.mxu0 0.0
    %824 = vmatprep.subr.mxu0 0.0
    %825 = vmatpush2.msra.mxu0 0.0
    %826 = vmatprep.subr.mxu0 0.0
    %827 = vmatpush2.msra.mxu0 0.0
    %828 = vmatprep.subr.mxu0 0.0
    %829 = vmatpush2.msra.mxu0 0.0
    %830 = vmatprep.subr.mxu0 0.0
    %831 = vmatpush2.msra.mxu0 0.0
    %832 = vmatprep.subr.mxu0 0.0
    %833 = vmatpush2.msra.mxu0 0.0
    %834 = vmatprep.subr.mxu0 0.0
    %835 = vmatpush2.msra.mxu0 0.0
    %836 = vmatprep.subr.mxu0 0.0
    %837 = vmatpush2.msra.mxu0 0.0
    %838 = vmatprep.subr.mxu0 0.0
    %839 = vmatpush2.msra.mxu0 0.0
    %840 = vmatprep.subr.mxu0 0.0
    %841 = vmatpush2.msra.mxu0 0.0
    %842 = vmatprep.subr.mxu0 0.0
    %843 = vmatpush2.msra.mxu0 0.0
    %844 = vmatprep.subr.mxu0 0.0
    %845 = vmatpush2.msra.mxu0 0.0
    %846 = vmatprep.subr.mxu0 0.0
    %847 = vmatpush2.msra.mxu0 0.0
    %848 = vmatprep.subr.mxu0 0.0
    %849 = vmatpush2.msra.mxu0 0.0
    %850 = vmatprep.mubr.f32.mxu0 0.0
    %851 = vmatmul.mubr.f32.gmra.mxu0 %v688
    %v852 = vpop.f32.mrf.mxu0
    %v853 = vadd.f32 0.0, %v852
    %v854 = vpop.f32.mrf.mxu0
    %855 = vdwg.mxu0
    %856 = vrot.lane.b32.xlu0 %v82, 96
    %v857 = vpop.permute.xlu0 %856
    %v858 = vsel %vm157, %v857, 0
    %860 = vmatprep.subr.mxu0 0.0
    %861 = vmatpush1.msra.mxu0 0.0
    %862 = vmatprep.subr.mxu0 0.0
    %863 = vmatpush1.msra.mxu0 0.0
    %864 = vmatprep.subr.mxu0 0.0
    %865 = vmatpush1.msra.mxu0 0.0
    %866 = vmatprep.subr.mxu0 0.0
    %867 = vmatpush1.msra.mxu0 0.0
    %868 = vmatprep.subr.mxu0 0.0
    %869 = vmatpush1.msra.mxu0 0.0
    %870 = vmatprep.subr.mxu0 0.0
    %871 = vmatpush1.msra.mxu0 0.0
    %872 = vmatprep.subr.mxu0 0.0
    %873 = vmatpush1.msra.mxu0 0.0
    %874 = vmatprep.subr.mxu0 0.0
    %875 = vmatpush1.msra.mxu0 0.0
    %876 = vmatprep.subr.mxu0 0.0
    %877 = vmatpush1.msra.mxu0 0.0
    %878 = vmatprep.subr.mxu0 0.0
    %879 = vmatpush1.msra.mxu0 0.0
    %880 = vmatprep.subr.mxu0 0.0
    %881 = vmatpush1.msra.mxu0 0.0
    %882 = vmatprep.subr.mxu0 0.0
    %883 = vmatpush1.msra.mxu0 0.0
    %884 = vmatprep.subr.mxu0 0.0
    %885 = vmatpush1.msra.mxu0 0.0
    %886 = vmatprep.subr.mxu0 0.0
    %887 = vmatpush1.msra.mxu0 0.0
    %888 = vmatprep.subr.mxu0 0.0
    %889 = vmatpush1.msra.mxu0 %v53
    %890 = vmatprep.subr.mxu0 0.0
    %891 = vmatpush1.msra.mxu0 %v52
    %892 = vmatprep.subr.mxu0 0.0
    %893 = vmatpush2.msra.mxu0 0.0
    %894 = vmatprep.subr.mxu0 0.0
    %895 = vmatpush2.msra.mxu0 0.0
    %896 = vmatprep.subr.mxu0 0.0
    %897 = vmatpush2.msra.mxu0 0.0
    %898 = vmatprep.subr.mxu0 0.0
    %899 = vmatpush2.msra.mxu0 0.0
    %900 = vmatprep.subr.mxu0 0.0
    %901 = vmatpush2.msra.mxu0 0.0
    %902 = vmatprep.subr.mxu0 0.0
    %903 = vmatpush2.msra.mxu0 0.0
    %904 = vmatprep.subr.mxu0 0.0
    %905 = vmatpush2.msra.mxu0 0.0
    %906 = vmatprep.subr.mxu0 0.0
    %907 = vmatpush2.msra.mxu0 0.0
    %908 = vmatprep.subr.mxu0 0.0
    %909 = vmatpush2.msra.mxu0 0.0
    %910 = vmatprep.subr.mxu0 0.0
    %911 = vmatpush2.msra.mxu0 0.0
    %912 = vmatprep.subr.mxu0 0.0
    %913 = vmatpush2.msra.mxu0 0.0
    %914 = vmatprep.subr.mxu0 0.0
    %915 = vmatpush2.msra.mxu0 0.0
    %916 = vmatprep.subr.mxu0 0.0
    %917 = vmatpush2.msra.mxu0 0.0
    %918 = vmatprep.subr.mxu0 0.0
    %919 = vmatpush2.msra.mxu0 0.0
    %920 = vmatprep.subr.mxu0 0.0
    %921 = vmatpush2.msra.mxu0 0.0
    %922 = vmatprep.subr.mxu0 0.0
    %923 = vmatpush2.msra.mxu0 0.0
    %924 = vmatprep.mubr.f32.mxu0 0.0
    %925 = vmatmul.mubr.f32.gmra.mxu0 %v858
    %v926 = vpop.f32.mrf.mxu0
    %v927 = vadd.f32 %v853, %v926
    %v928 = vpop.f32.mrf.mxu0
    %929 = vdwg.mxu0
    %v930 = vadd.f32 %v927, %v235
    %v931 = vxor.u32 %v930, 2147483648
    %v932 = vmul.f32 %v931, 1.442695
    %v933 = vpow.pop %v932
    %v934 = vadd.f32 %v933, 1.0
    %v935 = vrcp.pop %v934
    %v936 = vmul.f32 1.0, %v935
    %v937 = vmul.f32 %v936, 2.0
    %v938 = vsub.f32 %v937, 1.0
    %v939 = vmul.f32 %v936, %v603
    %941 = vrot.lane.b32.xlu0 %v938, 64
    %v942 = vpop.permute.xlu0 %941
    %v944 = vmul.f32 %v936, %v942
    %946 = vrot.lane.b32.xlu0 %v944, 32
    %v947 = vpop.permute.xlu0 %946
    %v949 = vadd.f32 %v939, %v947
    %v950 = vtanh.pop %v949
    %952 = vrot.lane.b32.xlu0 %v950, 64
    %v953 = vpop.permute.xlu0 %952
    %v955 = vmul.f32 %v936, %v953
    %957 = vrot.lane.b32.xlu0 %v785, 32
    %v958 = vpop.permute.xlu0 %957
    %v959 = vsel %vm83, %v958, 0
    %961 = vmatprep.subr.mxu0 0.0
    %962 = vmatpush1.msra.mxu0 0.0
    %963 = vmatprep.subr.mxu0 0.0
    %964 = vmatpush1.msra.mxu0 0.0
    %965 = vmatprep.subr.mxu0 0.0
    %966 = vmatpush1.msra.mxu0 0.0
    %967 = vmatprep.subr.mxu0 0.0
    %968 = vmatpush1.msra.mxu0 0.0
    %969 = vmatprep.subr.mxu0 0.0
    %970 = vmatpush1.msra.mxu0 0.0
    %971 = vmatprep.subr.mxu0 0.0
    %972 = vmatpush1.msra.mxu0 0.0
    %973 = vmatprep.subr.mxu0 0.0
    %974 = vmatpush1.msra.mxu0 0.0
    %975 = vmatprep.subr.mxu0 0.0
    %976 = vmatpush1.msra.mxu0 0.0
    %977 = vmatprep.subr.mxu0 0.0
    %978 = vmatpush1.msra.mxu0 0.0
    %979 = vmatprep.subr.mxu0 0.0
    %980 = vmatpush1.msra.mxu0 0.0
    %981 = vmatprep.subr.mxu0 0.0
    %982 = vmatpush1.msra.mxu0 0.0
    %983 = vmatprep.subr.mxu0 0.0
    %984 = vmatpush1.msra.mxu0 0.0
    %985 = vmatprep.subr.mxu0 0.0
    %986 = vmatpush1.msra.mxu0 %v79
    %987 = vmatprep.subr.mxu0 0.0
    %988 = vmatpush1.msra.mxu0 %v78
    %989 = vmatprep.subr.mxu0 0.0
    %990 = vmatpush1.msra.mxu0 %v77
    %991 = vmatprep.subr.mxu0 0.0
    %992 = vmatpush1.msra.mxu0 %v76
    %993 = vmatprep.subr.mxu0 0.0
    %994 = vmatpush2.msra.mxu0 0.0
    %995 = vmatprep.subr.mxu0 0.0
    %996 = vmatpush2.msra.mxu0 0.0
    %997 = vmatprep.subr.mxu0 0.0
    %998 = vmatpush2.msra.mxu0 0.0
    %999 = vmatprep.subr.mxu0 0.0
    %1000 = vmatpush2.msra.mxu0 0.0
    %1001 = vmatprep.subr.mxu0 0.0
    %1002 = vmatpush2.msra.mxu0 0.0
    %1003 = vmatprep.subr.mxu0 0.0
    %1004 = vmatpush2.msra.mxu0 0.0
    %1005 = vmatprep.subr.mxu0 0.0
    %1006 = vmatpush2.msra.mxu0 0.0
    %1007 = vmatprep.subr.mxu0 0.0
    %1008 = vmatpush2.msra.mxu0 0.0
    %1009 = vmatprep.subr.mxu0 0.0
    %1010 = vmatpush2.msra.mxu0 0.0
    %1011 = vmatprep.subr.mxu0 0.0
    %1012 = vmatpush2.msra.mxu0 0.0
    %1013 = vmatprep.subr.mxu0 0.0
    %1014 = vmatpush2.msra.mxu0 0.0
    %1015 = vmatprep.subr.mxu0 0.0
    %1016 = vmatpush2.msra.mxu0 0.0
    %1017 = vmatprep.subr.mxu0 0.0
    %1018 = vmatpush2.msra.mxu0 0.0
    %1019 = vmatprep.subr.mxu0 0.0
    %1020 = vmatpush2.msra.mxu0 0.0
    %1021 = vmatprep.subr.mxu0 0.0
    %1022 = vmatpush2.msra.mxu0 0.0
    %1023 = vmatprep.subr.mxu0 0.0
    %1024 = vmatpush2.msra.mxu0 0.0
    %1025 = vmatprep.mubr.f32.mxu0 0.0
    %1026 = vmatmul.mubr.f32.gmra.mxu0 %v959
    %v1027 = vpop.f32.mrf.mxu0
    %v1028 = vadd.f32 0.0, %v1027
    %v1029 = vpop.f32.mrf.mxu0
    %1030 = vdwg.mxu0
    %1032 = vrot.lane.b32.xlu0 %v955, 32
    %v1033 = vpop.permute.xlu0 %1032
    %v1034 = vsel %vm83, %v1033, 0
    %1036 = vmatprep.subr.mxu0 0.0
    %1037 = vmatpush1.msra.mxu0 0.0
    %1038 = vmatprep.subr.mxu0 0.0
    %1039 = vmatpush1.msra.mxu0 0.0
    %1040 = vmatprep.subr.mxu0 0.0
    %1041 = vmatpush1.msra.mxu0 0.0
    %1042 = vmatprep.subr.mxu0 0.0
    %1043 = vmatpush1.msra.mxu0 0.0
    %1044 = vmatprep.subr.mxu0 0.0
    %1045 = vmatpush1.msra.mxu0 0.0
    %1046 = vmatprep.subr.mxu0 0.0
    %1047 = vmatpush1.msra.mxu0 0.0
    %1048 = vmatprep.subr.mxu0 0.0
    %1049 = vmatpush1.msra.mxu0 0.0
    %1050 = vmatprep.subr.mxu0 0.0
    %1051 = vmatpush1.msra.mxu0 0.0
    %1052 = vmatprep.subr.mxu0 0.0
    %1053 = vmatpush1.msra.mxu0 0.0
    %1054 = vmatprep.subr.mxu0 0.0
    %1055 = vmatpush1.msra.mxu0 0.0
    %1056 = vmatprep.subr.mxu0 0.0
    %1057 = vmatpush1.msra.mxu0 0.0
    %1058 = vmatprep.subr.mxu0 0.0
    %1059 = vmatpush1.msra.mxu0 0.0
    %1060 = vmatprep.subr.mxu0 0.0
    %1061 = vmatpush1.msra.mxu0 %v71
    %1062 = vmatprep.subr.mxu0 0.0
    %1063 = vmatpush1.msra.mxu0 %v70
    %1064 = vmatprep.subr.mxu0 0.0
    %1065 = vmatpush1.msra.mxu0 %v69
    %1066 = vmatprep.subr.mxu0 0.0
    %1067 = vmatpush1.msra.mxu0 %v68
    %1068 = vmatprep.subr.mxu0 0.0
    %1069 = vmatpush2.msra.mxu0 0.0
    %1070 = vmatprep.subr.mxu0 0.0
    %1071 = vmatpush2.msra.mxu0 0.0
    %1072 = vmatprep.subr.mxu0 0.0
    %1073 = vmatpush2.msra.mxu0 0.0
    %1074 = vmatprep.subr.mxu0 0.0
    %1075 = vmatpush2.msra.mxu0 0.0
    %1076 = vmatprep.subr.mxu0 0.0
    %1077 = vmatpush2.msra.mxu0 0.0
    %1078 = vmatprep.subr.mxu0 0.0
    %1079 = vmatpush2.msra.mxu0 0.0
    %1080 = vmatprep.subr.mxu0 0.0
    %1081 = vmatpush2.msra.mxu0 0.0
    %1082 = vmatprep.subr.mxu0 0.0
    %1083 = vmatpush2.msra.mxu0 0.0
    %1084 = vmatprep.subr.mxu0 0.0
    %1085 = vmatpush2.msra.mxu0 0.0
    %1086 = vmatprep.subr.mxu0 0.0
    %1087 = vmatpush2.msra.mxu0 0.0
    %1088 = vmatprep.subr.mxu0 0.0
    %1089 = vmatpush2.msra.mxu0 0.0
    %1090 = vmatprep.subr.mxu0 0.0
    %1091 = vmatpush2.msra.mxu0 0.0
    %1092 = vmatprep.subr.mxu0 0.0
    %1093 = vmatpush2.msra.mxu0 0.0
    %1094 = vmatprep.subr.mxu0 0.0
    %1095 = vmatpush2.msra.mxu0 0.0
    %1096 = vmatprep.subr.mxu0 0.0
    %1097 = vmatpush2.msra.mxu0 0.0
    %1098 = vmatprep.subr.mxu0 0.0
    %1099 = vmatpush2.msra.mxu0 0.0
    %1100 = vmatprep.mubr.f32.mxu0 0.0
    %1101 = vmatmul.mubr.f32.gmra.mxu0 %v1034
    %v1102 = vpop.f32.mrf.mxu0
    %v1103 = vadd.f32 %v1028, %v1102
    %v1104 = vpop.f32.mrf.mxu0
    %1105 = vdwg.mxu0
    %v1106 = vadd.f32 %v1103, %v412
    %v1107 = vxor.u32 %v1106, 2147483648
    %v1108 = vmul.f32 %v1107, 1.442695
    %v1109 = vpow.pop %v1108
    %v1110 = vadd.f32 %v1109, 1.0
    %v1111 = vrcp.pop %v1110
    %v1112 = vmul.f32 1.0, %v1111
    %v1113 = vmul.f32 %v1112, 2.0
    %v1114 = vsub.f32 %v1113, 1.0
    %v1115 = vmul.f32 %v1112, %v779
    %1117 = vrot.lane.b32.xlu0 %v1114, 64
    %v1118 = vpop.permute.xlu0 %1117
    %v1120 = vmul.f32 %v1112, %v1118
    %1122 = vrot.lane.b32.xlu0 %v1120, 32
    %v1123 = vpop.permute.xlu0 %1122
    %v1125 = vadd.f32 %v1115, %v1123
    %v1126 = vtanh.pop %v1125
    %1128 = vrot.lane.b32.xlu0 %v1126, 64
    %v1129 = vpop.permute.xlu0 %1128
    %v1131 = vmul.f32 %v1112, %v1129
    %1132 = vmatprep.subr.mxu0 0.0
    %1133 = vmatpush1.msra.mxu0 0.0
    %1134 = vmatprep.subr.mxu0 0.0
    %1135 = vmatpush1.msra.mxu0 0.0
    %1136 = vmatprep.subr.mxu0 0.0
    %1137 = vmatpush1.msra.mxu0 0.0
    %1138 = vmatprep.subr.mxu0 0.0
    %1139 = vmatpush1.msra.mxu0 0.0
    %1140 = vmatprep.subr.mxu0 0.0
    %1141 = vmatpush1.msra.mxu0 0.0
    %1142 = vmatprep.subr.mxu0 0.0
    %1143 = vmatpush1.msra.mxu0 0.0
    %1144 = vmatprep.subr.mxu0 0.0
    %1145 = vmatpush1.msra.mxu0 0.0
    %1146 = vmatprep.subr.mxu0 0.0
    %1147 = vmatpush1.msra.mxu0 0.0
    %1148 = vmatprep.subr.mxu0 0.0
    %1149 = vmatpush1.msra.mxu0 0.0
    %1150 = vmatprep.subr.mxu0 0.0
    %1151 = vmatpush1.msra.mxu0 0.0
    %1152 = vmatprep.subr.mxu0 0.0
    %1153 = vmatpush1.msra.mxu0 0.0
    %1154 = vmatprep.subr.mxu0 0.0
    %1155 = vmatpush1.msra.mxu0 0.0
    %1156 = vmatprep.subr.mxu0 0.0
    %1157 = vmatpush1.msra.mxu0 %v61
    %1158 = vmatprep.subr.mxu0 0.0
    %1159 = vmatpush1.msra.mxu0 %v60
    %1160 = vmatprep.subr.mxu0 0.0
    %1161 = vmatpush1.msra.mxu0 %v59
    %1162 = vmatprep.subr.mxu0 0.0
    %1163 = vmatpush1.msra.mxu0 %v58
    %1164 = vmatprep.subr.mxu0 0.0
    %1165 = vmatpush2.msra.mxu0 0.0
    %1166 = vmatprep.subr.mxu0 0.0
    %1167 = vmatpush2.msra.mxu0 0.0
    %1168 = vmatprep.subr.mxu0 0.0
    %1169 = vmatpush2.msra.mxu0 0.0
    %1170 = vmatprep.subr.mxu0 0.0
    %1171 = vmatpush2.msra.mxu0 0.0
    %1172 = vmatprep.subr.mxu0 0.0
    %1173 = vmatpush2.msra.mxu0 0.0
    %1174 = vmatprep.subr.mxu0 0.0
    %1175 = vmatpush2.msra.mxu0 0.0
    %1176 = vmatprep.subr.mxu0 0.0
    %1177 = vmatpush2.msra.mxu0 0.0
    %1178 = vmatprep.subr.mxu0 0.0
    %1179 = vmatpush2.msra.mxu0 0.0
    %1180 = vmatprep.subr.mxu0 0.0
    %1181 = vmatpush2.msra.mxu0 0.0
    %1182 = vmatprep.subr.mxu0 0.0
    %1183 = vmatpush2.msra.mxu0 0.0
    %1184 = vmatprep.subr.mxu0 0.0
    %1185 = vmatpush2.msra.mxu0 0.0
    %1186 = vmatprep.subr.mxu0 0.0
    %1187 = vmatpush2.msra.mxu0 0.0
    %1188 = vmatprep.subr.mxu0 0.0
    %1189 = vmatpush2.msra.mxu0 0.0
    %1190 = vmatprep.subr.mxu0 0.0
    %1191 = vmatpush2.msra.mxu0 0.0
    %1192 = vmatprep.subr.mxu0 0.0
    %1193 = vmatpush2.msra.mxu0 0.0
    %1194 = vmatprep.subr.mxu0 0.0
    %1195 = vmatpush2.msra.mxu0 0.0
    %1196 = vmatprep.mubr.f32.mxu0 0.0
    %1197 = vmatmul.mubr.f32.gmra.mxu0 %v1034
    %v1198 = vpop.f32.mrf.mxu0
    %v1199 = vadd.f32 0.0, %v1198
    %v1200 = vpop.f32.mrf.mxu0
    %1201 = vdwg.mxu0
    %1202 = vrot.lane.b32.xlu0 %v82, 80
    %v1203 = vpop.permute.xlu0 %1202
    %v1204 = vsel %vm157, %v1203, 0
    %1206 = vmatprep.subr.mxu0 0.0
    %1207 = vmatpush1.msra.mxu0 0.0
    %1208 = vmatprep.subr.mxu0 0.0
    %1209 = vmatpush1.msra.mxu0 0.0
    %1210 = vmatprep.subr.mxu0 0.0
    %1211 = vmatpush1.msra.mxu0 0.0
    %1212 = vmatprep.subr.mxu0 0.0
    %1213 = vmatpush1.msra.mxu0 0.0
    %1214 = vmatprep.subr.mxu0 0.0
    %1215 = vmatpush1.msra.mxu0 0.0
    %1216 = vmatprep.subr.mxu0 0.0
    %1217 = vmatpush1.msra.mxu0 0.0
    %1218 = vmatprep.subr.mxu0 0.0
    %1219 = vmatpush1.msra.mxu0 0.0
    %1220 = vmatprep.subr.mxu0 0.0
    %1221 = vmatpush1.msra.mxu0 0.0
    %1222 = vmatprep.subr.mxu0 0.0
    %1223 = vmatpush1.msra.mxu0 0.0
    %1224 = vmatprep.subr.mxu0 0.0
    %1225 = vmatpush1.msra.mxu0 0.0
    %1226 = vmatprep.subr.mxu0 0.0
    %1227 = vmatpush1.msra.mxu0 0.0
    %1228 = vmatprep.subr.mxu0 0.0
    %1229 = vmatpush1.msra.mxu0 0.0
    %1230 = vmatprep.subr.mxu0 0.0
    %1231 = vmatpush1.msra.mxu0 0.0
    %1232 = vmatprep.subr.mxu0 0.0
    %1233 = vmatpush1.msra.mxu0 0.0
    %1234 = vmatprep.subr.mxu0 0.0
    %1235 = vmatpush1.msra.mxu0 %v53
    %1236 = vmatprep.subr.mxu0 0.0
    %1237 = vmatpush1.msra.mxu0 %v52
    %1238 = vmatprep.subr.mxu0 0.0
    %1239 = vmatpush2.msra.mxu0 0.0
    %1240 = vmatprep.subr.mxu0 0.0
    %1241 = vmatpush2.msra.mxu0 0.0
    %1242 = vmatprep.subr.mxu0 0.0
    %1243 = vmatpush2.msra.mxu0 0.0
    %1244 = vmatprep.subr.mxu0 0.0
    %1245 = vmatpush2.msra.mxu0 0.0
    %1246 = vmatprep.subr.mxu0 0.0
    %1247 = vmatpush2.msra.mxu0 0.0
    %1248 = vmatprep.subr.mxu0 0.0
    %1249 = vmatpush2.msra.mxu0 0.0
    %1250 = vmatprep.subr.mxu0 0.0
    %1251 = vmatpush2.msra.mxu0 0.0
    %1252 = vmatprep.subr.mxu0 0.0
    %1253 = vmatpush2.msra.mxu0 0.0
    %1254 = vmatprep.subr.mxu0 0.0
    %1255 = vmatpush2.msra.mxu0 0.0
    %1256 = vmatprep.subr.mxu0 0.0
    %1257 = vmatpush2.msra.mxu0 0.0
    %1258 = vmatprep.subr.mxu0 0.0
    %1259 = vmatpush2.msra.mxu0 0.0
    %1260 = vmatprep.subr.mxu0 0.0
    %1261 = vmatpush2.msra.mxu0 0.0
    %1262 = vmatprep.subr.mxu0 0.0
    %1263 = vmatpush2.msra.mxu0 0.0
    %1264 = vmatprep.subr.mxu0 0.0
    %1265 = vmatpush2.msra.mxu0 0.0
    %1266 = vmatprep.subr.mxu0 0.0
    %1267 = vmatpush2.msra.mxu0 0.0
    %1268 = vmatprep.subr.mxu0 0.0
    %1269 = vmatpush2.msra.mxu0 0.0
    %1270 = vmatprep.mubr.f32.mxu0 0.0
    %1271 = vmatmul.mubr.f32.gmra.mxu0 %v1204
    %v1272 = vpop.f32.mrf.mxu0
    %v1273 = vadd.f32 %v1199, %v1272
    %v1274 = vpop.f32.mrf.mxu0
    %1275 = vdwg.mxu0
    %v1276 = vadd.f32 %v1273, %v235
    %v1277 = vxor.u32 %v1276, 2147483648
    %v1278 = vmul.f32 %v1277, 1.442695
    %v1279 = vpow.pop %v1278
    %v1280 = vadd.f32 %v1279, 1.0
    %v1281 = vrcp.pop %v1280
    %v1282 = vmul.f32 1.0, %v1281
    %v1283 = vmul.f32 %v1282, 2.0
    %v1284 = vsub.f32 %v1283, 1.0
    %v1285 = vmul.f32 %v1282, %v949
    %1287 = vrot.lane.b32.xlu0 %v1284, 64
    %v1288 = vpop.permute.xlu0 %1287
    %v1290 = vmul.f32 %v1282, %v1288
    %1292 = vrot.lane.b32.xlu0 %v1290, 32
    %v1293 = vpop.permute.xlu0 %1292
    %v1295 = vadd.f32 %v1285, %v1293
    %v1296 = vtanh.pop %v1295
    %1298 = vrot.lane.b32.xlu0 %v1296, 64
    %v1299 = vpop.permute.xlu0 %1298
    %v1301 = vmul.f32 %v1282, %v1299
    %1303 = vrot.lane.b32.xlu0 %v1131, 32
    %v1304 = vpop.permute.xlu0 %1303
    %v1305 = vsel %vm83, %v1304, 0
    %1307 = vmatprep.subr.mxu0 0.0
    %1308 = vmatpush1.msra.mxu0 0.0
    %1309 = vmatprep.subr.mxu0 0.0
    %1310 = vmatpush1.msra.mxu0 0.0
    %1311 = vmatprep.subr.mxu0 0.0
    %1312 = vmatpush1.msra.mxu0 0.0
    %1313 = vmatprep.subr.mxu0 0.0
    %1314 = vmatpush1.msra.mxu0 0.0
    %1315 = vmatprep.subr.mxu0 0.0
    %1316 = vmatpush1.msra.mxu0 0.0
    %1317 = vmatprep.subr.mxu0 0.0
    %1318 = vmatpush1.msra.mxu0 0.0
    %1319 = vmatprep.subr.mxu0 0.0
    %1320 = vmatpush1.msra.mxu0 0.0
    %1321 = vmatprep.subr.mxu0 0.0
    %1322 = vmatpush1.msra.mxu0 0.0
    %1323 = vmatprep.subr.mxu0 0.0
    %1324 = vmatpush1.msra.mxu0 0.0
    %1325 = vmatprep.subr.mxu0 0.0
    %1326 = vmatpush1.msra.mxu0 0.0
    %1327 = vmatprep.subr.mxu0 0.0
    %1328 = vmatpush1.msra.mxu0 0.0
    %1329 = vmatprep.subr.mxu0 0.0
    %1330 = vmatpush1.msra.mxu0 0.0
    %1331 = vmatprep.subr.mxu0 0.0
    %1332 = vmatpush1.msra.mxu0 %v79
    %1333 = vmatprep.subr.mxu0 0.0
    %1334 = vmatpush1.msra.mxu0 %v78
    %1335 = vmatprep.subr.mxu0 0.0
    %1336 = vmatpush1.msra.mxu0 %v77
    %1337 = vmatprep.subr.mxu0 0.0
    %1338 = vmatpush1.msra.mxu0 %v76
    %1339 = vmatprep.subr.mxu0 0.0
    %1340 = vmatpush2.msra.mxu0 0.0
    %1341 = vmatprep.subr.mxu0 0.0
    %1342 = vmatpush2.msra.mxu0 0.0
    %1343 = vmatprep.subr.mxu0 0.0
    %1344 = vmatpush2.msra.mxu0 0.0
    %1345 = vmatprep.subr.mxu0 0.0
    %1346 = vmatpush2.msra.mxu0 0.0
    %1347 = vmatprep.subr.mxu0 0.0
    %1348 = vmatpush2.msra.mxu0 0.0
    %1349 = vmatprep.subr.mxu0 0.0
    %1350 = vmatpush2.msra.mxu0 0.0
    %1351 = vmatprep.subr.mxu0 0.0
    %1352 = vmatpush2.msra.mxu0 0.0
    %1353 = vmatprep.subr.mxu0 0.0
    %1354 = vmatpush2.msra.mxu0 0.0
    %1355 = vmatprep.subr.mxu0 0.0
    %1356 = vmatpush2.msra.mxu0 0.0
    %1357 = vmatprep.subr.mxu0 0.0
    %1358 = vmatpush2.msra.mxu0 0.0
    %1359 = vmatprep.subr.mxu0 0.0
    %1360 = vmatpush2.msra.mxu0 0.0
    %1361 = vmatprep.subr.mxu0 0.0
    %1362 = vmatpush2.msra.mxu0 0.0
    %1363 = vmatprep.subr.mxu0 0.0
    %1364 = vmatpush2.msra.mxu0 0.0
    %1365 = vmatprep.subr.mxu0 0.0
    %1366 = vmatpush2.msra.mxu0 0.0
    %1367 = vmatprep.subr.mxu0 0.0
    %1368 = vmatpush2.msra.mxu0 0.0
    %1369 = vmatprep.subr.mxu0 0.0
    %1370 = vmatpush2.msra.mxu0 0.0
    %1371 = vmatprep.mubr.f32.mxu0 0.0
    %1372 = vmatmul.mubr.f32.gmra.mxu0 %v1305
    %v1373 = vpop.f32.mrf.mxu0
    %v1374 = vadd.f32 0.0, %v1373
    %v1375 = vpop.f32.mrf.mxu0
    %1376 = vdwg.mxu0
    %1378 = vrot.lane.b32.xlu0 %v1301, 32
    %v1379 = vpop.permute.xlu0 %1378
    %v1380 = vsel %vm83, %v1379, 0
    %1382 = vmatprep.subr.mxu0 0.0
    %1383 = vmatpush1.msra.mxu0 0.0
    %1384 = vmatprep.subr.mxu0 0.0
    %1385 = vmatpush1.msra.mxu0 0.0
    %1386 = vmatprep.subr.mxu0 0.0
    %1387 = vmatpush1.msra.mxu0 0.0
    %1388 = vmatprep.subr.mxu0 0.0
    %1389 = vmatpush1.msra.mxu0 0.0
    %1390 = vmatprep.subr.mxu0 0.0
    %1391 = vmatpush1.msra.mxu0 0.0
    %1392 = vmatprep.subr.mxu0 0.0
    %1393 = vmatpush1.msra.mxu0 0.0
    %1394 = vmatprep.subr.mxu0 0.0
    %1395 = vmatpush1.msra.mxu0 0.0
    %1396 = vmatprep.subr.mxu0 0.0
    %1397 = vmatpush1.msra.mxu0 0.0
    %1398 = vmatprep.subr.mxu0 0.0
    %1399 = vmatpush1.msra.mxu0 0.0
    %1400 = vmatprep.subr.mxu0 0.0
    %1401 = vmatpush1.msra.mxu0 0.0
    %1402 = vmatprep.subr.mxu0 0.0
    %1403 = vmatpush1.msra.mxu0 0.0
    %1404 = vmatprep.subr.mxu0 0.0
    %1405 = vmatpush1.msra.mxu0 0.0
    %1406 = vmatprep.subr.mxu0 0.0
    %1407 = vmatpush1.msra.mxu0 %v71
    %1408 = vmatprep.subr.mxu0 0.0
    %1409 = vmatpush1.msra.mxu0 %v70
    %1410 = vmatprep.subr.mxu0 0.0
    %1411 = vmatpush1.msra.mxu0 %v69
    %1412 = vmatprep.subr.mxu0 0.0
    %1413 = vmatpush1.msra.mxu0 %v68
    %1414 = vmatprep.subr.mxu0 0.0
    %1415 = vmatpush2.msra.mxu0 0.0
    %1416 = vmatprep.subr.mxu0 0.0
    %1417 = vmatpush2.msra.mxu0 0.0
    %1418 = vmatprep.subr.mxu0 0.0
    %1419 = vmatpush2.msra.mxu0 0.0
    %1420 = vmatprep.subr.mxu0 0.0
    %1421 = vmatpush2.msra.mxu0 0.0
    %1422 = vmatprep.subr.mxu0 0.0
    %1423 = vmatpush2.msra.mxu0 0.0
    %1424 = vmatprep.subr.mxu0 0.0
    %1425 = vmatpush2.msra.mxu0 0.0
    %1426 = vmatprep.subr.mxu0 0.0
    %1427 = vmatpush2.msra.mxu0 0.0
    %1428 = vmatprep.subr.mxu0 0.0
    %1429 = vmatpush2.msra.mxu0 0.0
    %1430 = vmatprep.subr.mxu0 0.0
    %1431 = vmatpush2.msra.mxu0 0.0
    %1432 = vmatprep.subr.mxu0 0.0
    %1433 = vmatpush2.msra.mxu0 0.0
    %1434 = vmatprep.subr.mxu0 0.0
    %1435 = vmatpush2.msra.mxu0 0.0
    %1436 = vmatprep.subr.mxu0 0.0
    %1437 = vmatpush2.msra.mxu0 0.0
    %1438 = vmatprep.subr.mxu0 0.0
    %1439 = vmatpush2.msra.mxu0 0.0
    %1440 = vmatprep.subr.mxu0 0.0
    %1441 = vmatpush2.msra.mxu0 0.0
    %1442 = vmatprep.subr.mxu0 0.0
    %1443 = vmatpush2.msra.mxu0 0.0
    %1444 = vmatprep.subr.mxu0 0.0
    %1445 = vmatpush2.msra.mxu0 0.0
    %1446 = vmatprep.mubr.f32.mxu0 0.0
    %1447 = vmatmul.mubr.f32.gmra.mxu0 %v1380
    %v1448 = vpop.f32.mrf.mxu0
    %v1449 = vadd.f32 %v1374, %v1448
    %v1450 = vpop.f32.mrf.mxu0
    %1451 = vdwg.mxu0
    %v1452 = vadd.f32 %v1449, %v412
    %v1453 = vxor.u32 %v1452, 2147483648
    %v1454 = vmul.f32 %v1453, 1.442695
    %v1455 = vpow.pop %v1454
    %v1456 = vadd.f32 %v1455, 1.0
    %v1457 = vrcp.pop %v1456
    %v1458 = vmul.f32 1.0, %v1457
    %v1459 = vmul.f32 %v1458, 2.0
    %v1460 = vsub.f32 %v1459, 1.0
    %v1461 = vmul.f32 %v1458, %v1125
    %1463 = vrot.lane.b32.xlu0 %v1460, 64
    %v1464 = vpop.permute.xlu0 %1463
    %v1466 = vmul.f32 %v1458, %v1464
    %1468 = vrot.lane.b32.xlu0 %v1466, 32
    %v1469 = vpop.permute.xlu0 %1468
    %v1471 = vadd.f32 %v1461, %v1469
    %v1472 = vtanh.pop %v1471
    %1474 = vrot.lane.b32.xlu0 %v1472, 64
    %v1475 = vpop.permute.xlu0 %1474
    %v1477 = vmul.f32 %v1458, %v1475
    %1478 = vmatprep.subr.mxu0 0.0
    %1479 = vmatpush1.msra.mxu0 0.0
    %1480 = vmatprep.subr.mxu0 0.0
    %1481 = vmatpush1.msra.mxu0 0.0
    %1482 = vmatprep.subr.mxu0 0.0
    %1483 = vmatpush1.msra.mxu0 0.0
    %1484 = vmatprep.subr.mxu0 0.0
    %1485 = vmatpush1.msra.mxu0 0.0
    %1486 = vmatprep.subr.mxu0 0.0
    %1487 = vmatpush1.msra.mxu0 0.0
    %1488 = vmatprep.subr.mxu0 0.0
    %1489 = vmatpush1.msra.mxu0 0.0
    %1490 = vmatprep.subr.mxu0 0.0
    %1491 = vmatpush1.msra.mxu0 0.0
    %1492 = vmatprep.subr.mxu0 0.0
    %1493 = vmatpush1.msra.mxu0 0.0
    %1494 = vmatprep.subr.mxu0 0.0
    %1495 = vmatpush1.msra.mxu0 0.0
    %1496 = vmatprep.subr.mxu0 0.0
    %1497 = vmatpush1.msra.mxu0 0.0
    %1498 = vmatprep.subr.mxu0 0.0
    %1499 = vmatpush1.msra.mxu0 0.0
    %1500 = vmatprep.subr.mxu0 0.0
    %1501 = vmatpush1.msra.mxu0 0.0
    %1502 = vmatprep.subr.mxu0 0.0
    %1503 = vmatpush1.msra.mxu0 %v61
    %1504 = vmatprep.subr.mxu0 0.0
    %1505 = vmatpush1.msra.mxu0 %v60
    %1506 = vmatprep.subr.mxu0 0.0
    %1507 = vmatpush1.msra.mxu0 %v59
    %1508 = vmatprep.subr.mxu0 0.0
    %1509 = vmatpush1.msra.mxu0 %v58
    %1510 = vmatprep.subr.mxu0 0.0
    %1511 = vmatpush2.msra.mxu0 0.0
    %1512 = vmatprep.subr.mxu0 0.0
    %1513 = vmatpush2.msra.mxu0 0.0
    %1514 = vmatprep.subr.mxu0 0.0
    %1515 = vmatpush2.msra.mxu0 0.0
    %1516 = vmatprep.subr.mxu0 0.0
    %1517 = vmatpush2.msra.mxu0 0.0
    %1518 = vmatprep.subr.mxu0 0.0
    %1519 = vmatpush2.msra.mxu0 0.0
    %1520 = vmatprep.subr.mxu0 0.0
    %1521 = vmatpush2.msra.mxu0 0.0
    %1522 = vmatprep.subr.mxu0 0.0
    %1523 = vmatpush2.msra.mxu0 0.0
    %1524 = vmatprep.subr.mxu0 0.0
    %1525 = vmatpush2.msra.mxu0 0.0
    %1526 = vmatprep.subr.mxu0 0.0
    %1527 = vmatpush2.msra.mxu0 0.0
    %1528 = vmatprep.subr.mxu0 0.0
    %1529 = vmatpush2.msra.mxu0 0.0
    %1530 = vmatprep.subr.mxu0 0.0
    %1531 = vmatpush2.msra.mxu0 0.0
    %1532 = vmatprep.subr.mxu0 0.0
    %1533 = vmatpush2.msra.mxu0 0.0
    %1534 = vmatprep.subr.mxu0 0.0
    %1535 = vmatpush2.msra.mxu0 0.0
    %1536 = vmatprep.subr.mxu0 0.0
    %1537 = vmatpush2.msra.mxu0 0.0
    %1538 = vmatprep.subr.mxu0 0.0
    %1539 = vmatpush2.msra.mxu0 0.0
    %1540 = vmatprep.subr.mxu0 0.0
    %1541 = vmatpush2.msra.mxu0 0.0
    %1542 = vmatprep.mubr.f32.mxu0 0.0
    %1543 = vmatmul.mubr.f32.gmra.mxu0 %v1380
    %v1544 = vpop.f32.mrf.mxu0
    %v1545 = vadd.f32 0.0, %v1544
    %v1546 = vpop.f32.mrf.mxu0
    %1547 = vdwg.mxu0
    %1548 = vrot.lane.b32.xlu0 %v82, 64
    %v1549 = vpop.permute.xlu0 %1548
    %v1550 = vsel %vm157, %v1549, 0
    %1552 = vmatprep.subr.mxu0 0.0
    %1553 = vmatpush1.msra.mxu0 0.0
    %1554 = vmatprep.subr.mxu0 0.0
    %1555 = vmatpush1.msra.mxu0 0.0
    %1556 = vmatprep.subr.mxu0 0.0
    %1557 = vmatpush1.msra.mxu0 0.0
    %1558 = vmatprep.subr.mxu0 0.0
    %1559 = vmatpush1.msra.mxu0 0.0
    %1560 = vmatprep.subr.mxu0 0.0
    %1561 = vmatpush1.msra.mxu0 0.0
    %1562 = vmatprep.subr.mxu0 0.0
    %1563 = vmatpush1.msra.mxu0 0.0
    %1564 = vmatprep.subr.mxu0 0.0
    %1565 = vmatpush1.msra.mxu0 0.0
    %1566 = vmatprep.subr.mxu0 0.0
    %1567 = vmatpush1.msra.mxu0 0.0
    %1568 = vmatprep.subr.mxu0 0.0
    %1569 = vmatpush1.msra.mxu0 0.0
    %1570 = vmatprep.subr.mxu0 0.0
    %1571 = vmatpush1.msra.mxu0 0.0
    %1572 = vmatprep.subr.mxu0 0.0
    %1573 = vmatpush1.msra.mxu0 0.0
    %1574 = vmatprep.subr.mxu0 0.0
    %1575 = vmatpush1.msra.mxu0 0.0
    %1576 = vmatprep.subr.mxu0 0.0
    %1577 = vmatpush1.msra.mxu0 0.0
    %1578 = vmatprep.subr.mxu0 0.0
    %1579 = vmatpush1.msra.mxu0 0.0
    %1580 = vmatprep.subr.mxu0 0.0
    %1581 = vmatpush1.msra.mxu0 %v53
    %1582 = vmatprep.subr.mxu0 0.0
    %1583 = vmatpush1.msra.mxu0 %v52
    %1584 = vmatprep.subr.mxu0 0.0
    %1585 = vmatpush2.msra.mxu0 0.0
    %1586 = vmatprep.subr.mxu0 0.0
    %1587 = vmatpush2.msra.mxu0 0.0
    %1588 = vmatprep.subr.mxu0 0.0
    %1589 = vmatpush2.msra.mxu0 0.0
    %1590 = vmatprep.subr.mxu0 0.0
    %1591 = vmatpush2.msra.mxu0 0.0
    %1592 = vmatprep.subr.mxu0 0.0
    %1593 = vmatpush2.msra.mxu0 0.0
    %1594 = vmatprep.subr.mxu0 0.0
    %1595 = vmatpush2.msra.mxu0 0.0
    %1596 = vmatprep.subr.mxu0 0.0
    %1597 = vmatpush2.msra.mxu0 0.0
    %1598 = vmatprep.subr.mxu0 0.0
    %1599 = vmatpush2.msra.mxu0 0.0
    %1600 = vmatprep.subr.mxu0 0.0
    %1601 = vmatpush2.msra.mxu0 0.0
    %1602 = vmatprep.subr.mxu0 0.0
    %1603 = vmatpush2.msra.mxu0 0.0
    %1604 = vmatprep.subr.mxu0 0.0
    %1605 = vmatpush2.msra.mxu0 0.0
    %1606 = vmatprep.subr.mxu0 0.0
    %1607 = vmatpush2.msra.mxu0 0.0
    %1608 = vmatprep.subr.mxu0 0.0
    %1609 = vmatpush2.msra.mxu0 0.0
    %1610 = vmatprep.subr.mxu0 0.0
    %1611 = vmatpush2.msra.mxu0 0.0
    %1612 = vmatprep.subr.mxu0 0.0
    %1613 = vmatpush2.msra.mxu0 0.0
    %1614 = vmatprep.subr.mxu0 0.0
    %1615 = vmatpush2.msra.mxu0 0.0
    %1616 = vmatprep.mubr.f32.mxu0 0.0
    %1617 = vmatmul.mubr.f32.gmra.mxu0 %v1550
    %v1618 = vpop.f32.mrf.mxu0
    %v1619 = vadd.f32 %v1545, %v1618
    %v1620 = vpop.f32.mrf.mxu0
    %1621 = vdwg.mxu0
    %v1622 = vadd.f32 %v1619, %v235
    %v1623 = vxor.u32 %v1622, 2147483648
    %v1624 = vmul.f32 %v1623, 1.442695
    %v1625 = vpow.pop %v1624
    %v1626 = vadd.f32 %v1625, 1.0
    %v1627 = vrcp.pop %v1626
    %v1628 = vmul.f32 1.0, %v1627
    %v1629 = vmul.f32 %v1628, 2.0
    %v1630 = vsub.f32 %v1629, 1.0
    %v1631 = vmul.f32 %v1628, %v1295
    %1633 = vrot.lane.b32.xlu0 %v1630, 64
    %v1634 = vpop.permute.xlu0 %1633
    %v1636 = vmul.f32 %v1628, %v1634
    %1638 = vrot.lane.b32.xlu0 %v1636, 32
    %v1639 = vpop.permute.xlu0 %1638
    %v1641 = vadd.f32 %v1631, %v1639
    %v1642 = vtanh.pop %v1641
    %1644 = vrot.lane.b32.xlu0 %v1642, 64
    %v1645 = vpop.permute.xlu0 %1644
    %v1647 = vmul.f32 %v1628, %v1645
    %1649 = vrot.lane.b32.xlu0 %v1477, 32
    %v1650 = vpop.permute.xlu0 %1649
    %v1651 = vsel %vm83, %v1650, 0
    %1653 = vmatprep.subr.mxu0 0.0
    %1654 = vmatpush1.msra.mxu0 0.0
    %1655 = vmatprep.subr.mxu0 0.0
    %1656 = vmatpush1.msra.mxu0 0.0
    %1657 = vmatprep.subr.mxu0 0.0
    %1658 = vmatpush1.msra.mxu0 0.0
    %1659 = vmatprep.subr.mxu0 0.0
    %1660 = vmatpush1.msra.mxu0 0.0
    %1661 = vmatprep.subr.mxu0 0.0
    %1662 = vmatpush1.msra.mxu0 0.0
    %1663 = vmatprep.subr.mxu0 0.0
    %1664 = vmatpush1.msra.mxu0 0.0
    %1665 = vmatprep.subr.mxu0 0.0
    %1666 = vmatpush1.msra.mxu0 0.0
    %1667 = vmatprep.subr.mxu0 0.0
    %1668 = vmatpush1.msra.mxu0 0.0
    %1669 = vmatprep.subr.mxu0 0.0
    %1670 = vmatpush1.msra.mxu0 0.0
    %1671 = vmatprep.subr.mxu0 0.0
    %1672 = vmatpush1.msra.mxu0 0.0
    %1673 = vmatprep.subr.mxu0 0.0
    %1674 = vmatpush1.msra.mxu0 0.0
    %1675 = vmatprep.subr.mxu0 0.0
    %1676 = vmatpush1.msra.mxu0 0.0
    %1677 = vmatprep.subr.mxu0 0.0
    %1678 = vmatpush1.msra.mxu0 %v79
    %1679 = vmatprep.subr.mxu0 0.0
    %1680 = vmatpush1.msra.mxu0 %v78
    %1681 = vmatprep.subr.mxu0 0.0
    %1682 = vmatpush1.msra.mxu0 %v77
    %1683 = vmatprep.subr.mxu0 0.0
    %1684 = vmatpush1.msra.mxu0 %v76
    %1685 = vmatprep.subr.mxu0 0.0
    %1686 = vmatpush2.msra.mxu0 0.0
    %1687 = vmatprep.subr.mxu0 0.0
    %1688 = vmatpush2.msra.mxu0 0.0
    %1689 = vmatprep.subr.mxu0 0.0
    %1690 = vmatpush2.msra.mxu0 0.0
    %1691 = vmatprep.subr.mxu0 0.0
    %1692 = vmatpush2.msra.mxu0 0.0
    %1693 = vmatprep.subr.mxu0 0.0
    %1694 = vmatpush2.msra.mxu0 0.0
    %1695 = vmatprep.subr.mxu0 0.0
    %1696 = vmatpush2.msra.mxu0 0.0
    %1697 = vmatprep.subr.mxu0 0.0
    %1698 = vmatpush2.msra.mxu0 0.0
    %1699 = vmatprep.subr.mxu0 0.0
    %1700 = vmatpush2.msra.mxu0 0.0
    %1701 = vmatprep.subr.mxu0 0.0
    %1702 = vmatpush2.msra.mxu0 0.0
    %1703 = vmatprep.subr.mxu0 0.0
    %1704 = vmatpush2.msra.mxu0 0.0
    %1705 = vmatprep.subr.mxu0 0.0
    %1706 = vmatpush2.msra.mxu0 0.0
    %1707 = vmatprep.subr.mxu0 0.0
    %1708 = vmatpush2.msra.mxu0 0.0
    %1709 = vmatprep.subr.mxu0 0.0
    %1710 = vmatpush2.msra.mxu0 0.0
    %1711 = vmatprep.subr.mxu0 0.0
    %1712 = vmatpush2.msra.mxu0 0.0
    %1713 = vmatprep.subr.mxu0 0.0
    %1714 = vmatpush2.msra.mxu0 0.0
    %1715 = vmatprep.subr.mxu0 0.0
    %1716 = vmatpush2.msra.mxu0 0.0
    %1717 = vmatprep.mubr.f32.mxu0 0.0
    %1718 = vmatmul.mubr.f32.gmra.mxu0 %v1651
    %v1719 = vpop.f32.mrf.mxu0
    %v1720 = vadd.f32 0.0, %v1719
    %v1721 = vpop.f32.mrf.mxu0
    %1722 = vdwg.mxu0
    %1724 = vrot.lane.b32.xlu0 %v1647, 32
    %v1725 = vpop.permute.xlu0 %1724
    %v1726 = vsel %vm83, %v1725, 0
    %1728 = vmatprep.subr.mxu0 0.0
    %1729 = vmatpush1.msra.mxu0 0.0
    %1730 = vmatprep.subr.mxu0 0.0
    %1731 = vmatpush1.msra.mxu0 0.0
    %1732 = vmatprep.subr.mxu0 0.0
    %1733 = vmatpush1.msra.mxu0 0.0
    %1734 = vmatprep.subr.mxu0 0.0
    %1735 = vmatpush1.msra.mxu0 0.0
    %1736 = vmatprep.subr.mxu0 0.0
    %1737 = vmatpush1.msra.mxu0 0.0
    %1738 = vmatprep.subr.mxu0 0.0
    %1739 = vmatpush1.msra.mxu0 0.0
    %1740 = vmatprep.subr.mxu0 0.0
    %1741 = vmatpush1.msra.mxu0 0.0
    %1742 = vmatprep.subr.mxu0 0.0
    %1743 = vmatpush1.msra.mxu0 0.0
    %1744 = vmatprep.subr.mxu0 0.0
    %1745 = vmatpush1.msra.mxu0 0.0
    %1746 = vmatprep.subr.mxu0 0.0
    %1747 = vmatpush1.msra.mxu0 0.0
    %1748 = vmatprep.subr.mxu0 0.0
    %1749 = vmatpush1.msra.mxu0 0.0
    %1750 = vmatprep.subr.mxu0 0.0
    %1751 = vmatpush1.msra.mxu0 0.0
    %1752 = vmatprep.subr.mxu0 0.0
    %1753 = vmatpush1.msra.mxu0 %v71
    %1754 = vmatprep.subr.mxu0 0.0
    %1755 = vmatpush1.msra.mxu0 %v70
    %1756 = vmatprep.subr.mxu0 0.0
    %1757 = vmatpush1.msra.mxu0 %v69
    %1758 = vmatprep.subr.mxu0 0.0
    %1759 = vmatpush1.msra.mxu0 %v68
    %1760 = vmatprep.subr.mxu0 0.0
    %1761 = vmatpush2.msra.mxu0 0.0
    %1762 = vmatprep.subr.mxu0 0.0
    %1763 = vmatpush2.msra.mxu0 0.0
    %1764 = vmatprep.subr.mxu0 0.0
    %1765 = vmatpush2.msra.mxu0 0.0
    %1766 = vmatprep.subr.mxu0 0.0
    %1767 = vmatpush2.msra.mxu0 0.0
    %1768 = vmatprep.subr.mxu0 0.0
    %1769 = vmatpush2.msra.mxu0 0.0
    %1770 = vmatprep.subr.mxu0 0.0
    %1771 = vmatpush2.msra.mxu0 0.0
    %1772 = vmatprep.subr.mxu0 0.0
    %1773 = vmatpush2.msra.mxu0 0.0
    %1774 = vmatprep.subr.mxu0 0.0
    %1775 = vmatpush2.msra.mxu0 0.0
    %1776 = vmatprep.subr.mxu0 0.0
    %1777 = vmatpush2.msra.mxu0 0.0
    %1778 = vmatprep.subr.mxu0 0.0
    %1779 = vmatpush2.msra.mxu0 0.0
    %1780 = vmatprep.subr.mxu0 0.0
    %1781 = vmatpush2.msra.mxu0 0.0
    %1782 = vmatprep.subr.mxu0 0.0
    %1783 = vmatpush2.msra.mxu0 0.0
    %1784 = vmatprep.subr.mxu0 0.0
    %1785 = vmatpush2.msra.mxu0 0.0
    %1786 = vmatprep.subr.mxu0 0.0
    %1787 = vmatpush2.msra.mxu0 0.0
    %1788 = vmatprep.subr.mxu0 0.0
    %1789 = vmatpush2.msra.mxu0 0.0
    %1790 = vmatprep.subr.mxu0 0.0
    %1791 = vmatpush2.msra.mxu0 0.0
    %1792 = vmatprep.mubr.f32.mxu0 0.0
    %1793 = vmatmul.mubr.f32.gmra.mxu0 %v1726
    %v1794 = vpop.f32.mrf.mxu0
    %v1795 = vadd.f32 %v1720, %v1794
    %v1796 = vpop.f32.mrf.mxu0
    %1797 = vdwg.mxu0
    %v1798 = vadd.f32 %v1795, %v412
    %v1799 = vxor.u32 %v1798, 2147483648
    %v1800 = vmul.f32 %v1799, 1.442695
    %v1801 = vpow.pop %v1800
    %v1802 = vadd.f32 %v1801, 1.0
    %v1803 = vrcp.pop %v1802
    %v1804 = vmul.f32 1.0, %v1803
    %v1805 = vmul.f32 %v1804, 2.0
    %v1806 = vsub.f32 %v1805, 1.0
    %v1807 = vmul.f32 %v1804, %v1471
    %1809 = vrot.lane.b32.xlu0 %v1806, 64
    %v1810 = vpop.permute.xlu0 %1809
    %v1812 = vmul.f32 %v1804, %v1810
    %1814 = vrot.lane.b32.xlu0 %v1812, 32
    %v1815 = vpop.permute.xlu0 %1814
    %v1817 = vadd.f32 %v1807, %v1815
    %v1818 = vtanh.pop %v1817
    %1820 = vrot.lane.b32.xlu0 %v1818, 64
    %v1821 = vpop.permute.xlu0 %1820
    %v1823 = vmul.f32 %v1804, %v1821
    %1824 = vmatprep.subr.mxu0 0.0
    %1825 = vmatpush1.msra.mxu0 0.0
    %1826 = vmatprep.subr.mxu0 0.0
    %1827 = vmatpush1.msra.mxu0 0.0
    %1828 = vmatprep.subr.mxu0 0.0
    %1829 = vmatpush1.msra.mxu0 0.0
    %1830 = vmatprep.subr.mxu0 0.0
    %1831 = vmatpush1.msra.mxu0 0.0
    %1832 = vmatprep.subr.mxu0 0.0
    %1833 = vmatpush1.msra.mxu0 0.0
    %1834 = vmatprep.subr.mxu0 0.0
    %1835 = vmatpush1.msra.mxu0 0.0
    %1836 = vmatprep.subr.mxu0 0.0
    %1837 = vmatpush1.msra.mxu0 0.0
    %1838 = vmatprep.subr.mxu0 0.0
    %1839 = vmatpush1.msra.mxu0 0.0
    %1840 = vmatprep.subr.mxu0 0.0
    %1841 = vmatpush1.msra.mxu0 0.0
    %1842 = vmatprep.subr.mxu0 0.0
    %1843 = vmatpush1.msra.mxu0 0.0
    %1844 = vmatprep.subr.mxu0 0.0
    %1845 = vmatpush1.msra.mxu0 0.0
    %1846 = vmatprep.subr.mxu0 0.0
    %1847 = vmatpush1.msra.mxu0 0.0
    %1848 = vmatprep.subr.mxu0 0.0
    %1849 = vmatpush1.msra.mxu0 %v61
    %1850 = vmatprep.subr.mxu0 0.0
    %1851 = vmatpush1.msra.mxu0 %v60
    %1852 = vmatprep.subr.mxu0 0.0
    %1853 = vmatpush1.msra.mxu0 %v59
    %1854 = vmatprep.subr.mxu0 0.0
    %1855 = vmatpush1.msra.mxu0 %v58
    %1856 = vmatprep.subr.mxu0 0.0
    %1857 = vmatpush2.msra.mxu0 0.0
    %1858 = vmatprep.subr.mxu0 0.0
    %1859 = vmatpush2.msra.mxu0 0.0
    %1860 = vmatprep.subr.mxu0 0.0
    %1861 = vmatpush2.msra.mxu0 0.0
    %1862 = vmatprep.subr.mxu0 0.0
    %1863 = vmatpush2.msra.mxu0 0.0
    %1864 = vmatprep.subr.mxu0 0.0
    %1865 = vmatpush2.msra.mxu0 0.0
    %1866 = vmatprep.subr.mxu0 0.0
    %1867 = vmatpush2.msra.mxu0 0.0
    %1868 = vmatprep.subr.mxu0 0.0
    %1869 = vmatpush2.msra.mxu0 0.0
    %1870 = vmatprep.subr.mxu0 0.0
    %1871 = vmatpush2.msra.mxu0 0.0
    %1872 = vmatprep.subr.mxu0 0.0
    %1873 = vmatpush2.msra.mxu0 0.0
    %1874 = vmatprep.subr.mxu0 0.0
    %1875 = vmatpush2.msra.mxu0 0.0
    %1876 = vmatprep.subr.mxu0 0.0
    %1877 = vmatpush2.msra.mxu0 0.0
    %1878 = vmatprep.subr.mxu0 0.0
    %1879 = vmatpush2.msra.mxu0 0.0
    %1880 = vmatprep.subr.mxu0 0.0
    %1881 = vmatpush2.msra.mxu0 0.0
    %1882 = vmatprep.subr.mxu0 0.0
    %1883 = vmatpush2.msra.mxu0 0.0
    %1884 = vmatprep.subr.mxu0 0.0
    %1885 = vmatpush2.msra.mxu0 0.0
    %1886 = vmatprep.subr.mxu0 0.0
    %1887 = vmatpush2.msra.mxu0 0.0
    %1888 = vmatprep.mubr.f32.mxu0 0.0
    %1889 = vmatmul.mubr.f32.gmra.mxu0 %v1726
    %v1890 = vpop.f32.mrf.mxu0
    %v1891 = vadd.f32 0.0, %v1890
    %v1892 = vpop.f32.mrf.mxu0
    %1893 = vdwg.mxu0
    %1894 = vrot.lane.b32.xlu0 %v82, 48
    %v1895 = vpop.permute.xlu0 %1894
    %v1896 = vsel %vm157, %v1895, 0
    %1898 = vmatprep.subr.mxu0 0.0
    %1899 = vmatpush1.msra.mxu0 0.0
    %1900 = vmatprep.subr.mxu0 0.0
    %1901 = vmatpush1.msra.mxu0 0.0
    %1902 = vmatprep.subr.mxu0 0.0
    %1903 = vmatpush1.msra.mxu0 0.0
    %1904 = vmatprep.subr.mxu0 0.0
    %1905 = vmatpush1.msra.mxu0 0.0
    %1906 = vmatprep.subr.mxu0 0.0
    %1907 = vmatpush1.msra.mxu0 0.0
    %1908 = vmatprep.subr.mxu0 0.0
    %1909 = vmatpush1.msra.mxu0 0.0
    %1910 = vmatprep.subr.mxu0 0.0
    %1911 = vmatpush1.msra.mxu0 0.0
    %1912 = vmatprep.subr.mxu0 0.0
    %1913 = vmatpush1.msra.mxu0 0.0
    %1914 = vmatprep.subr.mxu0 0.0
    %1915 = vmatpush1.msra.mxu0 0.0
    %1916 = vmatprep.subr.mxu0 0.0
    %1917 = vmatpush1.msra.mxu0 0.0
    %1918 = vmatprep.subr.mxu0 0.0
    %1919 = vmatpush1.msra.mxu0 0.0
    %1920 = vmatprep.subr.mxu0 0.0
    %1921 = vmatpush1.msra.mxu0 0.0
    %1922 = vmatprep.subr.mxu0 0.0
    %1923 = vmatpush1.msra.mxu0 0.0
    %1924 = vmatprep.subr.mxu0 0.0
    %1925 = vmatpush1.msra.mxu0 0.0
    %1926 = vmatprep.subr.mxu0 0.0
    %1927 = vmatpush1.msra.mxu0 %v53
    %1928 = vmatprep.subr.mxu0 0.0
    %1929 = vmatpush1.msra.mxu0 %v52
    %1930 = vmatprep.subr.mxu0 0.0
    %1931 = vmatpush2.msra.mxu0 0.0
    %1932 = vmatprep.subr.mxu0 0.0
    %1933 = vmatpush2.msra.mxu0 0.0
    %1934 = vmatprep.subr.mxu0 0.0
    %1935 = vmatpush2.msra.mxu0 0.0
    %1936 = vmatprep.subr.mxu0 0.0
    %1937 = vmatpush2.msra.mxu0 0.0
    %1938 = vmatprep.subr.mxu0 0.0
    %1939 = vmatpush2.msra.mxu0 0.0
    %1940 = vmatprep.subr.mxu0 0.0
    %1941 = vmatpush2.msra.mxu0 0.0
    %1942 = vmatprep.subr.mxu0 0.0
    %1943 = vmatpush2.msra.mxu0 0.0
    %1944 = vmatprep.subr.mxu0 0.0
    %1945 = vmatpush2.msra.mxu0 0.0
    %1946 = vmatprep.subr.mxu0 0.0
    %1947 = vmatpush2.msra.mxu0 0.0
    %1948 = vmatprep.subr.mxu0 0.0
    %1949 = vmatpush2.msra.mxu0 0.0
    %1950 = vmatprep.subr.mxu0 0.0
    %1951 = vmatpush2.msra.mxu0 0.0
    %1952 = vmatprep.subr.mxu0 0.0
    %1953 = vmatpush2.msra.mxu0 0.0
    %1954 = vmatprep.subr.mxu0 0.0
    %1955 = vmatpush2.msra.mxu0 0.0
    %1956 = vmatprep.subr.mxu0 0.0
    %1957 = vmatpush2.msra.mxu0 0.0
    %1958 = vmatprep.subr.mxu0 0.0
    %1959 = vmatpush2.msra.mxu0 0.0
    %1960 = vmatprep.subr.mxu0 0.0
    %1961 = vmatpush2.msra.mxu0 0.0
    %1962 = vmatprep.mubr.f32.mxu0 0.0
    %1963 = vmatmul.mubr.f32.gmra.mxu0 %v1896
    %v1964 = vpop.f32.mrf.mxu0
    %v1965 = vadd.f32 %v1891, %v1964
    %v1966 = vpop.f32.mrf.mxu0
    %1967 = vdwg.mxu0
    %v1968 = vadd.f32 %v1965, %v235
    %v1969 = vxor.u32 %v1968, 2147483648
    %v1970 = vmul.f32 %v1969, 1.442695
    %v1971 = vpow.pop %v1970
    %v1972 = vadd.f32 %v1971, 1.0
    %v1973 = vrcp.pop %v1972
    %v1974 = vmul.f32 1.0, %v1973
    %v1975 = vmul.f32 %v1974, 2.0
    %v1976 = vsub.f32 %v1975, 1.0
    %v1977 = vmul.f32 %v1974, %v1641
    %1979 = vrot.lane.b32.xlu0 %v1976, 64
    %v1980 = vpop.permute.xlu0 %1979
    %v1982 = vmul.f32 %v1974, %v1980
    %1984 = vrot.lane.b32.xlu0 %v1982, 32
    %v1985 = vpop.permute.xlu0 %1984
    %v1987 = vadd.f32 %v1977, %v1985
    %v1988 = vtanh.pop %v1987
    %1990 = vrot.lane.b32.xlu0 %v1988, 64
    %v1991 = vpop.permute.xlu0 %1990
    %v1993 = vmul.f32 %v1974, %v1991
    %1995 = vrot.lane.b32.xlu0 %v1823, 32
    %v1996 = vpop.permute.xlu0 %1995
    %v1997 = vsel %vm83, %v1996, 0
    %1999 = vmatprep.subr.mxu0 0.0
    %2000 = vmatpush1.msra.mxu0 0.0
    %2001 = vmatprep.subr.mxu0 0.0
    %2002 = vmatpush1.msra.mxu0 0.0
    %2003 = vmatprep.subr.mxu0 0.0
    %2004 = vmatpush1.msra.mxu0 0.0
    %2005 = vmatprep.subr.mxu0 0.0
    %2006 = vmatpush1.msra.mxu0 0.0
    %2007 = vmatprep.subr.mxu0 0.0
    %2008 = vmatpush1.msra.mxu0 0.0
    %2009 = vmatprep.subr.mxu0 0.0
    %2010 = vmatpush1.msra.mxu0 0.0
    %2011 = vmatprep.subr.mxu0 0.0
    %2012 = vmatpush1.msra.mxu0 0.0
    %2013 = vmatprep.subr.mxu0 0.0
    %2014 = vmatpush1.msra.mxu0 0.0
    %2015 = vmatprep.subr.mxu0 0.0
    %2016 = vmatpush1.msra.mxu0 0.0
    %2017 = vmatprep.subr.mxu0 0.0
    %2018 = vmatpush1.msra.mxu0 0.0
    %2019 = vmatprep.subr.mxu0 0.0
    %2020 = vmatpush1.msra.mxu0 0.0
    %2021 = vmatprep.subr.mxu0 0.0
    %2022 = vmatpush1.msra.mxu0 0.0
    %2023 = vmatprep.subr.mxu0 0.0
    %2024 = vmatpush1.msra.mxu0 %v79
    %2025 = vmatprep.subr.mxu0 0.0
    %2026 = vmatpush1.msra.mxu0 %v78
    %2027 = vmatprep.subr.mxu0 0.0
    %2028 = vmatpush1.msra.mxu0 %v77
    %2029 = vmatprep.subr.mxu0 0.0
    %2030 = vmatpush1.msra.mxu0 %v76
    %2031 = vmatprep.subr.mxu0 0.0
    %2032 = vmatpush2.msra.mxu0 0.0
    %2033 = vmatprep.subr.mxu0 0.0
    %2034 = vmatpush2.msra.mxu0 0.0
    %2035 = vmatprep.subr.mxu0 0.0
    %2036 = vmatpush2.msra.mxu0 0.0
    %2037 = vmatprep.subr.mxu0 0.0
    %2038 = vmatpush2.msra.mxu0 0.0
    %2039 = vmatprep.subr.mxu0 0.0
    %2040 = vmatpush2.msra.mxu0 0.0
    %2041 = vmatprep.subr.mxu0 0.0
    %2042 = vmatpush2.msra.mxu0 0.0
    %2043 = vmatprep.subr.mxu0 0.0
    %2044 = vmatpush2.msra.mxu0 0.0
    %2045 = vmatprep.subr.mxu0 0.0
    %2046 = vmatpush2.msra.mxu0 0.0
    %2047 = vmatprep.subr.mxu0 0.0
    %2048 = vmatpush2.msra.mxu0 0.0
    %2049 = vmatprep.subr.mxu0 0.0
    %2050 = vmatpush2.msra.mxu0 0.0
    %2051 = vmatprep.subr.mxu0 0.0
    %2052 = vmatpush2.msra.mxu0 0.0
    %2053 = vmatprep.subr.mxu0 0.0
    %2054 = vmatpush2.msra.mxu0 0.0
    %2055 = vmatprep.subr.mxu0 0.0
    %2056 = vmatpush2.msra.mxu0 0.0
    %2057 = vmatprep.subr.mxu0 0.0
    %2058 = vmatpush2.msra.mxu0 0.0
    %2059 = vmatprep.subr.mxu0 0.0
    %2060 = vmatpush2.msra.mxu0 0.0
    %2061 = vmatprep.subr.mxu0 0.0
    %2062 = vmatpush2.msra.mxu0 0.0
    %2063 = vmatprep.mubr.f32.mxu0 0.0
    %2064 = vmatmul.mubr.f32.gmra.mxu0 %v1997
    %v2065 = vpop.f32.mrf.mxu0
    %v2066 = vadd.f32 0.0, %v2065
    %v2067 = vpop.f32.mrf.mxu0
    %2068 = vdwg.mxu0
    %2070 = vrot.lane.b32.xlu0 %v1993, 32
    %v2071 = vpop.permute.xlu0 %2070
    %v2072 = vsel %vm83, %v2071, 0
    %2074 = vmatprep.subr.mxu0 0.0
    %2075 = vmatpush1.msra.mxu0 0.0
    %2076 = vmatprep.subr.mxu0 0.0
    %2077 = vmatpush1.msra.mxu0 0.0
    %2078 = vmatprep.subr.mxu0 0.0
    %2079 = vmatpush1.msra.mxu0 0.0
    %2080 = vmatprep.subr.mxu0 0.0
    %2081 = vmatpush1.msra.mxu0 0.0
    %2082 = vmatprep.subr.mxu0 0.0
    %2083 = vmatpush1.msra.mxu0 0.0
    %2084 = vmatprep.subr.mxu0 0.0
    %2085 = vmatpush1.msra.mxu0 0.0
    %2086 = vmatprep.subr.mxu0 0.0
    %2087 = vmatpush1.msra.mxu0 0.0
    %2088 = vmatprep.subr.mxu0 0.0
    %2089 = vmatpush1.msra.mxu0 0.0
    %2090 = vmatprep.subr.mxu0 0.0
    %2091 = vmatpush1.msra.mxu0 0.0
    %2092 = vmatprep.subr.mxu0 0.0
    %2093 = vmatpush1.msra.mxu0 0.0
    %2094 = vmatprep.subr.mxu0 0.0
    %2095 = vmatpush1.msra.mxu0 0.0
    %2096 = vmatprep.subr.mxu0 0.0
    %2097 = vmatpush1.msra.mxu0 0.0
    %2098 = vmatprep.subr.mxu0 0.0
    %2099 = vmatpush1.msra.mxu0 %v71
    %2100 = vmatprep.subr.mxu0 0.0
    %2101 = vmatpush1.msra.mxu0 %v70
    %2102 = vmatprep.subr.mxu0 0.0
    %2103 = vmatpush1.msra.mxu0 %v69
    %2104 = vmatprep.subr.mxu0 0.0
    %2105 = vmatpush1.msra.mxu0 %v68
    %2106 = vmatprep.subr.mxu0 0.0
    %2107 = vmatpush2.msra.mxu0 0.0
    %2108 = vmatprep.subr.mxu0 0.0
    %2109 = vmatpush2.msra.mxu0 0.0
    %2110 = vmatprep.subr.mxu0 0.0
    %2111 = vmatpush2.msra.mxu0 0.0
    %2112 = vmatprep.subr.mxu0 0.0
    %2113 = vmatpush2.msra.mxu0 0.0
    %2114 = vmatprep.subr.mxu0 0.0
    %2115 = vmatpush2.msra.mxu0 0.0
    %2116 = vmatprep.subr.mxu0 0.0
    %2117 = vmatpush2.msra.mxu0 0.0
    %2118 = vmatprep.subr.mxu0 0.0
    %2119 = vmatpush2.msra.mxu0 0.0
    %2120 = vmatprep.subr.mxu0 0.0
    %2121 = vmatpush2.msra.mxu0 0.0
    %2122 = vmatprep.subr.mxu0 0.0
    %2123 = vmatpush2.msra.mxu0 0.0
    %2124 = vmatprep.subr.mxu0 0.0
    %2125 = vmatpush2.msra.mxu0 0.0
    %2126 = vmatprep.subr.mxu0 0.0
    %2127 = vmatpush2.msra.mxu0 0.0
    %2128 = vmatprep.subr.mxu0 0.0
    %2129 = vmatpush2.msra.mxu0 0.0
    %2130 = vmatprep.subr.mxu0 0.0
    %2131 = vmatpush2.msra.mxu0 0.0
    %2132 = vmatprep.subr.mxu0 0.0
    %2133 = vmatpush2.msra.mxu0 0.0
    %2134 = vmatprep.subr.mxu0 0.0
    %2135 = vmatpush2.msra.mxu0 0.0
    %2136 = vmatprep.subr.mxu0 0.0
    %2137 = vmatpush2.msra.mxu0 0.0
    %2138 = vmatprep.mubr.f32.mxu0 0.0
    %2139 = vmatmul.mubr.f32.gmra.mxu0 %v2072
    %v2140 = vpop.f32.mrf.mxu0
    %v2141 = vadd.f32 %v2066, %v2140
    %v2142 = vpop.f32.mrf.mxu0
    %2143 = vdwg.mxu0
    %v2144 = vadd.f32 %v2141, %v412
    %v2145 = vxor.u32 %v2144, 2147483648
    %v2146 = vmul.f32 %v2145, 1.442695
    %v2147 = vpow.pop %v2146
    %v2148 = vadd.f32 %v2147, 1.0
    %v2149 = vrcp.pop %v2148
    %v2150 = vmul.f32 1.0, %v2149
    %v2151 = vmul.f32 %v2150, 2.0
    %v2152 = vsub.f32 %v2151, 1.0
    %v2153 = vmul.f32 %v2150, %v1817
    %2155 = vrot.lane.b32.xlu0 %v2152, 64
    %v2156 = vpop.permute.xlu0 %2155
    %v2158 = vmul.f32 %v2150, %v2156
    %2160 = vrot.lane.b32.xlu0 %v2158, 32
    %v2161 = vpop.permute.xlu0 %2160
    %v2163 = vadd.f32 %v2153, %v2161
    %v2164 = vtanh.pop %v2163
    %2166 = vrot.lane.b32.xlu0 %v2164, 64
    %v2167 = vpop.permute.xlu0 %2166
    %v2169 = vmul.f32 %v2150, %v2167
    %2170 = vmatprep.subr.mxu0 0.0
    %2171 = vmatpush1.msra.mxu0 0.0
    %2172 = vmatprep.subr.mxu0 0.0
    %2173 = vmatpush1.msra.mxu0 0.0
    %2174 = vmatprep.subr.mxu0 0.0
    %2175 = vmatpush1.msra.mxu0 0.0
    %2176 = vmatprep.subr.mxu0 0.0
    %2177 = vmatpush1.msra.mxu0 0.0
    %2178 = vmatprep.subr.mxu0 0.0
    %2179 = vmatpush1.msra.mxu0 0.0
    %2180 = vmatprep.subr.mxu0 0.0
    %2181 = vmatpush1.msra.mxu0 0.0
    %2182 = vmatprep.subr.mxu0 0.0
    %2183 = vmatpush1.msra.mxu0 0.0
    %2184 = vmatprep.subr.mxu0 0.0
    %2185 = vmatpush1.msra.mxu0 0.0
    %2186 = vmatprep.subr.mxu0 0.0
    %2187 = vmatpush1.msra.mxu0 0.0
    %2188 = vmatprep.subr.mxu0 0.0
    %2189 = vmatpush1.msra.mxu0 0.0
    %2190 = vmatprep.subr.mxu0 0.0
    %2191 = vmatpush1.msra.mxu0 0.0
    %2192 = vmatprep.subr.mxu0 0.0
    %2193 = vmatpush1.msra.mxu0 0.0
    %2194 = vmatprep.subr.mxu0 0.0
    %2195 = vmatpush1.msra.mxu0 %v61
    %2196 = vmatprep.subr.mxu0 0.0
    %2197 = vmatpush1.msra.mxu0 %v60
    %2198 = vmatprep.subr.mxu0 0.0
    %2199 = vmatpush1.msra.mxu0 %v59
    %2200 = vmatprep.subr.mxu0 0.0
    %2201 = vmatpush1.msra.mxu0 %v58
    %2202 = vmatprep.subr.mxu0 0.0
    %2203 = vmatpush2.msra.mxu0 0.0
    %2204 = vmatprep.subr.mxu0 0.0
    %2205 = vmatpush2.msra.mxu0 0.0
    %2206 = vmatprep.subr.mxu0 0.0
    %2207 = vmatpush2.msra.mxu0 0.0
    %2208 = vmatprep.subr.mxu0 0.0
    %2209 = vmatpush2.msra.mxu0 0.0
    %2210 = vmatprep.subr.mxu0 0.0
    %2211 = vmatpush2.msra.mxu0 0.0
    %2212 = vmatprep.subr.mxu0 0.0
    %2213 = vmatpush2.msra.mxu0 0.0
    %2214 = vmatprep.subr.mxu0 0.0
    %2215 = vmatpush2.msra.mxu0 0.0
    %2216 = vmatprep.subr.mxu0 0.0
    %2217 = vmatpush2.msra.mxu0 0.0
    %2218 = vmatprep.subr.mxu0 0.0
    %2219 = vmatpush2.msra.mxu0 0.0
    %2220 = vmatprep.subr.mxu0 0.0
    %2221 = vmatpush2.msra.mxu0 0.0
    %2222 = vmatprep.subr.mxu0 0.0
    %2223 = vmatpush2.msra.mxu0 0.0
    %2224 = vmatprep.subr.mxu0 0.0
    %2225 = vmatpush2.msra.mxu0 0.0
    %2226 = vmatprep.subr.mxu0 0.0
    %2227 = vmatpush2.msra.mxu0 0.0
    %2228 = vmatprep.subr.mxu0 0.0
    %2229 = vmatpush2.msra.mxu0 0.0
    %2230 = vmatprep.subr.mxu0 0.0
    %2231 = vmatpush2.msra.mxu0 0.0
    %2232 = vmatprep.subr.mxu0 0.0
    %2233 = vmatpush2.msra.mxu0 0.0
    %2234 = vmatprep.mubr.f32.mxu0 0.0
    %2235 = vmatmul.mubr.f32.gmra.mxu0 %v2072
    %v2236 = vpop.f32.mrf.mxu0
    %v2237 = vadd.f32 0.0, %v2236
    %v2238 = vpop.f32.mrf.mxu0
    %2239 = vdwg.mxu0
    %2240 = vrot.lane.b32.xlu0 %v82, 32
    %v2241 = vpop.permute.xlu0 %2240
    %v2242 = vsel %vm157, %v2241, 0
    %2244 = vmatprep.subr.mxu0 0.0
    %2245 = vmatpush1.msra.mxu0 0.0
    %2246 = vmatprep.subr.mxu0 0.0
    %2247 = vmatpush1.msra.mxu0 0.0
    %2248 = vmatprep.subr.mxu0 0.0
    %2249 = vmatpush1.msra.mxu0 0.0
    %2250 = vmatprep.subr.mxu0 0.0
    %2251 = vmatpush1.msra.mxu0 0.0
    %2252 = vmatprep.subr.mxu0 0.0
    %2253 = vmatpush1.msra.mxu0 0.0
    %2254 = vmatprep.subr.mxu0 0.0
    %2255 = vmatpush1.msra.mxu0 0.0
    %2256 = vmatprep.subr.mxu0 0.0
    %2257 = vmatpush1.msra.mxu0 0.0
    %2258 = vmatprep.subr.mxu0 0.0
    %2259 = vmatpush1.msra.mxu0 0.0
    %2260 = vmatprep.subr.mxu0 0.0
    %2261 = vmatpush1.msra.mxu0 0.0
    %2262 = vmatprep.subr.mxu0 0.0
    %2263 = vmatpush1.msra.mxu0 0.0
    %2264 = vmatprep.subr.mxu0 0.0
    %2265 = vmatpush1.msra.mxu0 0.0
    %2266 = vmatprep.subr.mxu0 0.0
    %2267 = vmatpush1.msra.mxu0 0.0
    %2268 = vmatprep.subr.mxu0 0.0
    %2269 = vmatpush1.msra.mxu0 0.0
    %2270 = vmatprep.subr.mxu0 0.0
    %2271 = vmatpush1.msra.mxu0 0.0
    %2272 = vmatprep.subr.mxu0 0.0
    %2273 = vmatpush1.msra.mxu0 %v53
    %2274 = vmatprep.subr.mxu0 0.0
    %2275 = vmatpush1.msra.mxu0 %v52
    %2276 = vmatprep.subr.mxu0 0.0
    %2277 = vmatpush2.msra.mxu0 0.0
    %2278 = vmatprep.subr.mxu0 0.0
    %2279 = vmatpush2.msra.mxu0 0.0
    %2280 = vmatprep.subr.mxu0 0.0
    %2281 = vmatpush2.msra.mxu0 0.0
    %2282 = vmatprep.subr.mxu0 0.0
    %2283 = vmatpush2.msra.mxu0 0.0
    %2284 = vmatprep.subr.mxu0 0.0
    %2285 = vmatpush2.msra.mxu0 0.0
    %2286 = vmatprep.subr.mxu0 0.0
    %2287 = vmatpush2.msra.mxu0 0.0
    %2288 = vmatprep.subr.mxu0 0.0
    %2289 = vmatpush2.msra.mxu0 0.0
    %2290 = vmatprep.subr.mxu0 0.0
    %2291 = vmatpush2.msra.mxu0 0.0
    %2292 = vmatprep.subr.mxu0 0.0
    %2293 = vmatpush2.msra.mxu0 0.0
    %2294 = vmatprep.subr.mxu0 0.0
    %2295 = vmatpush2.msra.mxu0 0.0
    %2296 = vmatprep.subr.mxu0 0.0
    %2297 = vmatpush2.msra.mxu0 0.0
    %2298 = vmatprep.subr.mxu0 0.0
    %2299 = vmatpush2.msra.mxu0 0.0
    %2300 = vmatprep.subr.mxu0 0.0
    %2301 = vmatpush2.msra.mxu0 0.0
    %2302 = vmatprep.subr.mxu0 0.0
    %2303 = vmatpush2.msra.mxu0 0.0
    %2304 = vmatprep.subr.mxu0 0.0
    %2305 = vmatpush2.msra.mxu0 0.0
    %2306 = vmatprep.subr.mxu0 0.0
    %2307 = vmatpush2.msra.mxu0 0.0
    %2308 = vmatprep.mubr.f32.mxu0 0.0
    %2309 = vmatmul.mubr.f32.gmra.mxu0 %v2242
    %v2310 = vpop.f32.mrf.mxu0
    %v2311 = vadd.f32 %v2237, %v2310
    %v2312 = vpop.f32.mrf.mxu0
    %2313 = vdwg.mxu0
    %v2314 = vadd.f32 %v2311, %v235
    %v2315 = vxor.u32 %v2314, 2147483648
    %v2316 = vmul.f32 %v2315, 1.442695
    %v2317 = vpow.pop %v2316
    %v2318 = vadd.f32 %v2317, 1.0
    %v2319 = vrcp.pop %v2318
    %v2320 = vmul.f32 1.0, %v2319
    %v2321 = vmul.f32 %v2320, 2.0
    %v2322 = vsub.f32 %v2321, 1.0
    %v2323 = vmul.f32 %v2320, %v1987
    %2325 = vrot.lane.b32.xlu0 %v2322, 64
    %v2326 = vpop.permute.xlu0 %2325
    %v2328 = vmul.f32 %v2320, %v2326
    %2330 = vrot.lane.b32.xlu0 %v2328, 32
    %v2331 = vpop.permute.xlu0 %2330
    %v2333 = vadd.f32 %v2323, %v2331
    %v2334 = vtanh.pop %v2333
    %2336 = vrot.lane.b32.xlu0 %v2334, 64
    %v2337 = vpop.permute.xlu0 %2336
    %v2339 = vmul.f32 %v2320, %v2337
    %2341 = vrot.lane.b32.xlu0 %v2169, 32
    %v2342 = vpop.permute.xlu0 %2341
    %v2343 = vsel %vm83, %v2342, 0
    %2345 = vmatprep.subr.mxu0 0.0
    %2346 = vmatpush1.msra.mxu0 0.0
    %2347 = vmatprep.subr.mxu0 0.0
    %2348 = vmatpush1.msra.mxu0 0.0
    %2349 = vmatprep.subr.mxu0 0.0
    %2350 = vmatpush1.msra.mxu0 0.0
    %2351 = vmatprep.subr.mxu0 0.0
    %2352 = vmatpush1.msra.mxu0 0.0
    %2353 = vmatprep.subr.mxu0 0.0
    %2354 = vmatpush1.msra.mxu0 0.0
    %2355 = vmatprep.subr.mxu0 0.0
    %2356 = vmatpush1.msra.mxu0 0.0
    %2357 = vmatprep.subr.mxu0 0.0
    %2358 = vmatpush1.msra.mxu0 0.0
    %2359 = vmatprep.subr.mxu0 0.0
    %2360 = vmatpush1.msra.mxu0 0.0
    %2361 = vmatprep.subr.mxu0 0.0
    %2362 = vmatpush1.msra.mxu0 0.0
    %2363 = vmatprep.subr.mxu0 0.0
    %2364 = vmatpush1.msra.mxu0 0.0
    %2365 = vmatprep.subr.mxu0 0.0
    %2366 = vmatpush1.msra.mxu0 0.0
    %2367 = vmatprep.subr.mxu0 0.0
    %2368 = vmatpush1.msra.mxu0 0.0
    %2369 = vmatprep.subr.mxu0 0.0
    %2370 = vmatpush1.msra.mxu0 %v79
    %2371 = vmatprep.subr.mxu0 0.0
    %2372 = vmatpush1.msra.mxu0 %v78
    %2373 = vmatprep.subr.mxu0 0.0
    %2374 = vmatpush1.msra.mxu0 %v77
    %2375 = vmatprep.subr.mxu0 0.0
    %2376 = vmatpush1.msra.mxu0 %v76
    %2377 = vmatprep.subr.mxu0 0.0
    %2378 = vmatpush2.msra.mxu0 0.0
    %2379 = vmatprep.subr.mxu0 0.0
    %2380 = vmatpush2.msra.mxu0 0.0
    %2381 = vmatprep.subr.mxu0 0.0
    %2382 = vmatpush2.msra.mxu0 0.0
    %2383 = vmatprep.subr.mxu0 0.0
    %2384 = vmatpush2.msra.mxu0 0.0
    %2385 = vmatprep.subr.mxu0 0.0
    %2386 = vmatpush2.msra.mxu0 0.0
    %2387 = vmatprep.subr.mxu0 0.0
    %2388 = vmatpush2.msra.mxu0 0.0
    %2389 = vmatprep.subr.mxu0 0.0
    %2390 = vmatpush2.msra.mxu0 0.0
    %2391 = vmatprep.subr.mxu0 0.0
    %2392 = vmatpush2.msra.mxu0 0.0
    %2393 = vmatprep.subr.mxu0 0.0
    %2394 = vmatpush2.msra.mxu0 0.0
    %2395 = vmatprep.subr.mxu0 0.0
    %2396 = vmatpush2.msra.mxu0 0.0
    %2397 = vmatprep.subr.mxu0 0.0
    %2398 = vmatpush2.msra.mxu0 0.0
    %2399 = vmatprep.subr.mxu0 0.0
    %2400 = vmatpush2.msra.mxu0 0.0
    %2401 = vmatprep.subr.mxu0 0.0
    %2402 = vmatpush2.msra.mxu0 0.0
    %2403 = vmatprep.subr.mxu0 0.0
    %2404 = vmatpush2.msra.mxu0 0.0
    %2405 = vmatprep.subr.mxu0 0.0
    %2406 = vmatpush2.msra.mxu0 0.0
    %2407 = vmatprep.subr.mxu0 0.0
    %2408 = vmatpush2.msra.mxu0 0.0
    %2409 = vmatprep.mubr.f32.mxu0 0.0
    %2410 = vmatmul.mubr.f32.gmra.mxu0 %v2343
    %v2411 = vpop.f32.mrf.mxu0
    %v2412 = vadd.f32 0.0, %v2411
    %v2413 = vpop.f32.mrf.mxu0
    %2414 = vdwg.mxu0
    %2416 = vrot.lane.b32.xlu0 %v2339, 32
    %v2417 = vpop.permute.xlu0 %2416
    %v2418 = vsel %vm83, %v2417, 0
    %2420 = vmatprep.subr.mxu0 0.0
    %2421 = vmatpush1.msra.mxu0 0.0
    %2422 = vmatprep.subr.mxu0 0.0
    %2423 = vmatpush1.msra.mxu0 0.0
    %2424 = vmatprep.subr.mxu0 0.0
    %2425 = vmatpush1.msra.mxu0 0.0
    %2426 = vmatprep.subr.mxu0 0.0
    %2427 = vmatpush1.msra.mxu0 0.0
    %2428 = vmatprep.subr.mxu0 0.0
    %2429 = vmatpush1.msra.mxu0 0.0
    %2430 = vmatprep.subr.mxu0 0.0
    %2431 = vmatpush1.msra.mxu0 0.0
    %2432 = vmatprep.subr.mxu0 0.0
    %2433 = vmatpush1.msra.mxu0 0.0
    %2434 = vmatprep.subr.mxu0 0.0
    %2435 = vmatpush1.msra.mxu0 0.0
    %2436 = vmatprep.subr.mxu0 0.0
    %2437 = vmatpush1.msra.mxu0 0.0
    %2438 = vmatprep.subr.mxu0 0.0
    %2439 = vmatpush1.msra.mxu0 0.0
    %2440 = vmatprep.subr.mxu0 0.0
    %2441 = vmatpush1.msra.mxu0 0.0
    %2442 = vmatprep.subr.mxu0 0.0
    %2443 = vmatpush1.msra.mxu0 0.0
    %2444 = vmatprep.subr.mxu0 0.0
    %2445 = vmatpush1.msra.mxu0 %v71
    %2446 = vmatprep.subr.mxu0 0.0
    %2447 = vmatpush1.msra.mxu0 %v70
    %2448 = vmatprep.subr.mxu0 0.0
    %2449 = vmatpush1.msra.mxu0 %v69
    %2450 = vmatprep.subr.mxu0 0.0
    %2451 = vmatpush1.msra.mxu0 %v68
    %2452 = vmatprep.subr.mxu0 0.0
    %2453 = vmatpush2.msra.mxu0 0.0
    %2454 = vmatprep.subr.mxu0 0.0
    %2455 = vmatpush2.msra.mxu0 0.0
    %2456 = vmatprep.subr.mxu0 0.0
    %2457 = vmatpush2.msra.mxu0 0.0
    %2458 = vmatprep.subr.mxu0 0.0
    %2459 = vmatpush2.msra.mxu0 0.0
    %2460 = vmatprep.subr.mxu0 0.0
    %2461 = vmatpush2.msra.mxu0 0.0
    %2462 = vmatprep.subr.mxu0 0.0
    %2463 = vmatpush2.msra.mxu0 0.0
    %2464 = vmatprep.subr.mxu0 0.0
    %2465 = vmatpush2.msra.mxu0 0.0
    %2466 = vmatprep.subr.mxu0 0.0
    %2467 = vmatpush2.msra.mxu0 0.0
    %2468 = vmatprep.subr.mxu0 0.0
    %2469 = vmatpush2.msra.mxu0 0.0
    %2470 = vmatprep.subr.mxu0 0.0
    %2471 = vmatpush2.msra.mxu0 0.0
    %2472 = vmatprep.subr.mxu0 0.0
    %2473 = vmatpush2.msra.mxu0 0.0
    %2474 = vmatprep.subr.mxu0 0.0
    %2475 = vmatpush2.msra.mxu0 0.0
    %2476 = vmatprep.subr.mxu0 0.0
    %2477 = vmatpush2.msra.mxu0 0.0
    %2478 = vmatprep.subr.mxu0 0.0
    %2479 = vmatpush2.msra.mxu0 0.0
    %2480 = vmatprep.subr.mxu0 0.0
    %2481 = vmatpush2.msra.mxu0 0.0
    %2482 = vmatprep.subr.mxu0 0.0
    %2483 = vmatpush2.msra.mxu0 0.0
    %2484 = vmatprep.mubr.f32.mxu0 0.0
    %2485 = vmatmul.mubr.f32.gmra.mxu0 %v2418
    %v2486 = vpop.f32.mrf.mxu0
    %v2487 = vadd.f32 %v2412, %v2486
    %v2488 = vpop.f32.mrf.mxu0
    %2489 = vdwg.mxu0
    %v2490 = vadd.f32 %v2487, %v412
    %v2491 = vxor.u32 %v2490, 2147483648
    %v2492 = vmul.f32 %v2491, 1.442695
    %v2493 = vpow.pop %v2492
    %v2494 = vadd.f32 %v2493, 1.0
    %v2495 = vrcp.pop %v2494
    %v2496 = vmul.f32 1.0, %v2495
    %v2497 = vmul.f32 %v2496, 2.0
    %v2498 = vsub.f32 %v2497, 1.0
    %v2499 = vmul.f32 %v2496, %v2163
    %2501 = vrot.lane.b32.xlu0 %v2498, 64
    %v2502 = vpop.permute.xlu0 %2501
    %v2504 = vmul.f32 %v2496, %v2502
    %2506 = vrot.lane.b32.xlu0 %v2504, 32
    %v2507 = vpop.permute.xlu0 %2506
    %v2509 = vadd.f32 %v2499, %v2507
    %v2510 = vtanh.pop %v2509
    %2512 = vrot.lane.b32.xlu0 %v2510, 64
    %v2513 = vpop.permute.xlu0 %2512
    %v2515 = vmul.f32 %v2496, %v2513
    %2516 = vmatprep.subr.mxu0 0.0
    %2517 = vmatpush1.msra.mxu0 0.0
    %2518 = vmatprep.subr.mxu0 0.0
    %2519 = vmatpush1.msra.mxu0 0.0
    %2520 = vmatprep.subr.mxu0 0.0
    %2521 = vmatpush1.msra.mxu0 0.0
    %2522 = vmatprep.subr.mxu0 0.0
    %2523 = vmatpush1.msra.mxu0 0.0
    %2524 = vmatprep.subr.mxu0 0.0
    %2525 = vmatpush1.msra.mxu0 0.0
    %2526 = vmatprep.subr.mxu0 0.0
    %2527 = vmatpush1.msra.mxu0 0.0
    %2528 = vmatprep.subr.mxu0 0.0
    %2529 = vmatpush1.msra.mxu0 0.0
    %2530 = vmatprep.subr.mxu0 0.0
    %2531 = vmatpush1.msra.mxu0 0.0
    %2532 = vmatprep.subr.mxu0 0.0
    %2533 = vmatpush1.msra.mxu0 0.0
    %2534 = vmatprep.subr.mxu0 0.0
    %2535 = vmatpush1.msra.mxu0 0.0
    %2536 = vmatprep.subr.mxu0 0.0
    %2537 = vmatpush1.msra.mxu0 0.0
    %2538 = vmatprep.subr.mxu0 0.0
    %2539 = vmatpush1.msra.mxu0 0.0
    %2540 = vmatprep.subr.mxu0 0.0
    %2541 = vmatpush1.msra.mxu0 %v61
    %2542 = vmatprep.subr.mxu0 0.0
    %2543 = vmatpush1.msra.mxu0 %v60
    %2544 = vmatprep.subr.mxu0 0.0
    %2545 = vmatpush1.msra.mxu0 %v59
    %2546 = vmatprep.subr.mxu0 0.0
    %2547 = vmatpush1.msra.mxu0 %v58
    %2548 = vmatprep.subr.mxu0 0.0
    %2549 = vmatpush2.msra.mxu0 0.0
    %2550 = vmatprep.subr.mxu0 0.0
    %2551 = vmatpush2.msra.mxu0 0.0
    %2552 = vmatprep.subr.mxu0 0.0
    %2553 = vmatpush2.msra.mxu0 0.0
    %2554 = vmatprep.subr.mxu0 0.0
    %2555 = vmatpush2.msra.mxu0 0.0
    %2556 = vmatprep.subr.mxu0 0.0
    %2557 = vmatpush2.msra.mxu0 0.0
    %2558 = vmatprep.subr.mxu0 0.0
    %2559 = vmatpush2.msra.mxu0 0.0
    %2560 = vmatprep.subr.mxu0 0.0
    %2561 = vmatpush2.msra.mxu0 0.0
    %2562 = vmatprep.subr.mxu0 0.0
    %2563 = vmatpush2.msra.mxu0 0.0
    %2564 = vmatprep.subr.mxu0 0.0
    %2565 = vmatpush2.msra.mxu0 0.0
    %2566 = vmatprep.subr.mxu0 0.0
    %2567 = vmatpush2.msra.mxu0 0.0
    %2568 = vmatprep.subr.mxu0 0.0
    %2569 = vmatpush2.msra.mxu0 0.0
    %2570 = vmatprep.subr.mxu0 0.0
    %2571 = vmatpush2.msra.mxu0 0.0
    %2572 = vmatprep.subr.mxu0 0.0
    %2573 = vmatpush2.msra.mxu0 0.0
    %2574 = vmatprep.subr.mxu0 0.0
    %2575 = vmatpush2.msra.mxu0 0.0
    %2576 = vmatprep.subr.mxu0 0.0
    %2577 = vmatpush2.msra.mxu0 0.0
    %2578 = vmatprep.subr.mxu0 0.0
    %2579 = vmatpush2.msra.mxu0 0.0
    %2580 = vmatprep.mubr.f32.mxu0 0.0
    %2581 = vmatmul.mubr.f32.gmra.mxu0 %v2418
    %v2582 = vpop.f32.mrf.mxu0
    %v2583 = vadd.f32 0.0, %v2582
    %v2584 = vpop.f32.mrf.mxu0
    %2585 = vdwg.mxu0
    %2586 = vrot.lane.b32.xlu0 %v82, 16
    %v2587 = vpop.permute.xlu0 %2586
    %v2588 = vsel %vm157, %v2587, 0
    %2590 = vmatprep.subr.mxu0 0.0
    %2591 = vmatpush1.msra.mxu0 0.0
    %2592 = vmatprep.subr.mxu0 0.0
    %2593 = vmatpush1.msra.mxu0 0.0
    %2594 = vmatprep.subr.mxu0 0.0
    %2595 = vmatpush1.msra.mxu0 0.0
    %2596 = vmatprep.subr.mxu0 0.0
    %2597 = vmatpush1.msra.mxu0 0.0
    %2598 = vmatprep.subr.mxu0 0.0
    %2599 = vmatpush1.msra.mxu0 0.0
    %2600 = vmatprep.subr.mxu0 0.0
    %2601 = vmatpush1.msra.mxu0 0.0
    %2602 = vmatprep.subr.mxu0 0.0
    %2603 = vmatpush1.msra.mxu0 0.0
    %2604 = vmatprep.subr.mxu0 0.0
    %2605 = vmatpush1.msra.mxu0 0.0
    %2606 = vmatprep.subr.mxu0 0.0
    %2607 = vmatpush1.msra.mxu0 0.0
    %2608 = vmatprep.subr.mxu0 0.0
    %2609 = vmatpush1.msra.mxu0 0.0
    %2610 = vmatprep.subr.mxu0 0.0
    %2611 = vmatpush1.msra.mxu0 0.0
    %2612 = vmatprep.subr.mxu0 0.0
    %2613 = vmatpush1.msra.mxu0 0.0
    %2614 = vmatprep.subr.mxu0 0.0
    %2615 = vmatpush1.msra.mxu0 0.0
    %2616 = vmatprep.subr.mxu0 0.0
    %2617 = vmatpush1.msra.mxu0 0.0
    %2618 = vmatprep.subr.mxu0 0.0
    %2619 = vmatpush1.msra.mxu0 %v53
    %2620 = vmatprep.subr.mxu0 0.0
    %2621 = vmatpush1.msra.mxu0 %v52
    %2622 = vmatprep.subr.mxu0 0.0
    %2623 = vmatpush2.msra.mxu0 0.0
    %2624 = vmatprep.subr.mxu0 0.0
    %2625 = vmatpush2.msra.mxu0 0.0
    %2626 = vmatprep.subr.mxu0 0.0
    %2627 = vmatpush2.msra.mxu0 0.0
    %2628 = vmatprep.subr.mxu0 0.0
    %2629 = vmatpush2.msra.mxu0 0.0
    %2630 = vmatprep.subr.mxu0 0.0
    %2631 = vmatpush2.msra.mxu0 0.0
    %2632 = vmatprep.subr.mxu0 0.0
    %2633 = vmatpush2.msra.mxu0 0.0
    %2634 = vmatprep.subr.mxu0 0.0
    %2635 = vmatpush2.msra.mxu0 0.0
    %2636 = vmatprep.subr.mxu0 0.0
    %2637 = vmatpush2.msra.mxu0 0.0
    %2638 = vmatprep.subr.mxu0 0.0
    %2639 = vmatpush2.msra.mxu0 0.0
    %2640 = vmatprep.subr.mxu0 0.0
    %2641 = vmatpush2.msra.mxu0 0.0
    %2642 = vmatprep.subr.mxu0 0.0
    %2643 = vmatpush2.msra.mxu0 0.0
    %2644 = vmatprep.subr.mxu0 0.0
    %2645 = vmatpush2.msra.mxu0 0.0
    %2646 = vmatprep.subr.mxu0 0.0
    %2647 = vmatpush2.msra.mxu0 0.0
    %2648 = vmatprep.subr.mxu0 0.0
    %2649 = vmatpush2.msra.mxu0 0.0
    %2650 = vmatprep.subr.mxu0 0.0
    %2651 = vmatpush2.msra.mxu0 0.0
    %2652 = vmatprep.subr.mxu0 0.0
    %2653 = vmatpush2.msra.mxu0 0.0
    %2654 = vmatprep.mubr.f32.mxu0 0.0
    %2655 = vmatmul.mubr.f32.gmra.mxu0 %v2588
    %v2656 = vpop.f32.mrf.mxu0
    %v2657 = vadd.f32 %v2583, %v2656
    %v2658 = vpop.f32.mrf.mxu0
    %2659 = vdwg.mxu0
    %v2660 = vadd.f32 %v2657, %v235
    %v2661 = vxor.u32 %v2660, 2147483648
    %v2662 = vmul.f32 %v2661, 1.442695
    %v2663 = vpow.pop %v2662
    %v2664 = vadd.f32 %v2663, 1.0
    %v2665 = vrcp.pop %v2664
    %v2666 = vmul.f32 1.0, %v2665
    %v2667 = vmul.f32 %v2666, 2.0
    %v2668 = vsub.f32 %v2667, 1.0
    %v2669 = vmul.f32 %v2666, %v2333
    %2671 = vrot.lane.b32.xlu0 %v2668, 64
    %v2672 = vpop.permute.xlu0 %2671
    %v2674 = vmul.f32 %v2666, %v2672
    %2676 = vrot.lane.b32.xlu0 %v2674, 32
    %v2677 = vpop.permute.xlu0 %2676
    %v2679 = vadd.f32 %v2669, %v2677
    %v2680 = vtanh.pop %v2679
    %2682 = vrot.lane.b32.xlu0 %v2680, 64
    %v2683 = vpop.permute.xlu0 %2682
    %v2685 = vmul.f32 %v2666, %v2683
    %2687 = vrot.lane.b32.xlu0 %v2515, 32
    %v2688 = vpop.permute.xlu0 %2687
    %v2689 = vsel %vm83, %v2688, 0
    %2691 = vmatprep.subr.mxu0 0.0
    %2692 = vmatpush1.msra.mxu0 0.0
    %2693 = vmatprep.subr.mxu0 0.0
    %2694 = vmatpush1.msra.mxu0 0.0
    %2695 = vmatprep.subr.mxu0 0.0
    %2696 = vmatpush1.msra.mxu0 0.0
    %2697 = vmatprep.subr.mxu0 0.0
    %2698 = vmatpush1.msra.mxu0 0.0
    %2699 = vmatprep.subr.mxu0 0.0
    %2700 = vmatpush1.msra.mxu0 0.0
    %2701 = vmatprep.subr.mxu0 0.0
    %2702 = vmatpush1.msra.mxu0 0.0
    %2703 = vmatprep.subr.mxu0 0.0
    %2704 = vmatpush1.msra.mxu0 0.0
    %2705 = vmatprep.subr.mxu0 0.0
    %2706 = vmatpush1.msra.mxu0 0.0
    %2707 = vmatprep.subr.mxu0 0.0
    %2708 = vmatpush1.msra.mxu0 0.0
    %2709 = vmatprep.subr.mxu0 0.0
    %2710 = vmatpush1.msra.mxu0 0.0
    %2711 = vmatprep.subr.mxu0 0.0
    %2712 = vmatpush1.msra.mxu0 0.0
    %2713 = vmatprep.subr.mxu0 0.0
    %2714 = vmatpush1.msra.mxu0 0.0
    %2715 = vmatprep.subr.mxu0 0.0
    %2716 = vmatpush1.msra.mxu0 %v79
    %2717 = vmatprep.subr.mxu0 0.0
    %2718 = vmatpush1.msra.mxu0 %v78
    %2719 = vmatprep.subr.mxu0 0.0
    %2720 = vmatpush1.msra.mxu0 %v77
    %2721 = vmatprep.subr.mxu0 0.0
    %2722 = vmatpush1.msra.mxu0 %v76
    %2723 = vmatprep.subr.mxu0 0.0
    %2724 = vmatpush2.msra.mxu0 0.0
    %2725 = vmatprep.subr.mxu0 0.0
    %2726 = vmatpush2.msra.mxu0 0.0
    %2727 = vmatprep.subr.mxu0 0.0
    %2728 = vmatpush2.msra.mxu0 0.0
    %2729 = vmatprep.subr.mxu0 0.0
    %2730 = vmatpush2.msra.mxu0 0.0
    %2731 = vmatprep.subr.mxu0 0.0
    %2732 = vmatpush2.msra.mxu0 0.0
    %2733 = vmatprep.subr.mxu0 0.0
    %2734 = vmatpush2.msra.mxu0 0.0
    %2735 = vmatprep.subr.mxu0 0.0
    %2736 = vmatpush2.msra.mxu0 0.0
    %2737 = vmatprep.subr.mxu0 0.0
    %2738 = vmatpush2.msra.mxu0 0.0
    %2739 = vmatprep.subr.mxu0 0.0
    %2740 = vmatpush2.msra.mxu0 0.0
    %2741 = vmatprep.subr.mxu0 0.0
    %2742 = vmatpush2.msra.mxu0 0.0
    %2743 = vmatprep.subr.mxu0 0.0
    %2744 = vmatpush2.msra.mxu0 0.0
    %2745 = vmatprep.subr.mxu0 0.0
    %2746 = vmatpush2.msra.mxu0 0.0
    %2747 = vmatprep.subr.mxu0 0.0
    %2748 = vmatpush2.msra.mxu0 0.0
    %2749 = vmatprep.subr.mxu0 0.0
    %2750 = vmatpush2.msra.mxu0 0.0
    %2751 = vmatprep.subr.mxu0 0.0
    %2752 = vmatpush2.msra.mxu0 0.0
    %2753 = vmatprep.subr.mxu0 0.0
    %2754 = vmatpush2.msra.mxu0 0.0
    %2755 = vmatprep.mubr.f32.mxu0 0.0
    %2756 = vmatmul.mubr.f32.gmra.mxu0 %v2689
    %v2757 = vpop.f32.mrf.mxu0
    %v2758 = vadd.f32 0.0, %v2757
    %v2759 = vpop.f32.mrf.mxu0
    %2760 = vdwg.mxu0
    %2762 = vrot.lane.b32.xlu0 %v2685, 32
    %v2763 = vpop.permute.xlu0 %2762
    %v2764 = vsel %vm83, %v2763, 0
    %2766 = vmatprep.subr.mxu0 0.0
    %2767 = vmatpush1.msra.mxu0 0.0
    %2768 = vmatprep.subr.mxu0 0.0
    %2769 = vmatpush1.msra.mxu0 0.0
    %2770 = vmatprep.subr.mxu0 0.0
    %2771 = vmatpush1.msra.mxu0 0.0
    %2772 = vmatprep.subr.mxu0 0.0
    %2773 = vmatpush1.msra.mxu0 0.0
    %2774 = vmatprep.subr.mxu0 0.0
    %2775 = vmatpush1.msra.mxu0 0.0
    %2776 = vmatprep.subr.mxu0 0.0
    %2777 = vmatpush1.msra.mxu0 0.0
    %2778 = vmatprep.subr.mxu0 0.0
    %2779 = vmatpush1.msra.mxu0 0.0
    %2780 = vmatprep.subr.mxu0 0.0
    %2781 = vmatpush1.msra.mxu0 0.0
    %2782 = vmatprep.subr.mxu0 0.0
    %2783 = vmatpush1.msra.mxu0 0.0
    %2784 = vmatprep.subr.mxu0 0.0
    %2785 = vmatpush1.msra.mxu0 0.0
    %2786 = vmatprep.subr.mxu0 0.0
    %2787 = vmatpush1.msra.mxu0 0.0
    %2788 = vmatprep.subr.mxu0 0.0
    %2789 = vmatpush1.msra.mxu0 0.0
    %2790 = vmatprep.subr.mxu0 0.0
    %2791 = vmatpush1.msra.mxu0 %v71
    %2792 = vmatprep.subr.mxu0 0.0
    %2793 = vmatpush1.msra.mxu0 %v70
    %2794 = vmatprep.subr.mxu0 0.0
    %2795 = vmatpush1.msra.mxu0 %v69
    %2796 = vmatprep.subr.mxu0 0.0
    %2797 = vmatpush1.msra.mxu0 %v68
    %2798 = vmatprep.subr.mxu0 0.0
    %2799 = vmatpush2.msra.mxu0 0.0
    %2800 = vmatprep.subr.mxu0 0.0
    %2801 = vmatpush2.msra.mxu0 0.0
    %2802 = vmatprep.subr.mxu0 0.0
    %2803 = vmatpush2.msra.mxu0 0.0
    %2804 = vmatprep.subr.mxu0 0.0
    %2805 = vmatpush2.msra.mxu0 0.0
    %2806 = vmatprep.subr.mxu0 0.0
    %2807 = vmatpush2.msra.mxu0 0.0
    %2808 = vmatprep.subr.mxu0 0.0
    %2809 = vmatpush2.msra.mxu0 0.0
    %2810 = vmatprep.subr.mxu0 0.0
    %2811 = vmatpush2.msra.mxu0 0.0
    %2812 = vmatprep.subr.mxu0 0.0
    %2813 = vmatpush2.msra.mxu0 0.0
    %2814 = vmatprep.subr.mxu0 0.0
    %2815 = vmatpush2.msra.mxu0 0.0
    %2816 = vmatprep.subr.mxu0 0.0
    %2817 = vmatpush2.msra.mxu0 0.0
    %2818 = vmatprep.subr.mxu0 0.0
    %2819 = vmatpush2.msra.mxu0 0.0
    %2820 = vmatprep.subr.mxu0 0.0
    %2821 = vmatpush2.msra.mxu0 0.0
    %2822 = vmatprep.subr.mxu0 0.0
    %2823 = vmatpush2.msra.mxu0 0.0
    %2824 = vmatprep.subr.mxu0 0.0
    %2825 = vmatpush2.msra.mxu0 0.0
    %2826 = vmatprep.subr.mxu0 0.0
    %2827 = vmatpush2.msra.mxu0 0.0
    %2828 = vmatprep.subr.mxu0 0.0
    %2829 = vmatpush2.msra.mxu0 0.0
    %2830 = vmatprep.mubr.f32.mxu0 0.0
    %2831 = vmatmul.mubr.f32.gmra.mxu0 %v2764
    %v2832 = vpop.f32.mrf.mxu0
    %v2833 = vadd.f32 %v2758, %v2832
    %v2834 = vpop.f32.mrf.mxu0
    %2835 = vdwg.mxu0
    %v2836 = vadd.f32 %v2833, %v412
    %v2837 = vxor.u32 %v2836, 2147483648
    %v2838 = vmul.f32 %v2837, 1.442695
    %v2839 = vpow.pop %v2838
    %v2840 = vadd.f32 %v2839, 1.0
    %v2841 = vrcp.pop %v2840
    %v2842 = vmul.f32 1.0, %v2841
    %v2843 = vmul.f32 %v2842, 2.0
    %v2844 = vsub.f32 %v2843, 1.0
    %v2845 = vmul.f32 %v2842, %v2509
    %2847 = vrot.lane.b32.xlu0 %v2844, 64
    %v2848 = vpop.permute.xlu0 %2847
    %v2850 = vmul.f32 %v2842, %v2848
    %2852 = vrot.lane.b32.xlu0 %v2850, 32
    %v2853 = vpop.permute.xlu0 %2852
    %v2855 = vadd.f32 %v2845, %v2853
    %v2856 = vtanh.pop %v2855
    %2858 = vrot.lane.b32.xlu0 %v2856, 64
    %v2859 = vpop.permute.xlu0 %2858
    %v2861 = vmul.f32 %v2842, %v2859
    %v2862 = vld [vmem:[%s7] sm:$0xff]
    %v2863 = vld [vmem:[%s7 + $0x8] sm:$0xff]
    %v2864 = vld [vmem:[%s7 + $0x10] sm:$0xff]
    %v2865 = vld [vmem:[%s7 + $0x18] sm:$0xff]
    %v2866 = vld [vmem:[#allocation2] sm:$0x1]
    %v2868 = vlaneseq
    %v2869 = vshrl.u32 %v2868, 7
    %v2870 = vsub.s32 0, %v2869
    %v2871 = vrot.slane %v2866, %v2870
    %2874 = vrot.lane.b32.xlu0 %v2861, 32
    %v2875 = vpop.permute.xlu0 %2874
    %v2876 = vsel %vm83, %v2875, 0
    %2878 = vmatprep.subr.mxu0 0.0
    %2879 = vmatpush1.msra.mxu0 0.0
    %2880 = vmatprep.subr.mxu0 0.0
    %2881 = vmatpush1.msra.mxu0 0.0
    %2882 = vmatprep.subr.mxu0 0.0
    %2883 = vmatpush1.msra.mxu0 0.0
    %2884 = vmatprep.subr.mxu0 0.0
    %2885 = vmatpush1.msra.mxu0 0.0
    %2886 = vmatprep.subr.mxu0 0.0
    %2887 = vmatpush1.msra.mxu0 0.0
    %2888 = vmatprep.subr.mxu0 0.0
    %2889 = vmatpush1.msra.mxu0 0.0
    %2890 = vmatprep.subr.mxu0 0.0
    %2891 = vmatpush1.msra.mxu0 0.0
    %2892 = vmatprep.subr.mxu0 0.0
    %2893 = vmatpush1.msra.mxu0 0.0
    %2894 = vmatprep.subr.mxu0 0.0
    %2895 = vmatpush1.msra.mxu0 0.0
    %2896 = vmatprep.subr.mxu0 0.0
    %2897 = vmatpush1.msra.mxu0 0.0
    %2898 = vmatprep.subr.mxu0 0.0
    %2899 = vmatpush1.msra.mxu0 0.0
    %2900 = vmatprep.subr.mxu0 0.0
    %2901 = vmatpush1.msra.mxu0 0.0
    %2902 = vmatprep.subr.mxu0 0.0
    %2903 = vmatpush1.msra.mxu0 %v2865
    %2904 = vmatprep.subr.mxu0 0.0
    %2905 = vmatpush1.msra.mxu0 %v2864
    %2906 = vmatprep.subr.mxu0 0.0
    %2907 = vmatpush1.msra.mxu0 %v2863
    %2908 = vmatprep.subr.mxu0 0.0
    %2909 = vmatpush1.msra.mxu0 %v2862
    %2910 = vmatprep.subr.mxu0 0.0
    %2911 = vmatpush2.msra.mxu0 0.0
    %2912 = vmatprep.subr.mxu0 0.0
    %2913 = vmatpush2.msra.mxu0 0.0
    %2914 = vmatprep.subr.mxu0 0.0
    %2915 = vmatpush2.msra.mxu0 0.0
    %2916 = vmatprep.subr.mxu0 0.0
    %2917 = vmatpush2.msra.mxu0 0.0
    %2918 = vmatprep.subr.mxu0 0.0
    %2919 = vmatpush2.msra.mxu0 0.0
    %2920 = vmatprep.subr.mxu0 0.0
    %2921 = vmatpush2.msra.mxu0 0.0
    %2922 = vmatprep.subr.mxu0 0.0
    %2923 = vmatpush2.msra.mxu0 0.0
    %2924 = vmatprep.subr.mxu0 0.0
    %2925 = vmatpush2.msra.mxu0 0.0
    %2926 = vmatprep.subr.mxu0 0.0
    %2927 = vmatpush2.msra.mxu0 0.0
    %2928 = vmatprep.subr.mxu0 0.0
    %2929 = vmatpush2.msra.mxu0 0.0
    %2930 = vmatprep.subr.mxu0 0.0
    %2931 = vmatpush2.msra.mxu0 0.0
    %2932 = vmatprep.subr.mxu0 0.0
    %2933 = vmatpush2.msra.mxu0 0.0
    %2934 = vmatprep.subr.mxu0 0.0
    %2935 = vmatpush2.msra.mxu0 0.0
    %2936 = vmatprep.subr.mxu0 0.0
    %2937 = vmatpush2.msra.mxu0 0.0
    %2938 = vmatprep.subr.mxu0 0.0
    %2939 = vmatpush2.msra.mxu0 0.0
    %2940 = vmatprep.subr.mxu0 0.0
    %2941 = vmatpush2.msra.mxu0 0.0
    %2942 = vmatprep.mubr.f32.mxu0 0.0
    %2943 = vmatmul.mubr.f32.gmra.mxu0 %v2764
    %v2944 = vpop.f32.mrf.mxu0
    %v2945 = vadd.f32 %v2871, %v2944
    %v2946 = vpop.f32.mrf.mxu0
    %2947 = vmatprep.mubr.f32.mxu0 0.0
    %2948 = vmatmul.mubr.f32.gmra.mxu0 %v2876
    %v2949 = vpop.f32.mrf.mxu0
    %v2950 = vadd.f32 %v2871, %v2949
    %v2951 = vpop.f32.mrf.mxu0
    %2952 = vdwg.mxu0
    %vm2953 = vcmask 31744
    %2954 = vst.msk [vmem:[%s9] sm:$0xff] %vm2953, %v2945
    %2955 = vst.msk [vmem:[%s9 + $0x8] sm:$0xff] %vm2953, %v2950
    // Predicated region
    $region42: #{lstm_forward.1} parent=1 // pred_check
      _
    $region43: #{lstm_forward.1} parent=1 // pred_check_branch
      %2957 = sbr.rel (0) target = $region45
    $region44: #{lstm_forward.1} parent=1 // pred_region
      _
    $region45: #{lstm_forward.1} parent=1 // pred_fallthru
      _
    // Predicated region
    $region46: #{lstm_forward.1} parent=1 // pred_check
      _
    $region47: #{lstm_forward.1} parent=1 // pred_check_branch
      %2959 = sbr.rel (0) target = $region49
    $region48: #{lstm_forward.1} parent=1 // pred_region
      _
    $region49: #{lstm_forward.1} parent=1 // pred_fallthru
      _
    %2960 = vsyncpa [#allocation3], 1

</llo_original>
